<compile_context>
chip_gen: v6e
topology: v6e:2x2x1
jax: 0.10.0
libtpu: 0.0.40
codegen_flags: <defaults>
</compile_context>

<pallas_src>
import functools

import jax
import jax.numpy as jnp
from jax.experimental import pallas as pl
from jax.experimental.pallas import tpu as pltpu

# Original PyTorch layer sizes (7 nn.Linear layers), weights stored as (in, out).
RAW_LAYER_DIMS = [(13, 13), (13, 256), (256, 256), (256, 256),
                  (256, 256), (256, 256), (256, 2)]
IN_FEATURES = 13
OUT_FEATURES = 2
OUT_PADDED = 128          # lane-dense output width (zero-padded final layer)
HIDDEN = 256
N_HIDDEN_LAYERS = 4       # layers 2..5 after fusing layer 0 into layer 1
MAX_BATCH_TILE = 2048


def _mlp_kernel(x_ref, w01_ref, b01_ref, wh_ref, bh_ref, w6_ref, b6_ref, o_ref):
    """Whole fused MLP for one (batch_tile, 13) bf16 slab.

    bf16 weights / bf16 MXU inputs, f32 accumulation, f32 biases/activations.
    w01 is the exact fusion of Linear(13,13)+Identity with Linear(13,256);
    wh/bh stack the four 256x256 hidden layers; w6/b6 are zero-padded to 128
    output lanes so the final store is lane-dense.
    """
    # Fused (13 -> 256) layer, then ReLU (activation of original layer 1).
    h = jnp.dot(x_ref[...], w01_ref[...],
                preferred_element_type=jnp.float32) + b01_ref[...]
    h = jnp.maximum(h, 0.0)

    # Four 256x256 hidden layers: ReLU, ReLU, ReLU, Sigmoid.
    for k in range(N_HIDDEN_LAYERS):
        h = jnp.dot(h.astype(jnp.bfloat16), wh_ref[k],
                    preferred_element_type=jnp.float32) + bh_ref[k]
        if k < N_HIDDEN_LAYERS - 1:
            h = jnp.maximum(h, 0.0)          # nn.ReLU()
        else:
            h = jax.nn.sigmoid(h)            # nn.Sigmoid()

    # Final 256 -> 128 (zero-padded) projection; logits live in lanes [0, 2).
    o_ref[...] = (jnp.dot(h.astype(jnp.bfloat16), w6_ref[...],
                          preferred_element_type=jnp.float32)
                  + b6_ref[...]).astype(o_ref.dtype)


def _choose_batch_tile(B):
    """MXU-friendly tile: multiple of 256, capped at MAX_BATCH_TILE, sized so
    the grid has >=2 steps when B allows (v7x has 2 TensorCores)."""
    half = -(-B // 2)                    # cdiv(B, 2)
    tile = -(-half // 256) * 256         # round up to multiple of 256
    return max(256, min(MAX_BATCH_TILE, tile))


@jax.jit
def bball_forward(x, kernel_params):
    """x: (B, 13) float. kernel_params from pack_kernel_params().
    Returns (B, 2) f32 logits."""
    w01, b01, wh, bh, w6, b6 = kernel_params
    B, F = x.shape
    assert F == IN_FEATURES

    batch_tile = _choose_batch_tile(B)           # B is static at trace time
    pad = (-B) % batch_tile
    x = x.astype(jnp.bfloat16)
    if pad:
        x = jnp.pad(x, ((0, pad), (0, 0)))
    Bp = B + pad
    grid = (Bp // batch_tile,)

    in_specs = [
        pl.BlockSpec((batch_tile, F), lambda i: (i, 0)),   # activations: tiled
        pl.BlockSpec(w01.shape, lambda i: (0, 0)),          # constants below:
        pl.BlockSpec(b01.shape, lambda i: (0, 0)),          # block index never
        pl.BlockSpec(wh.shape, lambda i: (0, 0, 0)),         # changes -> no
        pl.BlockSpec(bh.shape, lambda i: (0, 0, 0)),         # re-DMA per step
        pl.BlockSpec(w6.shape, lambda i: (0, 0)),
        pl.BlockSpec(b6.shape, lambda i: (0, 0)),
    ]
    out_spec = pl.BlockSpec((batch_tile, OUT_PADDED), lambda i: (i, 0))

    param_bytes = sum(int(a.size) * a.dtype.itemsize
                      for a in (w01, b01, wh, bh, w6, b6))
    cost = pl.CostEstimate(
        flops=2 * Bp * (IN_FEATURES * HIDDEN
                        + N_HIDDEN_LAYERS * HIDDEN * HIDDEN
                        + HIDDEN * OUT_PADDED),
        transcendentals=Bp * HIDDEN,                       # sigmoid exp
        bytes_accessed=Bp * IN_FEATURES * 2 + param_bytes + Bp * OUT_PADDED * 4,
    )

    out = pl.pallas_call(
        _mlp_kernel,
        out_shape=jax.ShapeDtypeStruct((Bp, OUT_PADDED), jnp.float32),
        grid_spec=pltpu.PrefetchScalarGridSpec(
            num_scalar_prefetch=0,
            grid=grid,
            in_specs=in_specs,
            out_specs=out_spec,
        ),
        compiler_params=pltpu.CompilerParams(
            dimension_semantics=("parallel",),
            vmem_limit_bytes=32 * 1024 * 1024),
        cost_estimate=cost,
    )(x, w01, b01, wh, bh, w6, b6)
    return out[:B, :OUT_FEATURES]


def init_raw_params(key):
    """Deterministic init mimicking PyTorch's default Linear init
    (uniform in [-1/sqrt(fan_in), 1/sqrt(fan_in)]); weights stored (in, out)."""
    params = []
    for fan_in, fan_out in RAW_LAYER_DIMS:
        key, kw, kb = jax.random.split(key, 3)
        bound = 1.0 / jnp.sqrt(jnp.float32(fan_in))
        w = jax.random.uniform(kw, (fan_in, fan_out), jnp.float32,
                               minval=-bound, maxval=bound)
        b = jax.random.uniform(kb, (1, fan_out), jnp.float32,
                               minval=-bound, maxval=bound)
        params.append((w, b))
    return params


def pack_kernel_params(raw_params):
    """Fuse layer 0 into layer 1 (exact, Identity activation), stack the four
    256x256 hidden layers, zero-pad the final projection to 128 output lanes,
    cast weights to bf16 (biases stay f32)."""
    (w0, b0), (w1, b1) = raw_params[0], raw_params[1]
    w01 = w0 @ w1                  # (13, 256)
    b01 = b0 @ w1 + b1             # (1, 256)

    wh = jnp.stack([raw_params[i][0] for i in range(2, 6)])   # (4, 256, 256)
    bh = jnp.stack([raw_params[i][1] for i in range(2, 6)])   # (4, 1, 256)

    w6, b6 = raw_params[6]                                    # (256, 2), (1, 2)
    w6p = jnp.pad(w6, ((0, 0), (0, OUT_PADDED - OUT_FEATURES)))  # (256, 128)
    b6p = jnp.pad(b6, ((0, 0), (0, OUT_PADDED - OUT_FEATURES)))  # (1, 128)

    return (w01.astype(jnp.bfloat16), b01,
            wh.astype(jnp.bfloat16), bh,
            w6p.astype(jnp.bfloat16), b6p)


def reference_forward_f32(x, raw_params):
    """Exact f32 reference of the original 7-layer PyTorch module."""
    h = x
    for layer, (w, b) in enumerate(raw_params):
        h = h @ w + b
        if 1 <= layer <= 4:
            h = jnp.maximum(h, 0.0)
        elif layer == 5:
            h = jax.nn.sigmoid(h)
    return h


def reference_forward_matched(x, kernel_params):
    """Pure-JAX reference doing the same fused / bf16 math as the kernel."""
    w01, b01, wh, bh, w6, b6 = kernel_params
    h = x.astype(jnp.bfloat16)
    h = jnp.dot(h, w01, preferred_element_type=jnp.float32) + b01
    h = jnp.maximum(h, 0.0)
    for k in range(N_HIDDEN_LAYERS):
        h = jnp.dot(h.astype(jnp.bfloat16), wh[k],
                    preferred_element_type=jnp.float32) + bh[k]
        if k < N_HIDDEN_LAYERS - 1:
            h = jnp.maximum(h, 0.0)
        else:
            h = jax.nn.sigmoid(h)
    h = jnp.dot(h.astype(jnp.bfloat16), w6,
                preferred_element_type=jnp.float32) + b6
    return h[:, :OUT_FEATURES]


if __name__ == "__main__":
    key = jax.random.PRNGKey(0)
    key, kx = jax.random.split(key)

    # Batch deliberately not a multiple of 256 (exercises the pad-and-slice
    # path): tile = round_up(cdiv(300,2),256) = 256 -> padded 512 -> grid=(2,).
    B = 300
    x = jax.random.normal(kx, (B, IN_FEATURES), jnp.float32)

    raw_params = init_raw_params(key)
    kernel_params = pack_kernel_params(raw_params)

    out = bball_forward(x, kernel_params)
    out = jax.block_until_ready(out)
    assert out.shape == (B, OUT_FEATURES)

    # Tight check against a reference doing identical (fused, bf16-weight) math.
    ref_matched = reference_forward_matched(x, kernel_params)
    assert jnp.allclose(out, ref_matched, atol=1e-2, rtol=1e-2), \
        "mismatch vs matched reference"

    # Looser check against the exact f32 7-layer module semantics
    # (bf16 weights/inputs introduce ~0.5% rounding).
    ref_f32 = reference_forward_f32(x, raw_params)
    assert jnp.allclose(out, ref_f32, atol=5e-2, rtol=5e-2), \
        "mismatch vs f32 reference"

    print("KERNEL_OK")
</pallas_src>

<mosaic_0001>
module attributes {stable_mosaic.version = 11 : i64} {
  func.func @_mlp_kernel(%arg0: i32, %arg1: memref<256x13xbf16, #tpu.memory_space<vmem>>, %arg2: memref<13x256xbf16, #tpu.memory_space<vmem>>, %arg3: memref<1x256xf32, #tpu.memory_space<vmem>>, %arg4: memref<4x256x256xbf16, #tpu.memory_space<vmem>>, %arg5: memref<4x1x256xf32, #tpu.memory_space<vmem>>, %arg6: memref<256x128xbf16, #tpu.memory_space<vmem>>, %arg7: memref<1x128xf32, #tpu.memory_space<vmem>>, %arg8: memref<256x128xf32, #tpu.memory_space<vmem>>) attributes {dimension_semantics = [#tpu.dimension_semantics<parallel>], iteration_bounds = array<i64: 2>, scalar_prefetch = 0 : i64, scratch_operands = 0 : i64, tpu.core_type = #tpu.core_type<tc>, window_params = [{transform_indices = @transform_0, window_bounds = array<i64: 256, 13>}, {pipeline_mode = #tpu.pipeline_mode<synchronous>, transform_indices = @transform_1, window_bounds = array<i64: 13, 256>}, {pipeline_mode = #tpu.pipeline_mode<synchronous>, transform_indices = @transform_2, window_bounds = array<i64: 1, 256>}, {pipeline_mode = #tpu.pipeline_mode<synchronous>, transform_indices = @transform_3, window_bounds = array<i64: 4, 256, 256>}, {pipeline_mode = #tpu.pipeline_mode<synchronous>, transform_indices = @transform_4, window_bounds = array<i64: 4, 1, 256>}, {pipeline_mode = #tpu.pipeline_mode<synchronous>, transform_indices = @transform_5, window_bounds = array<i64: 256, 128>}, {pipeline_mode = #tpu.pipeline_mode<synchronous>, transform_indices = @transform_6, window_bounds = array<i64: 1, 128>}, {transform_indices = @transform_7, window_bounds = array<i64: 256, 128>}]} {
    %c0 = arith.constant 0 : index
    %c0_0 = arith.constant 0 : index
    %0 = vector.load %arg1[%c0, %c0_0] : memref<256x13xbf16, #tpu.memory_space<vmem>>, vector<256x13xbf16>
    %c0_1 = arith.constant 0 : index
    %c0_2 = arith.constant 0 : index
    %1 = vector.load %arg2[%c0_1, %c0_2] : memref<13x256xbf16, #tpu.memory_space<vmem>>, vector<13x256xbf16>
    %cst = arith.constant dense<0.000000e+00> : vector<256x256xf32>
    %2 = tpu.matmul %0, %1, %cst {dimension_numbers = #tpu.dot_dimension_numbers<[1], [0], [0], [1], [0, 0, 1, 1], [], []>} : vector<256x13xbf16>, vector<13x256xbf16>, vector<256x256xf32> -> vector<256x256xf32>
    %c0_3 = arith.constant 0 : index
    %c0_4 = arith.constant 0 : index
    %3 = vector.load %arg3[%c0_3, %c0_4] : memref<1x256xf32, #tpu.memory_space<vmem>>, vector<1x256xf32>
    %4 = vector.broadcast %3 : vector<1x256xf32> to vector<256x256xf32>
    %5 = arith.addf %2, %4 : vector<256x256xf32>
    %cst_5 = arith.constant 0.000000e+00 : f32
    %6 = vector.broadcast %cst_5 : f32 to vector<256x256xf32>
    %7 = arith.maximumf %5, %6 : vector<256x256xf32>
    %8 = arith.truncf %7 : vector<256x256xf32> to vector<256x256xbf16>
    %c0_6 = arith.constant 0 : index
    %c0_7 = arith.constant 0 : index
    %c0_8 = arith.constant 0 : index
    %9 = vector.load %arg4[%c0_6, %c0_7, %c0_8] : memref<4x256x256xbf16, #tpu.memory_space<vmem>>, vector<1x256x256xbf16>
    %10 = vector.shape_cast %9 : vector<1x256x256xbf16> to vector<256x256xbf16>
    %cst_9 = arith.constant dense<0.000000e+00> : vector<256x256xf32>
    %11 = tpu.matmul %8, %10, %cst_9 {dimension_numbers = #tpu.dot_dimension_numbers<[1], [0], [0], [1], [0, 0, 1, 1], [], []>} : vector<256x256xbf16>, vector<256x256xbf16>, vector<256x256xf32> -> vector<256x256xf32>
    %c0_10 = arith.constant 0 : index
    %c0_11 = arith.constant 0 : index
    %c0_12 = arith.constant 0 : index
    %12 = vector.load %arg5[%c0_10, %c0_11, %c0_12] : memref<4x1x256xf32, #tpu.memory_space<vmem>>, vector<1x1x256xf32>
    %13 = vector.shape_cast %12 : vector<1x1x256xf32> to vector<1x256xf32>
    %14 = vector.broadcast %13 : vector<1x256xf32> to vector<256x256xf32>
    %15 = arith.addf %11, %14 : vector<256x256xf32>
    %cst_13 = arith.constant 0.000000e+00 : f32
    %16 = vector.broadcast %cst_13 : f32 to vector<256x256xf32>
    %17 = arith.maximumf %15, %16 : vector<256x256xf32>
    %18 = arith.truncf %17 : vector<256x256xf32> to vector<256x256xbf16>
    %c1 = arith.constant 1 : index
    %c0_14 = arith.constant 0 : index
    %c0_15 = arith.constant 0 : index
    %19 = vector.load %arg4[%c1, %c0_14, %c0_15] : memref<4x256x256xbf16, #tpu.memory_space<vmem>>, vector<1x256x256xbf16>
    %20 = vector.shape_cast %19 : vector<1x256x256xbf16> to vector<256x256xbf16>
    %cst_16 = arith.constant dense<0.000000e+00> : vector<256x256xf32>
    %21 = tpu.matmul %18, %20, %cst_16 {dimension_numbers = #tpu.dot_dimension_numbers<[1], [0], [0], [1], [0, 0, 1, 1], [], []>} : vector<256x256xbf16>, vector<256x256xbf16>, vector<256x256xf32> -> vector<256x256xf32>
    %c1_17 = arith.constant 1 : index
    %c0_18 = arith.constant 0 : index
    %c0_19 = arith.constant 0 : index
    %22 = vector.load %arg5[%c1_17, %c0_18, %c0_19] : memref<4x1x256xf32, #tpu.memory_space<vmem>>, vector<1x1x256xf32>
    %23 = vector.shape_cast %22 : vector<1x1x256xf32> to vector<1x256xf32>
    %24 = vector.broadcast %23 : vector<1x256xf32> to vector<256x256xf32>
    %25 = arith.addf %21, %24 : vector<256x256xf32>
    %cst_20 = arith.constant 0.000000e+00 : f32
    %26 = vector.broadcast %cst_20 : f32 to vector<256x256xf32>
    %27 = arith.maximumf %25, %26 : vector<256x256xf32>
    %28 = arith.truncf %27 : vector<256x256xf32> to vector<256x256xbf16>
    %c2 = arith.constant 2 : index
    %c0_21 = arith.constant 0 : index
    %c0_22 = arith.constant 0 : index
    %29 = vector.load %arg4[%c2, %c0_21, %c0_22] : memref<4x256x256xbf16, #tpu.memory_space<vmem>>, vector<1x256x256xbf16>
    %30 = vector.shape_cast %29 : vector<1x256x256xbf16> to vector<256x256xbf16>
    %cst_23 = arith.constant dense<0.000000e+00> : vector<256x256xf32>
    %31 = tpu.matmul %28, %30, %cst_23 {dimension_numbers = #tpu.dot_dimension_numbers<[1], [0], [0], [1], [0, 0, 1, 1], [], []>} : vector<256x256xbf16>, vector<256x256xbf16>, vector<256x256xf32> -> vector<256x256xf32>
    %c2_24 = arith.constant 2 : index
    %c0_25 = arith.constant 0 : index
    %c0_26 = arith.constant 0 : index
    %32 = vector.load %arg5[%c2_24, %c0_25, %c0_26] : memref<4x1x256xf32, #tpu.memory_space<vmem>>, vector<1x1x256xf32>
    %33 = vector.shape_cast %32 : vector<1x1x256xf32> to vector<1x256xf32>
    %34 = vector.broadcast %33 : vector<1x256xf32> to vector<256x256xf32>
    %35 = arith.addf %31, %34 : vector<256x256xf32>
    %cst_27 = arith.constant 0.000000e+00 : f32
    %36 = vector.broadcast %cst_27 : f32 to vector<256x256xf32>
    %37 = arith.maximumf %35, %36 : vector<256x256xf32>
    %38 = arith.truncf %37 : vector<256x256xf32> to vector<256x256xbf16>
    %c3 = arith.constant 3 : index
    %c0_28 = arith.constant 0 : index
    %c0_29 = arith.constant 0 : index
    %39 = vector.load %arg4[%c3, %c0_28, %c0_29] : memref<4x256x256xbf16, #tpu.memory_space<vmem>>, vector<1x256x256xbf16>
    %40 = vector.shape_cast %39 : vector<1x256x256xbf16> to vector<256x256xbf16>
    %cst_30 = arith.constant dense<0.000000e+00> : vector<256x256xf32>
    %41 = tpu.matmul %38, %40, %cst_30 {dimension_numbers = #tpu.dot_dimension_numbers<[1], [0], [0], [1], [0, 0, 1, 1], [], []>} : vector<256x256xbf16>, vector<256x256xbf16>, vector<256x256xf32> -> vector<256x256xf32>
    %c3_31 = arith.constant 3 : index
    %c0_32 = arith.constant 0 : index
    %c0_33 = arith.constant 0 : index
    %42 = vector.load %arg5[%c3_31, %c0_32, %c0_33] : memref<4x1x256xf32, #tpu.memory_space<vmem>>, vector<1x1x256xf32>
    %43 = vector.shape_cast %42 : vector<1x1x256xf32> to vector<1x256xf32>
    %44 = vector.broadcast %43 : vector<1x256xf32> to vector<256x256xf32>
    %45 = arith.addf %41, %44 : vector<256x256xf32>
    %46 = arith.negf %45 : vector<256x256xf32>
    %47 = math.exp %46 : vector<256x256xf32>
    %cst_34 = arith.constant 1.000000e+00 : f32
    %48 = vector.broadcast %cst_34 : f32 to vector<256x256xf32>
    %49 = arith.addf %48, %47 : vector<256x256xf32>
    %50 = arith.divf %48, %49 : vector<256x256xf32>
    %51 = arith.truncf %50 : vector<256x256xf32> to vector<256x256xbf16>
    %c0_35 = arith.constant 0 : index
    %c0_36 = arith.constant 0 : index
    %52 = vector.load %arg6[%c0_35, %c0_36] : memref<256x128xbf16, #tpu.memory_space<vmem>>, vector<256x128xbf16>
    %cst_37 = arith.constant dense<0.000000e+00> : vector<256x128xf32>
    %53 = tpu.matmul %51, %52, %cst_37 {dimension_numbers = #tpu.dot_dimension_numbers<[1], [0], [0], [1], [0, 0, 1, 1], [], []>} : vector<256x256xbf16>, vector<256x128xbf16>, vector<256x128xf32> -> vector<256x128xf32>
    %c0_38 = arith.constant 0 : index
    %c0_39 = arith.constant 0 : index
    %54 = vector.load %arg7[%c0_38, %c0_39] : memref<1x128xf32, #tpu.memory_space<vmem>>, vector<1x128xf32>
    %55 = vector.broadcast %54 : vector<1x128xf32> to vector<256x128xf32>
    %56 = arith.addf %53, %55 : vector<256x128xf32>
    %c0_40 = arith.constant 0 : index
    %c0_41 = arith.constant 0 : index
    %57 = vector.load %arg8[%c0_40, %c0_41] : memref<256x128xf32, #tpu.memory_space<vmem>>, vector<256x128xf32>
    tpu.vector_store %arg8[%c0_40, %c0_41], %56 {strides = array<i32>} : memref<256x128xf32, #tpu.memory_space<vmem>>, vector<256x128xf32>,
    return
  }
  func.func @transform_0(%arg0: i32) -> (i32, i32) {
    %c0_i32 = arith.constant 0 : i32
    %c0_i32_0 = arith.constant 0 : i32
    return %arg0, %c0_i32 : i32, i32
  }
  func.func @transform_1(%arg0: i32) -> (i32, i32) {
    %c0_i32 = arith.constant 0 : i32
    %c0_i32_0 = arith.constant 0 : i32
    %c0_i32_1 = arith.constant 0 : i32
    return %c0_i32, %c0_i32_0 : i32, i32
  }
  func.func @transform_2(%arg0: i32) -> (i32, i32) {
    %c0_i32 = arith.constant 0 : i32
    %c0_i32_0 = arith.constant 0 : i32
    %c0_i32_1 = arith.constant 0 : i32
    return %c0_i32, %c0_i32_0 : i32, i32
  }
  func.func @transform_3(%arg0: i32) -> (i32, i32, i32) {
    %c0_i32 = arith.constant 0 : i32
    %c0_i32_0 = arith.constant 0 : i32
    %c0_i32_1 = arith.constant 0 : i32
    %c0_i32_2 = arith.constant 0 : i32
    return %c0_i32, %c0_i32_0, %c0_i32_1 : i32, i32, i32
  }
  func.func @transform_4(%arg0: i32) -> (i32, i32, i32) {
    %c0_i32 = arith.constant 0 : i32
    %c0_i32_0 = arith.constant 0 : i32
    %c0_i32_1 = arith.constant 0 : i32
    %c0_i32_2 = arith.constant 0 : i32
    return %c0_i32, %c0_i32_0, %c0_i32_1 : i32, i32, i32
  }
  func.func @transform_5(%arg0: i32) -> (i32, i32) {
    %c0_i32 = arith.constant 0 : i32
    %c0_i32_0 = arith.constant 0 : i32
    %c0_i32_1 = arith.constant 0 : i32
    return %c0_i32, %c0_i32_0 : i32, i32
  }
  func.func @transform_6(%arg0: i32) -> (i32, i32) {
    %c0_i32 = arith.constant 0 : i32
    %c0_i32_0 = arith.constant 0 : i32
    %c0_i32_1 = arith.constant 0 : i32
    return %c0_i32, %c0_i32_0 : i32, i32
  }
  func.func @transform_7(%arg0: i32) -> (i32, i32) {
    %c0_i32 = arith.constant 0 : i32
    %c0_i32_0 = arith.constant 0 : i32
    return %arg0, %c0_i32 : i32, i32
  }
}

</mosaic_0001>

<llo_original>
// kernel: bball_forward.1
$region0: #{bball_forward.1}
  #allocation0 [shape = 'u32[]', space=smem, size = 0x4, offset = 0x4, fixed_abs, tag = 'smem constant byte address 0x4 - core index']
  #allocation1 [shape = 'u32[144,128]{1,0:T(1,128)}', space=vmem, size = 0x12000, scoped, tag = 'internal scratch']
  %s0 = inlined_call_operand.vmem [shape: bf16[512,13], index: 0, kind: input, shape index: {}]
  %s1 = inlined_call_operand.vmem [shape: bf16[13,256], index: 1, kind: input, shape index: {}]
  %s2 = inlined_call_operand.vmem [shape: f32[1,256], index: 2, kind: input, shape index: {}]
  %s3 = inlined_call_operand.hbm [shape: bf16[4,256,256], index: 3, kind: input, shape index: {}]
  %s4 = inlined_call_operand.vmem [shape: f32[4,1,256], index: 4, kind: input, shape index: {}]
  %s5 = inlined_call_operand.vmem [shape: bf16[256,128], index: 5, kind: input, shape index: {}]
  %s6 = inlined_call_operand.vmem [shape: f32[1,128], index: 6, kind: input, shape index: {}]
  %s7 = inlined_call_operand.vmem [shape: f32[512,128], index: 7, kind: output, shape index: {}]
  %s8 = sld [smem:[#allocation0]]
  $region65: #{bball_forward.1} parent=0
    _
  %s10 = ssub.s32 1, %s8
  %s11 = scalar_select 0, %s10, %s8
  $region1: #{bball_forward.1} parent=0
    #allocation2 [shape = 'u8[524288]{0}', space=vmem, size = 0x80000, scoped, tag = 'input window, operand 3, single buffered']
    #allocation3 [shape = 's32[2]{0}', space=sflag, size = 0x8, scoped, tag = 'scoped memory for bball_forward.1']
    %12 = vsyncpa [#allocation3], 0
    loop: start=0, step=1, limit=4
    $region2: #{bball_forward.1} parent=1 // loop_pre_header
      _
    $region3: #{bball_forward.1} parent=1 // loop_header
      %s14 = sphi 0, %s18
      %p15 = scmp.ge.s32.totalorder %s14, 4
      %s24 = sphi 0, %s26
      %s27 = sphi 0, %s24
      %s28 = sphi 0, %s27
      %s44 = sphi 0, %s28
      %s48 = sphi 0, %s48
      %s50 = sphi 0, %s48
      %s51 = sphi 0, %s50
      %s65 = sphi 0, %s51
      %s69 = sphi 0, %s69
      %s71 = sphi 0, %s69
      %s72 = sphi 0, %s71
      %s86 = sphi 0, %s72
      %s90 = sphi 0, %s90
      %s92 = sphi 0, %s90
      %s93 = sphi 0, %s92
      %s107 = sphi 0, %s93
      %s111 = sphi 0, %s111
      %s113 = sphi 0, %s111
      %s114 = sphi 0, %s113
      %s128 = sphi 0, %s114
      %s132 = sphi 0, %s132
      %s134 = sphi 0, %s132
      %s135 = sphi 0, %s134
      %s149 = sphi 0, %s135
      %s153 = sphi 0, %s153
      %s155 = sphi 0, %s153
      %s156 = sphi 0, %s155
      %s170 = sphi 0, %s156
      %s176 = sphi 0, %s178
      %s179 = sphi 0, %s176
      %s180 = sphi 0, %s179
      %s196 = sphi 0, %s180
    $region4: #{bball_forward.1} parent=1 // loop_header_branch
      %17 = sbr.rel (%p15) target = $region8
    $region5: #{bball_forward.1} parent=1 // loop_body
      %s19 = ssub.s32 %s14, 1
      %s20 = ssub.s32 %s14, 2
      %s21 = sadd.s32 %s14, 1
      %s22 = ssub.s32 %s14, %s21
      %p23 = scmp.eq.s32.totalorder %s22, 0
      %s25 = sadd.s32 %s24, 1
      %s26 = scalar_select %p23, %s24, %s25
      %p29 = pneg %p23
      %p30 = scmp.eq.s32.totalorder %s14, 1
      %p31 = por %p29, %p30
      %p32 = scmp.ne.s32.totalorder %s24, %s27
      %p33 = scmp.eq.s32.totalorder %s14, 0
      %p34 = por %p32, %p33
      %p35 = scmp.ne.s32.totalorder %s24, %s27
      %p36 = scmp.eq.s32.totalorder %s19, 1
      %p37 = por %p35, %p36
      %p38 = scmp.ne.s32.totalorder %s27, %s28
      %p39 = scmp.eq.s32.totalorder %s19, 0
      %p40 = por %p38, %p39
      %p41 = scmp.ne.s32.totalorder %s27, %s28
      %p42 = scmp.eq.s32.totalorder %s20, 1
      %p43 = por %p41, %p42
      %p45 = scmp.ne.s32.totalorder %s28, %s44
      %p46 = scmp.eq.s32.totalorder %s20, 0
      %p47 = por %p45, %p46
      %s49 = sadd.s32 %s48, 1
      %p52 = scmp.eq.s32.totalorder %s14, 1
      %p53 = scmp.ne.s32.totalorder %s48, %s50
      %p54 = scmp.eq.s32.totalorder %s14, 0
      %p55 = por %p53, %p54
      %p56 = scmp.ne.s32.totalorder %s48, %s50
      %p57 = scmp.eq.s32.totalorder %s19, 1
      %p58 = por %p56, %p57
      %p59 = scmp.ne.s32.totalorder %s50, %s51
      %p60 = scmp.eq.s32.totalorder %s19, 0
      %p61 = por %p59, %p60
      %p62 = scmp.ne.s32.totalorder %s50, %s51
      %p63 = scmp.eq.s32.totalorder %s20, 1
      %p64 = por %p62, %p63
      %p66 = scmp.ne.s32.totalorder %s51, %s65
      %p67 = scmp.eq.s32.totalorder %s20, 0
      %p68 = por %p66, %p67
      %s70 = sadd.s32 %s69, 1
      %p73 = scmp.eq.s32.totalorder %s14, 1
      %p74 = scmp.ne.s32.totalorder %s69, %s71
      %p75 = scmp.eq.s32.totalorder %s14, 0
      %p76 = por %p74, %p75
      %p77 = scmp.ne.s32.totalorder %s69, %s71
      %p78 = scmp.eq.s32.totalorder %s19, 1
      %p79 = por %p77, %p78
      %p80 = scmp.ne.s32.totalorder %s71, %s72
      %p81 = scmp.eq.s32.totalorder %s19, 0
      %p82 = por %p80, %p81
      %p83 = scmp.ne.s32.totalorder %s71, %s72
      %p84 = scmp.eq.s32.totalorder %s20, 1
      %p85 = por %p83, %p84
      %p87 = scmp.ne.s32.totalorder %s72, %s86
      %p88 = scmp.eq.s32.totalorder %s20, 0
      %p89 = por %p87, %p88
      %s91 = sadd.s32 %s90, 1
      %p94 = scmp.eq.s32.totalorder %s14, 1
      %p95 = scmp.ne.s32.totalorder %s90, %s92
      %p96 = scmp.eq.s32.totalorder %s14, 0
      %p97 = por %p95, %p96
      %p98 = scmp.ne.s32.totalorder %s90, %s92
      %p99 = scmp.eq.s32.totalorder %s19, 1
      %p100 = por %p98, %p99
      %p101 = scmp.ne.s32.totalorder %s92, %s93
      %p102 = scmp.eq.s32.totalorder %s19, 0
      %p103 = por %p101, %p102
      %p104 = scmp.ne.s32.totalorder %s92, %s93
      %p105 = scmp.eq.s32.totalorder %s20, 1
      %p106 = por %p104, %p105
      %p108 = scmp.ne.s32.totalorder %s93, %s107
      %p109 = scmp.eq.s32.totalorder %s20, 0
      %p110 = por %p108, %p109
      %s112 = sadd.s32 %s111, 1
      %p115 = scmp.eq.s32.totalorder %s14, 1
      %p116 = scmp.ne.s32.totalorder %s111, %s113
      %p117 = scmp.eq.s32.totalorder %s14, 0
      %p118 = por %p116, %p117
      %p119 = scmp.ne.s32.totalorder %s111, %s113
      %p120 = scmp.eq.s32.totalorder %s19, 1
      %p121 = por %p119, %p120
      %p122 = scmp.ne.s32.totalorder %s113, %s114
      %p123 = scmp.eq.s32.totalorder %s19, 0
      %p124 = por %p122, %p123
      %p125 = scmp.ne.s32.totalorder %s113, %s114
      %p126 = scmp.eq.s32.totalorder %s20, 1
      %p127 = por %p125, %p126
      %p129 = scmp.ne.s32.totalorder %s114, %s128
      %p130 = scmp.eq.s32.totalorder %s20, 0
      %p131 = por %p129, %p130
      %s133 = sadd.s32 %s132, 1
      %p136 = scmp.eq.s32.totalorder %s14, 1
      %p137 = scmp.ne.s32.totalorder %s132, %s134
      %p138 = scmp.eq.s32.totalorder %s14, 0
      %p139 = por %p137, %p138
      %p140 = scmp.ne.s32.totalorder %s132, %s134
      %p141 = scmp.eq.s32.totalorder %s19, 1
      %p142 = por %p140, %p141
      %p143 = scmp.ne.s32.totalorder %s134, %s135
      %p144 = scmp.eq.s32.totalorder %s19, 0
      %p145 = por %p143, %p144
      %p146 = scmp.ne.s32.totalorder %s134, %s135
      %p147 = scmp.eq.s32.totalorder %s20, 1
      %p148 = por %p146, %p147
      %p150 = scmp.ne.s32.totalorder %s135, %s149
      %p151 = scmp.eq.s32.totalorder %s20, 0
      %p152 = por %p150, %p151
      %s154 = sadd.s32 %s153, 1
      %p157 = scmp.eq.s32.totalorder %s14, 1
      %p158 = scmp.ne.s32.totalorder %s153, %s155
      %p159 = scmp.eq.s32.totalorder %s14, 0
      %p160 = por %p158, %p159
      %p161 = scmp.ne.s32.totalorder %s153, %s155
      %p162 = scmp.eq.s32.totalorder %s19, 1
      %p163 = por %p161, %p162
      %p164 = scmp.ne.s32.totalorder %s155, %s156
      %p165 = scmp.eq.s32.totalorder %s19, 0
      %p166 = por %p164, %p165
      %p167 = scmp.ne.s32.totalorder %s155, %s156
      %p168 = scmp.eq.s32.totalorder %s20, 1
      %p169 = por %p167, %p168
      %p171 = scmp.ne.s32.totalorder %s156, %s170
      %p172 = scmp.eq.s32.totalorder %s20, 0
      %p173 = por %p171, %p172
      %s174 = ssub.s32 %s14, %s21
      %p175 = scmp.eq.s32.totalorder %s174, 0
      %s177 = sadd.s32 %s176, 1
      %s178 = scalar_select %p175, %s176, %s177
      %p181 = pneg %p175
      %p182 = scmp.eq.s32.totalorder %s14, 1
      %p183 = por %p181, %p182
      %p184 = scmp.ne.s32.totalorder %s176, %s179
      %p185 = scmp.eq.s32.totalorder %s14, 0
      %p186 = por %p184, %p185
      %p187 = scmp.ne.s32.totalorder %s176, %s179
      %p188 = scmp.eq.s32.totalorder %s19, 1
      %p189 = por %p187, %p188
      %p190 = scmp.ne.s32.totalorder %s179, %s180
      %p191 = scmp.eq.s32.totalorder %s19, 0
      %p192 = por %p190, %p191
      %p193 = scmp.ne.s32.totalorder %s179, %s180
      %p194 = scmp.eq.s32.totalorder %s20, 1
      %p195 = por %p193, %p194
      %p197 = scmp.ne.s32.totalorder %s180, %s196
      %p198 = scmp.eq.s32.totalorder %s20, 0
      %p199 = por %p197, %p198
      %p200 = scmp.le.s32.totalorder 1, %s14
      %p201 = scmp.lt.s32.totalorder %s14, 3
      %p202 = pnand %p200, %p201
      %p203 = pneg %p202
      // Predicated region
      $region9: #{bball_forward.1} parent=5 // pred_check
        _
      $region10: #{bball_forward.1} parent=5 // pred_check_branch
        %205 = sbr.rel (%p202) target = $region12
      $region11: #{bball_forward.1} parent=5 // pred_region
        %s206 = ssub.s32 %s14, 1
        // Predicated region
        $region13: #{bball_forward.1} parent=11 // pred_check
          %p207 = pneg %p61
        $region14: #{bball_forward.1} parent=11 // pred_check_branch
          %209 = sbr.rel (%p207) target = $region16
        $region15: #{bball_forward.1} parent=11 // pred_region
          _
        $region16: #{bball_forward.1} parent=11 // pred_fallthru
          _
        // Predicated region
        $region17: #{bball_forward.1} parent=11 // pred_check
          %p210 = pneg %p82
        $region18: #{bball_forward.1} parent=11 // pred_check_branch
          %212 = sbr.rel (%p210) target = $region20
        $region19: #{bball_forward.1} parent=11 // pred_region
          _
        $region20: #{bball_forward.1} parent=11 // pred_fallthru
          _
        // Predicated region
        $region21: #{bball_forward.1} parent=11 // pred_check
          %p213 = pneg %p103
        $region22: #{bball_forward.1} parent=11 // pred_check_branch
          %215 = sbr.rel (%p213) target = $region24
        $region23: #{bball_forward.1} parent=11 // pred_region
          %s217 = ssub.s32 16384, 16384
          %218 = vsyncadd [#allocation3], %s217
          %s219 = sshll.u32 [#allocation2], 4
          %s220 = int_to_ptr.vmem [resolvable:$true] %s219
          %225 = dma.hbm_to_vmem [thread:$0]  %s3, 16384, %s220, [#allocation3], 128, 128, 8
        $region24: #{bball_forward.1} parent=11 // pred_fallthru
          _
        // Predicated region
        $region25: #{bball_forward.1} parent=11 // pred_check
          %p226 = pneg %p124
        $region26: #{bball_forward.1} parent=11 // pred_check_branch
          %228 = sbr.rel (%p226) target = $region28
        $region27: #{bball_forward.1} parent=11 // pred_region
          _
        $region28: #{bball_forward.1} parent=11 // pred_fallthru
          _
        // Predicated region
        $region29: #{bball_forward.1} parent=11 // pred_check
          %p229 = pneg %p145
        $region30: #{bball_forward.1} parent=11 // pred_check_branch
          %231 = sbr.rel (%p229) target = $region32
        $region31: #{bball_forward.1} parent=11 // pred_region
          _
        $region32: #{bball_forward.1} parent=11 // pred_fallthru
          _
        // Predicated region
        $region33: #{bball_forward.1} parent=11 // pred_check
          %p232 = pneg %p166
        $region34: #{bball_forward.1} parent=11 // pred_check_branch
          %234 = sbr.rel (%p232) target = $region36
        $region35: #{bball_forward.1} parent=11 // pred_region
          _
        $region36: #{bball_forward.1} parent=11 // pred_fallthru
          _
      $region12: #{bball_forward.1} parent=5 // pred_fallthru
        _
      %p235 = scmp.lt.s32.totalorder %s14, 2
      // Predicated region
      $region37: #{bball_forward.1} parent=5 // pred_check
        %p236 = pneg %p235
      $region38: #{bball_forward.1} parent=5 // pred_check_branch
        %238 = sbr.rel (%p236) target = $region40
      $region39: #{bball_forward.1} parent=5 // pred_region
        // Predicated region
        $region41: #{bball_forward.1} parent=39 // pred_check
          %p239 = pneg %p34
        $region42: #{bball_forward.1} parent=39 // pred_check_branch
          %241 = sbr.rel (%p239) target = $region44
        $region43: #{bball_forward.1} parent=39 // pred_region
          %s242 = smul.u32 32, %s14
          %p243 = scmp.lt.s32.totalorder %s242, 63
          %s244 = scalar_select %p243, %s242, 63
          %s245 = smul.addr %s244, 4
          %s246 = scalar_lea.vmem %s0, %s245
          %s247 = smul.u32 32, %s14
        $region44: #{bball_forward.1} parent=39 // pred_fallthru
          _
      $region40: #{bball_forward.1} parent=5 // pred_fallthru
        _
      %p248 = scmp.le.s32.totalorder 1, %s14
      %p249 = scmp.lt.s32.totalorder %s14, 3
      %p250 = pnand %p248, %p249
      %p251 = pneg %p250
      // Predicated region
      $region45: #{bball_forward.1} parent=5 // pred_check
        _
      $region46: #{bball_forward.1} parent=5 // pred_check_branch
        %253 = sbr.rel (%p250) target = $region48
      $region47: #{bball_forward.1} parent=5 // pred_region
        %s254 = ssub.s32 %s14, 1
        // Predicated region
        $region49: #{bball_forward.1} parent=47 // pred_check
          %p255 = pneg %p103
        $region50: #{bball_forward.1} parent=47 // pred_check_branch
          %257 = sbr.rel (%p255) target = $region52
        $region51: #{bball_forward.1} parent=47 // pred_region
          %258 = dma.done [#allocation3], 16384
        $region52: #{bball_forward.1} parent=47 // pred_fallthru
          _
        %s259 = smul.u32 32, %s19
        %p260 = scmp.lt.s32.totalorder %s259, 63
        %s261 = scalar_select %p260, %s259, 63
        %s262 = smul.addr %s261, 4
        %s263 = scalar_lea.vmem %s0, %s262
        %p264 = pneg %p40
        %p265 = pneg %p37
        %p266 = pneg %p61
        %p267 = pneg %p58
        %p268 = pneg %p82
        %p269 = pneg %p79
        %p270 = pneg %p103
        %p271 = pneg %p100
        %p272 = pneg %p124
        %p273 = pneg %p121
        %p274 = pneg %p145
        %p275 = pneg %p142
        %p276 = pneg %p166
        %p277 = pneg %p163
        %p278 = pneg %p192
        %p279 = pneg %p189
        %s280 = smul.u32 32, %s19
        %p281 = scmp.lt.s32.totalorder %s280, 63
        %s282 = scalar_select %p281, %s280, 63
        %s283 = smul.addr %s282, 8
        %s284 = scalar_lea.vmem %s7, %s283
        %s285 = smul.u32 32, %s19
        %p286 = scmp.lt.s32.totalorder %s285, 63
        %s287 = scalar_select %p286, %s285, 63
        %s288 = smul.addr %s287, 4
        %s289 = scalar_lea.vmem %s0, %s288
        %s290 = smul.u32 32, %s19
        %s291 = smul.u32 32, %s19
        %p292 = scmp.lt.s32.totalorder %s291, 63
        %s293 = scalar_select %p292, %s291, 63
        %s294 = smul.addr %s293, 8
        %s295 = scalar_lea.vmem %s7, %s294
        %s296 = smul.u32 32, %s19
        %v298 = vld [vmem:[%s289] sm:$0xf]
        %v299 = vld [vmem:[%s289 + $0x4] sm:$0xf]
        %v300 = vld [vmem:[%s289 + $0x8] sm:$0xf]
        %v301 = vld [vmem:[%s289 + $0xc] sm:$0xf]
        %v302 = vld [vmem:[%s289 + $0x10] sm:$0xf]
        %v303 = vld [vmem:[%s289 + $0x14] sm:$0xf]
        %v304 = vld [vmem:[%s289 + $0x18] sm:$0xf]
        %v305 = vld [vmem:[%s289 + $0x1c] sm:$0xf]
        %v306 = vld [vmem:[%s289 + $0x20] sm:$0xf]
        %v307 = vld [vmem:[%s289 + $0x24] sm:$0xf]
        %v308 = vld [vmem:[%s289 + $0x28] sm:$0xf]
        %v309 = vld [vmem:[%s289 + $0x2c] sm:$0xf]
        %v310 = vld [vmem:[%s289 + $0x30] sm:$0xf]
        %v311 = vld [vmem:[%s289 + $0x34] sm:$0xf]
        %v312 = vld [vmem:[%s289 + $0x38] sm:$0xf]
        %v313 = vld [vmem:[%s289 + $0x3c] sm:$0xf]
        %v314 = vld [vmem:[%s289 + $0x40] sm:$0xf]
        %v315 = vld [vmem:[%s289 + $0x44] sm:$0xf]
        %v316 = vld [vmem:[%s289 + $0x48] sm:$0xf]
        %v317 = vld [vmem:[%s289 + $0x4c] sm:$0xf]
        %v318 = vld [vmem:[%s289 + $0x50] sm:$0xf]
        %v319 = vld [vmem:[%s289 + $0x54] sm:$0xf]
        %v320 = vld [vmem:[%s289 + $0x58] sm:$0xf]
        %v321 = vld [vmem:[%s289 + $0x5c] sm:$0xf]
        %v322 = vld [vmem:[%s289 + $0x60] sm:$0xf]
        %v323 = vld [vmem:[%s289 + $0x64] sm:$0xf]
        %v324 = vld [vmem:[%s289 + $0x68] sm:$0xf]
        %v325 = vld [vmem:[%s289 + $0x6c] sm:$0xf]
        %v326 = vld [vmem:[%s289 + $0x70] sm:$0xf]
        %v327 = vld [vmem:[%s289 + $0x74] sm:$0xf]
        %v328 = vld [vmem:[%s289 + $0x78] sm:$0xf]
        %v329 = vld [vmem:[%s289 + $0x7c] sm:$0xf]
        %v330 = vld [vmem:[%s1] sm:$0xff]
        %v331 = vld [vmem:[%s1 + $0x8] sm:$0x77]
        %v332 = vld [vmem:[%s2] sm:$0x3]
        %v334 = vlaneseq
        %v335 = vshrl.u32 %v334, 7
        %v336 = vsub.s32 0, %v335
        %v337 = vrot.slane %v332, %v336
        %v338 = vlaneseq
        %v339 = vshrl.u32 %v338, 7
        %v340 = vsub.s32 1, %v339
        %v341 = vrot.slane %v332, %v340
        %v376 = vunpack.c.l.b16 %v298
        %v377 = vunpack.c.l.b16 %v299
        %v378 = vunpack.c.l.b16 %v300
        %v379 = vunpack.c.l.b16 %v301
        %v380 = vunpack.c.l.b16 %v302
        %v381 = vunpack.c.l.b16 %v303
        %v382 = vunpack.c.l.b16 %v304
        %v383 = vunpack.c.l.b16 %v305
        %v384 = vunpack.c.l.b16 %v306
        %v385 = vunpack.c.l.b16 %v307
        %v386 = vunpack.c.l.b16 %v308
        %v387 = vunpack.c.l.b16 %v309
        %v388 = vunpack.c.l.b16 %v310
        %v389 = vunpack.c.l.b16 %v311
        %v390 = vunpack.c.l.b16 %v312
        %v391 = vunpack.c.l.b16 %v313
        %v392 = vunpack.c.l.b16 %v314
        %v393 = vunpack.c.l.b16 %v315
        %v394 = vunpack.c.l.b16 %v316
        %v395 = vunpack.c.l.b16 %v317
        %v396 = vunpack.c.l.b16 %v318
        %v397 = vunpack.c.l.b16 %v319
        %v398 = vunpack.c.l.b16 %v320
        %v399 = vunpack.c.l.b16 %v321
        %v400 = vunpack.c.l.b16 %v322
        %v401 = vunpack.c.l.b16 %v323
        %v402 = vunpack.c.l.b16 %v324
        %v403 = vunpack.c.l.b16 %v325
        %v404 = vunpack.c.l.b16 %v326
        %v405 = vunpack.c.l.b16 %v327
        %v406 = vunpack.c.l.b16 %v328
        %v407 = vunpack.c.l.b16 %v329
        %v408 = vpack.c.b16 %v377, %v376
        %v409 = vpack.c.b16 %v379, %v378
        %v410 = vpack.c.b16 %v381, %v380
        %v411 = vpack.c.b16 %v383, %v382
        %v412 = vpack.c.b16 %v385, %v384
        %v413 = vpack.c.b16 %v387, %v386
        %v414 = vpack.c.b16 %v389, %v388
        %v415 = vpack.c.b16 %v391, %v390
        %v416 = vpack.c.b16 %v393, %v392
        %v417 = vpack.c.b16 %v395, %v394
        %v418 = vpack.c.b16 %v397, %v396
        %v419 = vpack.c.b16 %v399, %v398
        %v420 = vpack.c.b16 %v401, %v400
        %v421 = vpack.c.b16 %v403, %v402
        %v422 = vpack.c.b16 %v405, %v404
        %v423 = vpack.c.b16 %v407, %v406
        %v426 = vunpack.c.l.b16 %v330
        %v427 = vunpack.c.h.b16 %v330
        %v428 = vunpack.c.l.b16 %v331
        %v429 = vunpack.c.h.b16 %v331
        %v430 = vpack.c.b16 %v428, %v426
        %v431 = vpack.c.b16 %v429, %v427
        %vm432 = vcmask 105472
        %v434 = vsel %vm432, %v408, 0
        %v437 = vsel %vm432, %v409, 0
        %v440 = vsel %vm432, %v410, 0
        %v443 = vsel %vm432, %v411, 0
        %v446 = vsel %vm432, %v412, 0
        %v449 = vsel %vm432, %v413, 0
        %v452 = vsel %vm432, %v414, 0
        %v455 = vsel %vm432, %v415, 0
        %v458 = vsel %vm432, %v416, 0
        %v461 = vsel %vm432, %v417, 0
        %v464 = vsel %vm432, %v418, 0
        %v467 = vsel %vm432, %v419, 0
        %v470 = vsel %vm432, %v420, 0
        %v473 = vsel %vm432, %v421, 0
        %v476 = vsel %vm432, %v422, 0
        %v479 = vsel %vm432, %v423, 0
        %vm481 = vcmask 1045504
        %vm482 = vcmask 1046528
        %v483 = vsel %vm481, 4294967295, 65535
        %v484 = vsel %vm482, %v483, 0
        %v486 = vand.u32 %v430, %v484
        %v489 = vand.u32 %v431, %v484
        %491 = vmatprep.subr.bf16.mxu0 0
        %492 = vmatpush1.bf16.msra.mxu0 0
        %493 = vmatprep.subr.bf16.mxu0 0
        %494 = vmatpush1.bf16.msra.mxu0 0
        %495 = vmatprep.subr.bf16.mxu0 0
        %496 = vmatpush1.bf16.msra.mxu0 0
        %497 = vmatprep.subr.bf16.mxu0 0
        %498 = vmatpush1.bf16.msra.mxu0 0
        %499 = vmatprep.subr.bf16.mxu0 0
        %500 = vmatpush1.bf16.msra.mxu0 0
        %501 = vmatprep.subr.bf16.mxu0 0
        %502 = vmatpush1.bf16.msra.mxu0 0
        %503 = vmatprep.subr.bf16.mxu0 0
        %504 = vmatpush1.bf16.msra.mxu0 0
        %505 = vmatprep.subr.bf16.mxu0 %v489
        %506 = vmatpush1.bf16.msra.mxu0 %v486
        %507 = vmatprep.subr.bf16.mxu0 0
        %508 = vmatpush2.bf16.msra.mxu0 0
        %509 = vmatprep.subr.bf16.mxu0 0
        %510 = vmatpush2.bf16.msra.mxu0 0
        %511 = vmatprep.subr.bf16.mxu0 0
        %512 = vmatpush2.bf16.msra.mxu0 0
        %513 = vmatprep.subr.bf16.mxu0 0
        %514 = vmatpush2.bf16.msra.mxu0 0
        %515 = vmatprep.subr.bf16.mxu0 0
        %516 = vmatpush2.bf16.msra.mxu0 0
        %517 = vmatprep.subr.bf16.mxu0 0
        %518 = vmatpush2.bf16.msra.mxu0 0
        %519 = vmatprep.subr.bf16.mxu0 0
        %520 = vmatpush2.bf16.msra.mxu0 0
        %521 = vmatprep.subr.bf16.mxu0 0
        %522 = vmatpush2.bf16.msra.mxu0 0
        %523 = vmatprep.mubr.bf16.mxu0 0
        %524 = vmatmul.mubr.bf16.gmra.mxu0 %v434
        %v525 = vpop.f32.mrf.mxu0
        %v526 = vadd.f32 %v337, %v525
        %v527 = vpop.f32.mrf.mxu0
        %v528 = vadd.f32 %v341, %v527
        %v529 = vpop.f32.mrf.mxu0
        %v530 = vadd.f32 %v337, %v529
        %v531 = vpop.f32.mrf.mxu0
        %v532 = vadd.f32 %v341, %v531
        %533 = vmatprep.mubr.bf16.mxu0 0
        %534 = vmatmul.mubr.bf16.gmra.mxu0 %v437
        %v535 = vpop.f32.mrf.mxu0
        %v536 = vadd.f32 %v337, %v535
        %v537 = vpop.f32.mrf.mxu0
        %v538 = vadd.f32 %v341, %v537
        %v539 = vpop.f32.mrf.mxu0
        %v540 = vadd.f32 %v337, %v539
        %v541 = vpop.f32.mrf.mxu0
        %v542 = vadd.f32 %v341, %v541
        %543 = vmatprep.mubr.bf16.mxu0 0
        %544 = vmatmul.mubr.bf16.gmra.mxu0 %v440
        %v545 = vpop.f32.mrf.mxu0
        %v546 = vadd.f32 %v337, %v545
        %v547 = vpop.f32.mrf.mxu0
        %v548 = vadd.f32 %v341, %v547
        %v549 = vpop.f32.mrf.mxu0
        %v550 = vadd.f32 %v337, %v549
        %v551 = vpop.f32.mrf.mxu0
        %v552 = vadd.f32 %v341, %v551
        %553 = vmatprep.mubr.bf16.mxu0 0
        %554 = vmatmul.mubr.bf16.gmra.mxu0 %v443
        %v555 = vpop.f32.mrf.mxu0
        %v556 = vadd.f32 %v337, %v555
        %v557 = vpop.f32.mrf.mxu0
        %v558 = vadd.f32 %v341, %v557
        %v559 = vpop.f32.mrf.mxu0
        %v560 = vadd.f32 %v337, %v559
        %v561 = vpop.f32.mrf.mxu0
        %v562 = vadd.f32 %v341, %v561
        %563 = vmatprep.mubr.bf16.mxu0 0
        %564 = vmatmul.mubr.bf16.gmra.mxu0 %v446
        %v565 = vpop.f32.mrf.mxu0
        %v566 = vadd.f32 %v337, %v565
        %v567 = vpop.f32.mrf.mxu0
        %v568 = vadd.f32 %v341, %v567
        %v569 = vpop.f32.mrf.mxu0
        %v570 = vadd.f32 %v337, %v569
        %v571 = vpop.f32.mrf.mxu0
        %v572 = vadd.f32 %v341, %v571
        %573 = vmatprep.mubr.bf16.mxu0 0
        %574 = vmatmul.mubr.bf16.gmra.mxu0 %v449
        %v575 = vpop.f32.mrf.mxu0
        %v576 = vadd.f32 %v337, %v575
        %v577 = vpop.f32.mrf.mxu0
        %v578 = vadd.f32 %v341, %v577
        %v579 = vpop.f32.mrf.mxu0
        %v580 = vadd.f32 %v337, %v579
        %v581 = vpop.f32.mrf.mxu0
        %v582 = vadd.f32 %v341, %v581
        %583 = vmatprep.mubr.bf16.mxu0 0
        %584 = vmatmul.mubr.bf16.gmra.mxu0 %v452
        %v585 = vpop.f32.mrf.mxu0
        %v586 = vadd.f32 %v337, %v585
        %v587 = vpop.f32.mrf.mxu0
        %v588 = vadd.f32 %v341, %v587
        %v589 = vpop.f32.mrf.mxu0
        %v590 = vadd.f32 %v337, %v589
        %v591 = vpop.f32.mrf.mxu0
        %v592 = vadd.f32 %v341, %v591
        %593 = vmatprep.mubr.bf16.mxu0 0
        %594 = vmatmul.mubr.bf16.gmra.mxu0 %v455
        %v595 = vpop.f32.mrf.mxu0
        %v596 = vadd.f32 %v337, %v595
        %v597 = vpop.f32.mrf.mxu0
        %v598 = vadd.f32 %v341, %v597
        %v599 = vpop.f32.mrf.mxu0
        %v600 = vadd.f32 %v337, %v599
        %v601 = vpop.f32.mrf.mxu0
        %v602 = vadd.f32 %v341, %v601
        %603 = vmatprep.mubr.bf16.mxu0 0
        %604 = vmatmul.mubr.bf16.gmra.mxu0 %v458
        %v605 = vpop.f32.mrf.mxu0
        %v606 = vadd.f32 %v337, %v605
        %v607 = vpop.f32.mrf.mxu0
        %v608 = vadd.f32 %v341, %v607
        %v609 = vpop.f32.mrf.mxu0
        %v610 = vadd.f32 %v337, %v609
        %v611 = vpop.f32.mrf.mxu0
        %v612 = vadd.f32 %v341, %v611
        %613 = vmatprep.mubr.bf16.mxu0 0
        %614 = vmatmul.mubr.bf16.gmra.mxu0 %v461
        %v615 = vpop.f32.mrf.mxu0
        %v616 = vadd.f32 %v337, %v615
        %v617 = vpop.f32.mrf.mxu0
        %v618 = vadd.f32 %v341, %v617
        %v619 = vpop.f32.mrf.mxu0
        %v620 = vadd.f32 %v337, %v619
        %v621 = vpop.f32.mrf.mxu0
        %v622 = vadd.f32 %v341, %v621
        %623 = vmatprep.mubr.bf16.mxu0 0
        %624 = vmatmul.mubr.bf16.gmra.mxu0 %v464
        %v625 = vpop.f32.mrf.mxu0
        %v626 = vadd.f32 %v337, %v625
        %v627 = vpop.f32.mrf.mxu0
        %v628 = vadd.f32 %v341, %v627
        %v629 = vpop.f32.mrf.mxu0
        %v630 = vadd.f32 %v337, %v629
        %v631 = vpop.f32.mrf.mxu0
        %v632 = vadd.f32 %v341, %v631
        %633 = vmatprep.mubr.bf16.mxu0 0
        %634 = vmatmul.mubr.bf16.gmra.mxu0 %v467
        %v635 = vpop.f32.mrf.mxu0
        %v636 = vadd.f32 %v337, %v635
        %v637 = vpop.f32.mrf.mxu0
        %v638 = vadd.f32 %v341, %v637
        %v639 = vpop.f32.mrf.mxu0
        %v640 = vadd.f32 %v337, %v639
        %v641 = vpop.f32.mrf.mxu0
        %v642 = vadd.f32 %v341, %v641
        %643 = vmatprep.mubr.bf16.mxu0 0
        %644 = vmatmul.mubr.bf16.gmra.mxu0 %v470
        %v645 = vpop.f32.mrf.mxu0
        %v646 = vadd.f32 %v337, %v645
        %v647 = vpop.f32.mrf.mxu0
        %v648 = vadd.f32 %v341, %v647
        %v649 = vpop.f32.mrf.mxu0
        %v650 = vadd.f32 %v337, %v649
        %v651 = vpop.f32.mrf.mxu0
        %v652 = vadd.f32 %v341, %v651
        %653 = vmatprep.mubr.bf16.mxu0 0
        %654 = vmatmul.mubr.bf16.gmra.mxu0 %v473
        %v655 = vpop.f32.mrf.mxu0
        %v656 = vadd.f32 %v337, %v655
        %v657 = vpop.f32.mrf.mxu0
        %v658 = vadd.f32 %v341, %v657
        %v659 = vpop.f32.mrf.mxu0
        %v660 = vadd.f32 %v337, %v659
        %v661 = vpop.f32.mrf.mxu0
        %v662 = vadd.f32 %v341, %v661
        %663 = vmatprep.mubr.bf16.mxu0 0
        %664 = vmatmul.mubr.bf16.gmra.mxu0 %v476
        %v665 = vpop.f32.mrf.mxu0
        %v666 = vadd.f32 %v337, %v665
        %v667 = vpop.f32.mrf.mxu0
        %v668 = vadd.f32 %v341, %v667
        %v669 = vpop.f32.mrf.mxu0
        %v670 = vadd.f32 %v337, %v669
        %v671 = vpop.f32.mrf.mxu0
        %v672 = vadd.f32 %v341, %v671
        %673 = vmatprep.mubr.bf16.mxu0 0
        %674 = vmatmul.mubr.bf16.gmra.mxu0 %v479
        %v675 = vpop.f32.mrf.mxu0
        %v676 = vadd.f32 %v337, %v675
        %v677 = vpop.f32.mrf.mxu0
        %v678 = vadd.f32 %v341, %v677
        %v679 = vpop.f32.mrf.mxu0
        %v680 = vadd.f32 %v337, %v679
        %v681 = vpop.f32.mrf.mxu0
        %v682 = vadd.f32 %v341, %v681
        %683 = vdwg.mxu0
        %v684 = vmax.f32 %v526, 0.0
        %v685 = vmax.f32 %v528, 0.0
        %v686 = vmax.f32 %v530, 0.0
        %v687 = vmax.f32 %v532, 0.0
        %v688 = vmax.f32 %v536, 0.0
        %v689 = vmax.f32 %v538, 0.0
        %v690 = vmax.f32 %v540, 0.0
        %v691 = vmax.f32 %v542, 0.0
        %v692 = vmax.f32 %v546, 0.0
        %v693 = vmax.f32 %v548, 0.0
        %v694 = vmax.f32 %v550, 0.0
        %v695 = vmax.f32 %v552, 0.0
        %v696 = vmax.f32 %v556, 0.0
        %v697 = vmax.f32 %v558, 0.0
        %v698 = vmax.f32 %v560, 0.0
        %v699 = vmax.f32 %v562, 0.0
        %v700 = vmax.f32 %v566, 0.0
        %v701 = vmax.f32 %v568, 0.0
        %v702 = vmax.f32 %v570, 0.0
        %v703 = vmax.f32 %v572, 0.0
        %v704 = vmax.f32 %v576, 0.0
        %v705 = vmax.f32 %v578, 0.0
        %v706 = vmax.f32 %v580, 0.0
        %v707 = vmax.f32 %v582, 0.0
        %v708 = vmax.f32 %v586, 0.0
        %v709 = vmax.f32 %v588, 0.0
        %v710 = vmax.f32 %v590, 0.0
        %v711 = vmax.f32 %v592, 0.0
        %v712 = vmax.f32 %v596, 0.0
        %v713 = vmax.f32 %v598, 0.0
        %v714 = vmax.f32 %v600, 0.0
        %v715 = vmax.f32 %v602, 0.0
        %v716 = vmax.f32 %v606, 0.0
        %v717 = vmax.f32 %v608, 0.0
        %v718 = vmax.f32 %v610, 0.0
        %v719 = vmax.f32 %v612, 0.0
        %v720 = vmax.f32 %v616, 0.0
        %v721 = vmax.f32 %v618, 0.0
        %v722 = vmax.f32 %v620, 0.0
        %v723 = vmax.f32 %v622, 0.0
        %v724 = vmax.f32 %v626, 0.0
        %v725 = vmax.f32 %v628, 0.0
        %v726 = vmax.f32 %v630, 0.0
        %v727 = vmax.f32 %v632, 0.0
        %v728 = vmax.f32 %v636, 0.0
        %v729 = vmax.f32 %v638, 0.0
        %v730 = vmax.f32 %v640, 0.0
        %v731 = vmax.f32 %v642, 0.0
        %v732 = vmax.f32 %v646, 0.0
        %v733 = vmax.f32 %v648, 0.0
        %v734 = vmax.f32 %v650, 0.0
        %v735 = vmax.f32 %v652, 0.0
        %v736 = vmax.f32 %v656, 0.0
        %v737 = vmax.f32 %v658, 0.0
        %v738 = vmax.f32 %v660, 0.0
        %v739 = vmax.f32 %v662, 0.0
        %v740 = vmax.f32 %v666, 0.0
        %v741 = vmax.f32 %v668, 0.0
        %v742 = vmax.f32 %v670, 0.0
        %v743 = vmax.f32 %v672, 0.0
        %v744 = vmax.f32 %v676, 0.0
        %v745 = vmax.f32 %v678, 0.0
        %v746 = vmax.f32 %v680, 0.0
        %v747 = vmax.f32 %v682, 0.0
        %v748 = vpack.c.bf16 %v686, %v684
        %v749 = vpack.c.bf16 %v687, %v685
        %v750 = vpack.c.bf16 %v690, %v688
        %v751 = vpack.c.bf16 %v691, %v689
        %v752 = vpack.c.bf16 %v694, %v692
        %v753 = vpack.c.bf16 %v695, %v693
        %v754 = vpack.c.bf16 %v698, %v696
        %v755 = vpack.c.bf16 %v699, %v697
        %v756 = vpack.c.bf16 %v702, %v700
        %v757 = vpack.c.bf16 %v703, %v701
        %v758 = vpack.c.bf16 %v706, %v704
        %v759 = vpack.c.bf16 %v707, %v705
        %v760 = vpack.c.bf16 %v710, %v708
        %v761 = vpack.c.bf16 %v711, %v709
        %v762 = vpack.c.bf16 %v714, %v712
        %v763 = vpack.c.bf16 %v715, %v713
        %v764 = vpack.c.bf16 %v718, %v716
        %v765 = vpack.c.bf16 %v719, %v717
        %v766 = vpack.c.bf16 %v722, %v720
        %v767 = vpack.c.bf16 %v723, %v721
        %v768 = vpack.c.bf16 %v726, %v724
        %v769 = vpack.c.bf16 %v727, %v725
        %v770 = vpack.c.bf16 %v730, %v728
        %v771 = vpack.c.bf16 %v731, %v729
        %v772 = vpack.c.bf16 %v734, %v732
        %v773 = vpack.c.bf16 %v735, %v733
        %v774 = vpack.c.bf16 %v738, %v736
        %v775 = vpack.c.bf16 %v739, %v737
        %v776 = vpack.c.bf16 %v742, %v740
        %v777 = vpack.c.bf16 %v743, %v741
        %v778 = vpack.c.bf16 %v746, %v744
        %v779 = vpack.c.bf16 %v747, %v745
        %v780 = vld [vmem:[#allocation2] sm:$0xff]
        %v781 = vld [vmem:[#allocation2 + $0x8] sm:$0xff]
        %v782 = vld [vmem:[#allocation2 + $0x10] sm:$0xff]
        %v783 = vld [vmem:[#allocation2 + $0x18] sm:$0xff]
        %v784 = vld [vmem:[#allocation2 + $0x20] sm:$0xff]
        %v785 = vld [vmem:[#allocation2 + $0x28] sm:$0xff]
        %v786 = vld [vmem:[#allocation2 + $0x30] sm:$0xff]
        %v787 = vld [vmem:[#allocation2 + $0x38] sm:$0xff]
        %v788 = vld [vmem:[#allocation2 + $0x40] sm:$0xff]
        %v789 = vld [vmem:[#allocation2 + $0x48] sm:$0xff]
        %v790 = vld [vmem:[#allocation2 + $0x50] sm:$0xff]
        %v791 = vld [vmem:[#allocation2 + $0x58] sm:$0xff]
        %v792 = vld [vmem:[#allocation2 + $0x60] sm:$0xff]
        %v793 = vld [vmem:[#allocation2 + $0x68] sm:$0xff]
        %v794 = vld [vmem:[#allocation2 + $0x70] sm:$0xff]
        %v795 = vld [vmem:[#allocation2 + $0x78] sm:$0xff]
        %v796 = vld [vmem:[#allocation2 + $0x80] sm:$0xff]
        %v797 = vld [vmem:[#allocation2 + $0x88] sm:$0xff]
        %v798 = vld [vmem:[#allocation2 + $0x90] sm:$0xff]
        %v799 = vld [vmem:[#allocation2 + $0x98] sm:$0xff]
        %v800 = vld [vmem:[#allocation2 + $0xa0] sm:$0xff]
        %v801 = vld [vmem:[#allocation2 + $0xa8] sm:$0xff]
        %v802 = vld [vmem:[#allocation2 + $0xb0] sm:$0xff]
        %v803 = vld [vmem:[#allocation2 + $0xb8] sm:$0xff]
        %v804 = vld [vmem:[#allocation2 + $0xc0] sm:$0xff]
        %v805 = vld [vmem:[#allocation2 + $0xc8] sm:$0xff]
        %v806 = vld [vmem:[#allocation2 + $0xd0] sm:$0xff]
        %v807 = vld [vmem:[#allocation2 + $0xd8] sm:$0xff]
        %v808 = vld [vmem:[#allocation2 + $0xe0] sm:$0xff]
        %v809 = vld [vmem:[#allocation2 + $0xe8] sm:$0xff]
        %v810 = vld [vmem:[#allocation2 + $0xf0] sm:$0xff]
        %v811 = vld [vmem:[#allocation2 + $0xf8] sm:$0xff]
        %v812 = vld [vmem:[%s4] sm:$0x3]
        %v814 = vlaneseq
        %v815 = vshrl.u32 %v814, 7
        %v816 = vsub.s32 0, %v815
        %v817 = vrot.slane %v812, %v816
        %v818 = vlaneseq
        %v819 = vshrl.u32 %v818, 7
        %v820 = vsub.s32 1, %v819
        %v821 = vrot.slane %v812, %v820
        %v856 = vunpack.c.l.b16 %v780
        %v857 = vunpack.c.h.b16 %v780
        %v858 = vunpack.c.l.b16 %v781
        %v859 = vunpack.c.h.b16 %v781
        %v860 = vunpack.c.l.b16 %v782
        %v861 = vunpack.c.h.b16 %v782
        %v862 = vunpack.c.l.b16 %v783
        %v863 = vunpack.c.h.b16 %v783
        %v864 = vunpack.c.l.b16 %v784
        %v865 = vunpack.c.h.b16 %v784
        %v866 = vunpack.c.l.b16 %v785
        %v867 = vunpack.c.h.b16 %v785
        %v868 = vunpack.c.l.b16 %v786
        %v869 = vunpack.c.h.b16 %v786
        %v870 = vunpack.c.l.b16 %v787
        %v871 = vunpack.c.h.b16 %v787
        %v872 = vunpack.c.l.b16 %v788
        %v873 = vunpack.c.h.b16 %v788
        %v874 = vunpack.c.l.b16 %v789
        %v875 = vunpack.c.h.b16 %v789
        %v876 = vunpack.c.l.b16 %v790
        %v877 = vunpack.c.h.b16 %v790
        %v878 = vunpack.c.l.b16 %v791
        %v879 = vunpack.c.h.b16 %v791
        %v880 = vunpack.c.l.b16 %v792
        %v881 = vunpack.c.h.b16 %v792
        %v882 = vunpack.c.l.b16 %v793
        %v883 = vunpack.c.h.b16 %v793
        %v884 = vunpack.c.l.b16 %v794
        %v885 = vunpack.c.h.b16 %v794
        %v886 = vunpack.c.l.b16 %v795
        %v887 = vunpack.c.h.b16 %v795
        %v888 = vunpack.c.l.b16 %v796
        %v889 = vunpack.c.h.b16 %v796
        %v890 = vunpack.c.l.b16 %v797
        %v891 = vunpack.c.h.b16 %v797
        %v892 = vunpack.c.l.b16 %v798
        %v893 = vunpack.c.h.b16 %v798
        %v894 = vunpack.c.l.b16 %v799
        %v895 = vunpack.c.h.b16 %v799
        %v896 = vunpack.c.l.b16 %v800
        %v897 = vunpack.c.h.b16 %v800
        %v898 = vunpack.c.l.b16 %v801
        %v899 = vunpack.c.h.b16 %v801
        %v900 = vunpack.c.l.b16 %v802
        %v901 = vunpack.c.h.b16 %v802
        %v902 = vunpack.c.l.b16 %v803
        %v903 = vunpack.c.h.b16 %v803
        %v904 = vunpack.c.l.b16 %v804
        %v905 = vunpack.c.h.b16 %v804
        %v906 = vunpack.c.l.b16 %v805
        %v907 = vunpack.c.h.b16 %v805
        %v908 = vunpack.c.l.b16 %v806
        %v909 = vunpack.c.h.b16 %v806
        %v910 = vunpack.c.l.b16 %v807
        %v911 = vunpack.c.h.b16 %v807
        %v912 = vunpack.c.l.b16 %v808
        %v913 = vunpack.c.h.b16 %v808
        %v914 = vunpack.c.l.b16 %v809
        %v915 = vunpack.c.h.b16 %v809
        %v916 = vunpack.c.l.b16 %v810
        %v917 = vunpack.c.h.b16 %v810
        %v918 = vunpack.c.l.b16 %v811
        %v919 = vunpack.c.h.b16 %v811
        %v920 = vpack.c.b16 %v858, %v856
        %v921 = vpack.c.b16 %v859, %v857
        %v922 = vpack.c.b16 %v862, %v860
        %v923 = vpack.c.b16 %v863, %v861
        %v924 = vpack.c.b16 %v866, %v864
        %v925 = vpack.c.b16 %v867, %v865
        %v926 = vpack.c.b16 %v870, %v868
        %v927 = vpack.c.b16 %v871, %v869
        %v928 = vpack.c.b16 %v874, %v872
        %v929 = vpack.c.b16 %v875, %v873
        %v930 = vpack.c.b16 %v878, %v876
        %v931 = vpack.c.b16 %v879, %v877
        %v932 = vpack.c.b16 %v882, %v880
        %v933 = vpack.c.b16 %v883, %v881
        %v934 = vpack.c.b16 %v886, %v884
        %v935 = vpack.c.b16 %v887, %v885
        %v936 = vpack.c.b16 %v890, %v888
        %v937 = vpack.c.b16 %v891, %v889
        %v938 = vpack.c.b16 %v894, %v892
        %v939 = vpack.c.b16 %v895, %v893
        %v940 = vpack.c.b16 %v898, %v896
        %v941 = vpack.c.b16 %v899, %v897
        %v942 = vpack.c.b16 %v902, %v900
        %v943 = vpack.c.b16 %v903, %v901
        %v944 = vpack.c.b16 %v906, %v904
        %v945 = vpack.c.b16 %v907, %v905
        %v946 = vpack.c.b16 %v910, %v908
        %v947 = vpack.c.b16 %v911, %v909
        %v948 = vpack.c.b16 %v914, %v912
        %v949 = vpack.c.b16 %v915, %v913
        %v950 = vpack.c.b16 %v918, %v916
        %v951 = vpack.c.b16 %v919, %v917
        %984 = vmatprep.subr.bf16.mxu0 %v935
        %985 = vmatpush1.bf16.msra.mxu0 %v934
        %986 = vmatprep.subr.bf16.mxu0 %v933
        %987 = vmatpush1.bf16.msra.mxu0 %v932
        %988 = vmatprep.subr.bf16.mxu0 %v931
        %989 = vmatpush1.bf16.msra.mxu0 %v930
        %990 = vmatprep.subr.bf16.mxu0 %v929
        %991 = vmatpush1.bf16.msra.mxu0 %v928
        %992 = vmatprep.subr.bf16.mxu0 %v927
        %993 = vmatpush1.bf16.msra.mxu0 %v926
        %994 = vmatprep.subr.bf16.mxu0 %v925
        %995 = vmatpush1.bf16.msra.mxu0 %v924
        %996 = vmatprep.subr.bf16.mxu0 %v923
        %997 = vmatpush1.bf16.msra.mxu0 %v922
        %998 = vmatprep.subr.bf16.mxu0 %v921
        %999 = vmatpush1.bf16.msra.mxu0 %v920
        %1000 = vmatprep.subr.bf16.mxu0 %v951
        %1001 = vmatpush2.bf16.msra.mxu0 %v950
        %1002 = vmatprep.subr.bf16.mxu0 %v949
        %1003 = vmatpush2.bf16.msra.mxu0 %v948
        %1004 = vmatprep.subr.bf16.mxu0 %v947
        %1005 = vmatpush2.bf16.msra.mxu0 %v946
        %1006 = vmatprep.subr.bf16.mxu0 %v945
        %1007 = vmatpush2.bf16.msra.mxu0 %v944
        %1008 = vmatprep.subr.bf16.mxu0 %v943
        %1009 = vmatpush2.bf16.msra.mxu0 %v942
        %1010 = vmatprep.subr.bf16.mxu0 %v941
        %1011 = vmatpush2.bf16.msra.mxu0 %v940
        %1012 = vmatprep.subr.bf16.mxu0 %v939
        %1013 = vmatpush2.bf16.msra.mxu0 %v938
        %1014 = vmatprep.subr.bf16.mxu0 %v937
        %1015 = vmatpush2.bf16.msra.mxu0 %v936
        %1016 = vmatprep.mubr.bf16.mxu0 %v749
        %1017 = vmatmul.mubr.bf16.gmra.mxu0 %v748
        %v1018 = vpop.f32.mrf.mxu0
        %v1019 = vadd.f32 %v817, %v1018
        %v1020 = vpop.f32.mrf.mxu0
        %v1021 = vadd.f32 %v821, %v1020
        %v1022 = vpop.f32.mrf.mxu0
        %v1023 = vadd.f32 %v817, %v1022
        %v1024 = vpop.f32.mrf.mxu0
        %v1025 = vadd.f32 %v821, %v1024
        %1026 = vmatprep.mubr.bf16.mxu0 %v751
        %1027 = vmatmul.mubr.bf16.gmra.mxu0 %v750
        %v1028 = vpop.f32.mrf.mxu0
        %v1029 = vadd.f32 %v817, %v1028
        %v1030 = vpop.f32.mrf.mxu0
        %v1031 = vadd.f32 %v821, %v1030
        %v1032 = vpop.f32.mrf.mxu0
        %v1033 = vadd.f32 %v817, %v1032
        %v1034 = vpop.f32.mrf.mxu0
        %v1035 = vadd.f32 %v821, %v1034
        %1036 = vmatprep.mubr.bf16.mxu0 %v753
        %1037 = vmatmul.mubr.bf16.gmra.mxu0 %v752
        %v1038 = vpop.f32.mrf.mxu0
        %v1039 = vadd.f32 %v817, %v1038
        %v1040 = vpop.f32.mrf.mxu0
        %v1041 = vadd.f32 %v821, %v1040
        %v1042 = vpop.f32.mrf.mxu0
        %v1043 = vadd.f32 %v817, %v1042
        %v1044 = vpop.f32.mrf.mxu0
        %v1045 = vadd.f32 %v821, %v1044
        %1046 = vmatprep.mubr.bf16.mxu0 %v755
        %1047 = vmatmul.mubr.bf16.gmra.mxu0 %v754
        %v1048 = vpop.f32.mrf.mxu0
        %v1049 = vadd.f32 %v817, %v1048
        %v1050 = vpop.f32.mrf.mxu0
        %v1051 = vadd.f32 %v821, %v1050
        %v1052 = vpop.f32.mrf.mxu0
        %v1053 = vadd.f32 %v817, %v1052
        %v1054 = vpop.f32.mrf.mxu0
        %v1055 = vadd.f32 %v821, %v1054
        %1056 = vmatprep.mubr.bf16.mxu0 %v757
        %1057 = vmatmul.mubr.bf16.gmra.mxu0 %v756
        %v1058 = vpop.f32.mrf.mxu0
        %v1059 = vadd.f32 %v817, %v1058
        %v1060 = vpop.f32.mrf.mxu0
        %v1061 = vadd.f32 %v821, %v1060
        %v1062 = vpop.f32.mrf.mxu0
        %v1063 = vadd.f32 %v817, %v1062
        %v1064 = vpop.f32.mrf.mxu0
        %v1065 = vadd.f32 %v821, %v1064
        %1066 = vmatprep.mubr.bf16.mxu0 %v759
        %1067 = vmatmul.mubr.bf16.gmra.mxu0 %v758
        %v1068 = vpop.f32.mrf.mxu0
        %v1069 = vadd.f32 %v817, %v1068
        %v1070 = vpop.f32.mrf.mxu0
        %v1071 = vadd.f32 %v821, %v1070
        %v1072 = vpop.f32.mrf.mxu0
        %v1073 = vadd.f32 %v817, %v1072
        %v1074 = vpop.f32.mrf.mxu0
        %v1075 = vadd.f32 %v821, %v1074
        %1076 = vmatprep.mubr.bf16.mxu0 %v761
        %1077 = vmatmul.mubr.bf16.gmra.mxu0 %v760
        %v1078 = vpop.f32.mrf.mxu0
        %v1079 = vadd.f32 %v817, %v1078
        %v1080 = vpop.f32.mrf.mxu0
        %v1081 = vadd.f32 %v821, %v1080
        %v1082 = vpop.f32.mrf.mxu0
        %v1083 = vadd.f32 %v817, %v1082
        %v1084 = vpop.f32.mrf.mxu0
        %v1085 = vadd.f32 %v821, %v1084
        %1086 = vmatprep.mubr.bf16.mxu0 %v763
        %1087 = vmatmul.mubr.bf16.gmra.mxu0 %v762
        %v1088 = vpop.f32.mrf.mxu0
        %v1089 = vadd.f32 %v817, %v1088
        %v1090 = vpop.f32.mrf.mxu0
        %v1091 = vadd.f32 %v821, %v1090
        %v1092 = vpop.f32.mrf.mxu0
        %v1093 = vadd.f32 %v817, %v1092
        %v1094 = vpop.f32.mrf.mxu0
        %v1095 = vadd.f32 %v821, %v1094
        %1096 = vmatprep.mubr.bf16.mxu0 %v765
        %1097 = vmatmul.mubr.bf16.gmra.mxu0 %v764
        %v1098 = vpop.f32.mrf.mxu0
        %v1099 = vadd.f32 %v817, %v1098
        %v1100 = vpop.f32.mrf.mxu0
        %v1101 = vadd.f32 %v821, %v1100
        %v1102 = vpop.f32.mrf.mxu0
        %v1103 = vadd.f32 %v817, %v1102
        %v1104 = vpop.f32.mrf.mxu0
        %v1105 = vadd.f32 %v821, %v1104
        %1106 = vmatprep.mubr.bf16.mxu0 %v767
        %1107 = vmatmul.mubr.bf16.gmra.mxu0 %v766
        %v1108 = vpop.f32.mrf.mxu0
        %v1109 = vadd.f32 %v817, %v1108
        %v1110 = vpop.f32.mrf.mxu0
        %v1111 = vadd.f32 %v821, %v1110
        %v1112 = vpop.f32.mrf.mxu0
        %v1113 = vadd.f32 %v817, %v1112
        %v1114 = vpop.f32.mrf.mxu0
        %v1115 = vadd.f32 %v821, %v1114
        %1116 = vmatprep.mubr.bf16.mxu0 %v769
        %1117 = vmatmul.mubr.bf16.gmra.mxu0 %v768
        %v1118 = vpop.f32.mrf.mxu0
        %v1119 = vadd.f32 %v817, %v1118
        %v1120 = vpop.f32.mrf.mxu0
        %v1121 = vadd.f32 %v821, %v1120
        %v1122 = vpop.f32.mrf.mxu0
        %v1123 = vadd.f32 %v817, %v1122
        %v1124 = vpop.f32.mrf.mxu0
        %v1125 = vadd.f32 %v821, %v1124
        %1126 = vmatprep.mubr.bf16.mxu0 %v771
        %1127 = vmatmul.mubr.bf16.gmra.mxu0 %v770
        %v1128 = vpop.f32.mrf.mxu0
        %v1129 = vadd.f32 %v817, %v1128
        %v1130 = vpop.f32.mrf.mxu0
        %v1131 = vadd.f32 %v821, %v1130
        %v1132 = vpop.f32.mrf.mxu0
        %v1133 = vadd.f32 %v817, %v1132
        %v1134 = vpop.f32.mrf.mxu0
        %v1135 = vadd.f32 %v821, %v1134
        %1136 = vmatprep.mubr.bf16.mxu0 %v773
        %1137 = vmatmul.mubr.bf16.gmra.mxu0 %v772
        %v1138 = vpop.f32.mrf.mxu0
        %v1139 = vadd.f32 %v817, %v1138
        %v1140 = vpop.f32.mrf.mxu0
        %v1141 = vadd.f32 %v821, %v1140
        %v1142 = vpop.f32.mrf.mxu0
        %v1143 = vadd.f32 %v817, %v1142
        %v1144 = vpop.f32.mrf.mxu0
        %v1145 = vadd.f32 %v821, %v1144
        %1146 = vmatprep.mubr.bf16.mxu0 %v775
        %1147 = vmatmul.mubr.bf16.gmra.mxu0 %v774
        %v1148 = vpop.f32.mrf.mxu0
        %v1149 = vadd.f32 %v817, %v1148
        %v1150 = vpop.f32.mrf.mxu0
        %v1151 = vadd.f32 %v821, %v1150
        %v1152 = vpop.f32.mrf.mxu0
        %v1153 = vadd.f32 %v817, %v1152
        %v1154 = vpop.f32.mrf.mxu0
        %v1155 = vadd.f32 %v821, %v1154
        %1156 = vmatprep.mubr.bf16.mxu0 %v777
        %1157 = vmatmul.mubr.bf16.gmra.mxu0 %v776
        %v1158 = vpop.f32.mrf.mxu0
        %v1159 = vadd.f32 %v817, %v1158
        %v1160 = vpop.f32.mrf.mxu0
        %v1161 = vadd.f32 %v821, %v1160
        %v1162 = vpop.f32.mrf.mxu0
        %v1163 = vadd.f32 %v817, %v1162
        %v1164 = vpop.f32.mrf.mxu0
        %v1165 = vadd.f32 %v821, %v1164
        %1166 = vmatprep.mubr.bf16.mxu0 %v779
        %1167 = vmatmul.mubr.bf16.gmra.mxu0 %v778
        %v1168 = vpop.f32.mrf.mxu0
        %v1169 = vadd.f32 %v817, %v1168
        %v1170 = vpop.f32.mrf.mxu0
        %v1171 = vadd.f32 %v821, %v1170
        %v1172 = vpop.f32.mrf.mxu0
        %v1173 = vadd.f32 %v817, %v1172
        %v1174 = vpop.f32.mrf.mxu0
        %v1175 = vadd.f32 %v821, %v1174
        %1176 = vdwg.mxu0
        %v1177 = vmax.f32 %v1019, 0.0
        %v1178 = vmax.f32 %v1021, 0.0
        %v1179 = vmax.f32 %v1023, 0.0
        %v1180 = vmax.f32 %v1025, 0.0
        %v1181 = vmax.f32 %v1029, 0.0
        %v1182 = vmax.f32 %v1031, 0.0
        %v1183 = vmax.f32 %v1033, 0.0
        %v1184 = vmax.f32 %v1035, 0.0
        %v1185 = vmax.f32 %v1039, 0.0
        %v1186 = vmax.f32 %v1041, 0.0
        %v1187 = vmax.f32 %v1043, 0.0
        %v1188 = vmax.f32 %v1045, 0.0
        %v1189 = vmax.f32 %v1049, 0.0
        %v1190 = vmax.f32 %v1051, 0.0
        %v1191 = vmax.f32 %v1053, 0.0
        %v1192 = vmax.f32 %v1055, 0.0
        %v1193 = vmax.f32 %v1059, 0.0
        %v1194 = vmax.f32 %v1061, 0.0
        %v1195 = vmax.f32 %v1063, 0.0
        %v1196 = vmax.f32 %v1065, 0.0
        %v1197 = vmax.f32 %v1069, 0.0
        %v1198 = vmax.f32 %v1071, 0.0
        %v1199 = vmax.f32 %v1073, 0.0
        %v1200 = vmax.f32 %v1075, 0.0
        %v1201 = vmax.f32 %v1079, 0.0
        %v1202 = vmax.f32 %v1081, 0.0
        %v1203 = vmax.f32 %v1083, 0.0
        %v1204 = vmax.f32 %v1085, 0.0
        %v1205 = vmax.f32 %v1089, 0.0
        %v1206 = vmax.f32 %v1091, 0.0
        %v1207 = vmax.f32 %v1093, 0.0
        %v1208 = vmax.f32 %v1095, 0.0
        %v1209 = vmax.f32 %v1099, 0.0
        %v1210 = vmax.f32 %v1101, 0.0
        %v1211 = vmax.f32 %v1103, 0.0
        %v1212 = vmax.f32 %v1105, 0.0
        %v1213 = vmax.f32 %v1109, 0.0
        %v1214 = vmax.f32 %v1111, 0.0
        %v1215 = vmax.f32 %v1113, 0.0
        %v1216 = vmax.f32 %v1115, 0.0
        %v1217 = vmax.f32 %v1119, 0.0
        %v1218 = vmax.f32 %v1121, 0.0
        %v1219 = vmax.f32 %v1123, 0.0
        %v1220 = vmax.f32 %v1125, 0.0
        %v1221 = vmax.f32 %v1129, 0.0
        %v1222 = vmax.f32 %v1131, 0.0
        %v1223 = vmax.f32 %v1133, 0.0
        %v1224 = vmax.f32 %v1135, 0.0
        %v1225 = vmax.f32 %v1139, 0.0
        %v1226 = vmax.f32 %v1141, 0.0
        %v1227 = vmax.f32 %v1143, 0.0
        %v1228 = vmax.f32 %v1145, 0.0
        %v1229 = vmax.f32 %v1149, 0.0
        %v1230 = vmax.f32 %v1151, 0.0
        %v1231 = vmax.f32 %v1153, 0.0
        %v1232 = vmax.f32 %v1155, 0.0
        %v1233 = vmax.f32 %v1159, 0.0
        %v1234 = vmax.f32 %v1161, 0.0
        %v1235 = vmax.f32 %v1163, 0.0
        %v1236 = vmax.f32 %v1165, 0.0
        %v1237 = vmax.f32 %v1169, 0.0
        %v1238 = vmax.f32 %v1171, 0.0
        %v1239 = vmax.f32 %v1173, 0.0
        %v1240 = vmax.f32 %v1175, 0.0
        %v1241 = vpack.c.bf16 %v1179, %v1177
        %v1242 = vpack.c.bf16 %v1180, %v1178
        %v1243 = vpack.c.bf16 %v1183, %v1181
        %v1244 = vpack.c.bf16 %v1184, %v1182
        %v1245 = vpack.c.bf16 %v1187, %v1185
        %v1246 = vpack.c.bf16 %v1188, %v1186
        %v1247 = vpack.c.bf16 %v1191, %v1189
        %v1248 = vpack.c.bf16 %v1192, %v1190
        %v1249 = vpack.c.bf16 %v1195, %v1193
        %v1250 = vpack.c.bf16 %v1196, %v1194
        %v1251 = vpack.c.bf16 %v1199, %v1197
        %v1252 = vpack.c.bf16 %v1200, %v1198
        %v1253 = vpack.c.bf16 %v1203, %v1201
        %v1254 = vpack.c.bf16 %v1204, %v1202
        %v1255 = vpack.c.bf16 %v1207, %v1205
        %v1256 = vpack.c.bf16 %v1208, %v1206
        %v1257 = vpack.c.bf16 %v1211, %v1209
        %v1258 = vpack.c.bf16 %v1212, %v1210
        %v1259 = vpack.c.bf16 %v1215, %v1213
        %v1260 = vpack.c.bf16 %v1216, %v1214
        %v1261 = vpack.c.bf16 %v1219, %v1217
        %v1262 = vpack.c.bf16 %v1220, %v1218
        %v1263 = vpack.c.bf16 %v1223, %v1221
        %v1264 = vpack.c.bf16 %v1224, %v1222
        %v1265 = vpack.c.bf16 %v1227, %v1225
        %v1266 = vpack.c.bf16 %v1228, %v1226
        %v1267 = vpack.c.bf16 %v1231, %v1229
        %v1268 = vpack.c.bf16 %v1232, %v1230
        %v1269 = vpack.c.bf16 %v1235, %v1233
        %v1270 = vpack.c.bf16 %v1236, %v1234
        %v1271 = vpack.c.bf16 %v1239, %v1237
        %v1272 = vpack.c.bf16 %v1240, %v1238
        %s1273 = scalar_lea.vmem [#allocation2], 256
        %v1274 = vld [vmem:[%s1273] sm:$0xff]
        %v1275 = vld [vmem:[%s1273 + $0x8] sm:$0xff]
        %v1276 = vld [vmem:[%s1273 + $0x10] sm:$0xff]
        %v1277 = vld [vmem:[%s1273 + $0x18] sm:$0xff]
        %v1278 = vld [vmem:[%s1273 + $0x20] sm:$0xff]
        %v1279 = vld [vmem:[%s1273 + $0x28] sm:$0xff]
        %v1280 = vld [vmem:[%s1273 + $0x30] sm:$0xff]
        %v1281 = vld [vmem:[%s1273 + $0x38] sm:$0xff]
        %v1282 = vld [vmem:[%s1273 + $0x40] sm:$0xff]
        %v1283 = vld [vmem:[%s1273 + $0x48] sm:$0xff]
        %v1284 = vld [vmem:[%s1273 + $0x50] sm:$0xff]
        %v1285 = vld [vmem:[%s1273 + $0x58] sm:$0xff]
        %v1286 = vld [vmem:[%s1273 + $0x60] sm:$0xff]
        %v1287 = vld [vmem:[%s1273 + $0x68] sm:$0xff]
        %v1288 = vld [vmem:[%s1273 + $0x70] sm:$0xff]
        %v1289 = vld [vmem:[%s1273 + $0x78] sm:$0xff]
        %v1290 = vld [vmem:[%s1273 + $0x80] sm:$0xff]
        %v1291 = vld [vmem:[%s1273 + $0x88] sm:$0xff]
        %v1292 = vld [vmem:[%s1273 + $0x90] sm:$0xff]
        %v1293 = vld [vmem:[%s1273 + $0x98] sm:$0xff]
        %v1294 = vld [vmem:[%s1273 + $0xa0] sm:$0xff]
        %v1295 = vld [vmem:[%s1273 + $0xa8] sm:$0xff]
        %v1296 = vld [vmem:[%s1273 + $0xb0] sm:$0xff]
        %v1297 = vld [vmem:[%s1273 + $0xb8] sm:$0xff]
        %v1298 = vld [vmem:[%s1273 + $0xc0] sm:$0xff]
        %v1299 = vld [vmem:[%s1273 + $0xc8] sm:$0xff]
        %v1300 = vld [vmem:[%s1273 + $0xd0] sm:$0xff]
        %v1301 = vld [vmem:[%s1273 + $0xd8] sm:$0xff]
        %v1302 = vld [vmem:[%s1273 + $0xe0] sm:$0xff]
        %v1303 = vld [vmem:[%s1273 + $0xe8] sm:$0xff]
        %v1304 = vld [vmem:[%s1273 + $0xf0] sm:$0xff]
        %v1305 = vld [vmem:[%s1273 + $0xf8] sm:$0xff]
        %s1306 = scalar_lea.vmem %s4, 2
        %v1307 = vld [vmem:[%s1306] sm:$0x3]
        %v1309 = vlaneseq
        %v1310 = vshrl.u32 %v1309, 7
        %v1311 = vsub.s32 0, %v1310
        %v1312 = vrot.slane %v1307, %v1311
        %v1313 = vlaneseq
        %v1314 = vshrl.u32 %v1313, 7
        %v1315 = vsub.s32 1, %v1314
        %v1316 = vrot.slane %v1307, %v1315
        %v1351 = vunpack.c.l.b16 %v1274
        %v1352 = vunpack.c.h.b16 %v1274
        %v1353 = vunpack.c.l.b16 %v1275
        %v1354 = vunpack.c.h.b16 %v1275
        %v1355 = vunpack.c.l.b16 %v1276
        %v1356 = vunpack.c.h.b16 %v1276
        %v1357 = vunpack.c.l.b16 %v1277
        %v1358 = vunpack.c.h.b16 %v1277
        %v1359 = vunpack.c.l.b16 %v1278
        %v1360 = vunpack.c.h.b16 %v1278
        %v1361 = vunpack.c.l.b16 %v1279
        %v1362 = vunpack.c.h.b16 %v1279
        %v1363 = vunpack.c.l.b16 %v1280
        %v1364 = vunpack.c.h.b16 %v1280
        %v1365 = vunpack.c.l.b16 %v1281
        %v1366 = vunpack.c.h.b16 %v1281
        %v1367 = vunpack.c.l.b16 %v1282
        %v1368 = vunpack.c.h.b16 %v1282
        %v1369 = vunpack.c.l.b16 %v1283
        %v1370 = vunpack.c.h.b16 %v1283
        %v1371 = vunpack.c.l.b16 %v1284
        %v1372 = vunpack.c.h.b16 %v1284
        %v1373 = vunpack.c.l.b16 %v1285
        %v1374 = vunpack.c.h.b16 %v1285
        %v1375 = vunpack.c.l.b16 %v1286
        %v1376 = vunpack.c.h.b16 %v1286
        %v1377 = vunpack.c.l.b16 %v1287
        %v1378 = vunpack.c.h.b16 %v1287
        %v1379 = vunpack.c.l.b16 %v1288
        %v1380 = vunpack.c.h.b16 %v1288
        %v1381 = vunpack.c.l.b16 %v1289
        %v1382 = vunpack.c.h.b16 %v1289
        %v1383 = vunpack.c.l.b16 %v1290
        %v1384 = vunpack.c.h.b16 %v1290
        %v1385 = vunpack.c.l.b16 %v1291
        %v1386 = vunpack.c.h.b16 %v1291
        %v1387 = vunpack.c.l.b16 %v1292
        %v1388 = vunpack.c.h.b16 %v1292
        %v1389 = vunpack.c.l.b16 %v1293
        %v1390 = vunpack.c.h.b16 %v1293
        %v1391 = vunpack.c.l.b16 %v1294
        %v1392 = vunpack.c.h.b16 %v1294
        %v1393 = vunpack.c.l.b16 %v1295
        %v1394 = vunpack.c.h.b16 %v1295
        %v1395 = vunpack.c.l.b16 %v1296
        %v1396 = vunpack.c.h.b16 %v1296
        %v1397 = vunpack.c.l.b16 %v1297
        %v1398 = vunpack.c.h.b16 %v1297
        %v1399 = vunpack.c.l.b16 %v1298
        %v1400 = vunpack.c.h.b16 %v1298
        %v1401 = vunpack.c.l.b16 %v1299
        %v1402 = vunpack.c.h.b16 %v1299
        %v1403 = vunpack.c.l.b16 %v1300
        %v1404 = vunpack.c.h.b16 %v1300
        %v1405 = vunpack.c.l.b16 %v1301
        %v1406 = vunpack.c.h.b16 %v1301
        %v1407 = vunpack.c.l.b16 %v1302
        %v1408 = vunpack.c.h.b16 %v1302
        %v1409 = vunpack.c.l.b16 %v1303
        %v1410 = vunpack.c.h.b16 %v1303
        %v1411 = vunpack.c.l.b16 %v1304
        %v1412 = vunpack.c.h.b16 %v1304
        %v1413 = vunpack.c.l.b16 %v1305
        %v1414 = vunpack.c.h.b16 %v1305
        %v1415 = vpack.c.b16 %v1353, %v1351
        %v1416 = vpack.c.b16 %v1354, %v1352
        %v1417 = vpack.c.b16 %v1357, %v1355
        %v1418 = vpack.c.b16 %v1358, %v1356
        %v1419 = vpack.c.b16 %v1361, %v1359
        %v1420 = vpack.c.b16 %v1362, %v1360
        %v1421 = vpack.c.b16 %v1365, %v1363
        %v1422 = vpack.c.b16 %v1366, %v1364
        %v1423 = vpack.c.b16 %v1369, %v1367
        %v1424 = vpack.c.b16 %v1370, %v1368
        %v1425 = vpack.c.b16 %v1373, %v1371
        %v1426 = vpack.c.b16 %v1374, %v1372
        %v1427 = vpack.c.b16 %v1377, %v1375
        %v1428 = vpack.c.b16 %v1378, %v1376
        %v1429 = vpack.c.b16 %v1381, %v1379
        %v1430 = vpack.c.b16 %v1382, %v1380
        %v1431 = vpack.c.b16 %v1385, %v1383
        %v1432 = vpack.c.b16 %v1386, %v1384
        %v1433 = vpack.c.b16 %v1389, %v1387
        %v1434 = vpack.c.b16 %v1390, %v1388
        %v1435 = vpack.c.b16 %v1393, %v1391
        %v1436 = vpack.c.b16 %v1394, %v1392
        %v1437 = vpack.c.b16 %v1397, %v1395
        %v1438 = vpack.c.b16 %v1398, %v1396
        %v1439 = vpack.c.b16 %v1401, %v1399
        %v1440 = vpack.c.b16 %v1402, %v1400
        %v1441 = vpack.c.b16 %v1405, %v1403
        %v1442 = vpack.c.b16 %v1406, %v1404
        %v1443 = vpack.c.b16 %v1409, %v1407
        %v1444 = vpack.c.b16 %v1410, %v1408
        %v1445 = vpack.c.b16 %v1413, %v1411
        %v1446 = vpack.c.b16 %v1414, %v1412
        %1479 = vmatprep.subr.bf16.mxu0 %v1430
        %1480 = vmatpush1.bf16.msra.mxu0 %v1429
        %1481 = vmatprep.subr.bf16.mxu0 %v1428
        %1482 = vmatpush1.bf16.msra.mxu0 %v1427
        %1483 = vmatprep.subr.bf16.mxu0 %v1426
        %1484 = vmatpush1.bf16.msra.mxu0 %v1425
        %1485 = vmatprep.subr.bf16.mxu0 %v1424
        %1486 = vmatpush1.bf16.msra.mxu0 %v1423
        %1487 = vmatprep.subr.bf16.mxu0 %v1422
        %1488 = vmatpush1.bf16.msra.mxu0 %v1421
        %1489 = vmatprep.subr.bf16.mxu0 %v1420
        %1490 = vmatpush1.bf16.msra.mxu0 %v1419
        %1491 = vmatprep.subr.bf16.mxu0 %v1418
        %1492 = vmatpush1.bf16.msra.mxu0 %v1417
        %1493 = vmatprep.subr.bf16.mxu0 %v1416
        %1494 = vmatpush1.bf16.msra.mxu0 %v1415
        %1495 = vmatprep.subr.bf16.mxu0 %v1446
        %1496 = vmatpush2.bf16.msra.mxu0 %v1445
        %1497 = vmatprep.subr.bf16.mxu0 %v1444
        %1498 = vmatpush2.bf16.msra.mxu0 %v1443
        %1499 = vmatprep.subr.bf16.mxu0 %v1442
        %1500 = vmatpush2.bf16.msra.mxu0 %v1441
        %1501 = vmatprep.subr.bf16.mxu0 %v1440
        %1502 = vmatpush2.bf16.msra.mxu0 %v1439
        %1503 = vmatprep.subr.bf16.mxu0 %v1438
        %1504 = vmatpush2.bf16.msra.mxu0 %v1437
        %1505 = vmatprep.subr.bf16.mxu0 %v1436
        %1506 = vmatpush2.bf16.msra.mxu0 %v1435
        %1507 = vmatprep.subr.bf16.mxu0 %v1434
        %1508 = vmatpush2.bf16.msra.mxu0 %v1433
        %1509 = vmatprep.subr.bf16.mxu0 %v1432
        %1510 = vmatpush2.bf16.msra.mxu0 %v1431
        %1511 = vmatprep.mubr.bf16.mxu0 %v1242
        %1512 = vmatmul.mubr.bf16.gmra.mxu0 %v1241
        %v1513 = vpop.f32.mrf.mxu0
        %v1514 = vadd.f32 %v1312, %v1513
        %v1515 = vpop.f32.mrf.mxu0
        %v1516 = vadd.f32 %v1316, %v1515
        %v1517 = vpop.f32.mrf.mxu0
        %v1518 = vadd.f32 %v1312, %v1517
        %v1519 = vpop.f32.mrf.mxu0
        %v1520 = vadd.f32 %v1316, %v1519
        %1521 = vmatprep.mubr.bf16.mxu0 %v1244
        %1522 = vmatmul.mubr.bf16.gmra.mxu0 %v1243
        %v1523 = vpop.f32.mrf.mxu0
        %v1524 = vadd.f32 %v1312, %v1523
        %v1525 = vpop.f32.mrf.mxu0
        %v1526 = vadd.f32 %v1316, %v1525
        %v1527 = vpop.f32.mrf.mxu0
        %v1528 = vadd.f32 %v1312, %v1527
        %v1529 = vpop.f32.mrf.mxu0
        %v1530 = vadd.f32 %v1316, %v1529
        %1531 = vmatprep.mubr.bf16.mxu0 %v1246
        %1532 = vmatmul.mubr.bf16.gmra.mxu0 %v1245
        %v1533 = vpop.f32.mrf.mxu0
        %v1534 = vadd.f32 %v1312, %v1533
        %v1535 = vpop.f32.mrf.mxu0
        %v1536 = vadd.f32 %v1316, %v1535
        %v1537 = vpop.f32.mrf.mxu0
        %v1538 = vadd.f32 %v1312, %v1537
        %v1539 = vpop.f32.mrf.mxu0
        %v1540 = vadd.f32 %v1316, %v1539
        %1541 = vmatprep.mubr.bf16.mxu0 %v1248
        %1542 = vmatmul.mubr.bf16.gmra.mxu0 %v1247
        %v1543 = vpop.f32.mrf.mxu0
        %v1544 = vadd.f32 %v1312, %v1543
        %v1545 = vpop.f32.mrf.mxu0
        %v1546 = vadd.f32 %v1316, %v1545
        %v1547 = vpop.f32.mrf.mxu0
        %v1548 = vadd.f32 %v1312, %v1547
        %v1549 = vpop.f32.mrf.mxu0
        %v1550 = vadd.f32 %v1316, %v1549
        %1551 = vmatprep.mubr.bf16.mxu0 %v1250
        %1552 = vmatmul.mubr.bf16.gmra.mxu0 %v1249
        %v1553 = vpop.f32.mrf.mxu0
        %v1554 = vadd.f32 %v1312, %v1553
        %v1555 = vpop.f32.mrf.mxu0
        %v1556 = vadd.f32 %v1316, %v1555
        %v1557 = vpop.f32.mrf.mxu0
        %v1558 = vadd.f32 %v1312, %v1557
        %v1559 = vpop.f32.mrf.mxu0
        %v1560 = vadd.f32 %v1316, %v1559
        %1561 = vmatprep.mubr.bf16.mxu0 %v1252
        %1562 = vmatmul.mubr.bf16.gmra.mxu0 %v1251
        %v1563 = vpop.f32.mrf.mxu0
        %v1564 = vadd.f32 %v1312, %v1563
        %v1565 = vpop.f32.mrf.mxu0
        %v1566 = vadd.f32 %v1316, %v1565
        %v1567 = vpop.f32.mrf.mxu0
        %v1568 = vadd.f32 %v1312, %v1567
        %v1569 = vpop.f32.mrf.mxu0
        %v1570 = vadd.f32 %v1316, %v1569
        %1571 = vmatprep.mubr.bf16.mxu0 %v1254
        %1572 = vmatmul.mubr.bf16.gmra.mxu0 %v1253
        %v1573 = vpop.f32.mrf.mxu0
        %v1574 = vadd.f32 %v1312, %v1573
        %v1575 = vpop.f32.mrf.mxu0
        %v1576 = vadd.f32 %v1316, %v1575
        %v1577 = vpop.f32.mrf.mxu0
        %v1578 = vadd.f32 %v1312, %v1577
        %v1579 = vpop.f32.mrf.mxu0
        %v1580 = vadd.f32 %v1316, %v1579
        %1581 = vmatprep.mubr.bf16.mxu0 %v1256
        %1582 = vmatmul.mubr.bf16.gmra.mxu0 %v1255
        %v1583 = vpop.f32.mrf.mxu0
        %v1584 = vadd.f32 %v1312, %v1583
        %v1585 = vpop.f32.mrf.mxu0
        %v1586 = vadd.f32 %v1316, %v1585
        %v1587 = vpop.f32.mrf.mxu0
        %v1588 = vadd.f32 %v1312, %v1587
        %v1589 = vpop.f32.mrf.mxu0
        %v1590 = vadd.f32 %v1316, %v1589
        %1591 = vmatprep.mubr.bf16.mxu0 %v1258
        %1592 = vmatmul.mubr.bf16.gmra.mxu0 %v1257
        %v1593 = vpop.f32.mrf.mxu0
        %v1594 = vadd.f32 %v1312, %v1593
        %v1595 = vpop.f32.mrf.mxu0
        %v1596 = vadd.f32 %v1316, %v1595
        %v1597 = vpop.f32.mrf.mxu0
        %v1598 = vadd.f32 %v1312, %v1597
        %v1599 = vpop.f32.mrf.mxu0
        %v1600 = vadd.f32 %v1316, %v1599
        %1601 = vmatprep.mubr.bf16.mxu0 %v1260
        %1602 = vmatmul.mubr.bf16.gmra.mxu0 %v1259
        %v1603 = vpop.f32.mrf.mxu0
        %v1604 = vadd.f32 %v1312, %v1603
        %v1605 = vpop.f32.mrf.mxu0
        %v1606 = vadd.f32 %v1316, %v1605
        %v1607 = vpop.f32.mrf.mxu0
        %v1608 = vadd.f32 %v1312, %v1607
        %v1609 = vpop.f32.mrf.mxu0
        %v1610 = vadd.f32 %v1316, %v1609
        %1611 = vmatprep.mubr.bf16.mxu0 %v1262
        %1612 = vmatmul.mubr.bf16.gmra.mxu0 %v1261
        %v1613 = vpop.f32.mrf.mxu0
        %v1614 = vadd.f32 %v1312, %v1613
        %v1615 = vpop.f32.mrf.mxu0
        %v1616 = vadd.f32 %v1316, %v1615
        %v1617 = vpop.f32.mrf.mxu0
        %v1618 = vadd.f32 %v1312, %v1617
        %v1619 = vpop.f32.mrf.mxu0
        %v1620 = vadd.f32 %v1316, %v1619
        %1621 = vmatprep.mubr.bf16.mxu0 %v1264
        %1622 = vmatmul.mubr.bf16.gmra.mxu0 %v1263
        %v1623 = vpop.f32.mrf.mxu0
        %v1624 = vadd.f32 %v1312, %v1623
        %v1625 = vpop.f32.mrf.mxu0
        %v1626 = vadd.f32 %v1316, %v1625
        %v1627 = vpop.f32.mrf.mxu0
        %v1628 = vadd.f32 %v1312, %v1627
        %v1629 = vpop.f32.mrf.mxu0
        %v1630 = vadd.f32 %v1316, %v1629
        %1631 = vmatprep.mubr.bf16.mxu0 %v1266
        %1632 = vmatmul.mubr.bf16.gmra.mxu0 %v1265
        %v1633 = vpop.f32.mrf.mxu0
        %v1634 = vadd.f32 %v1312, %v1633
        %v1635 = vpop.f32.mrf.mxu0
        %v1636 = vadd.f32 %v1316, %v1635
        %v1637 = vpop.f32.mrf.mxu0
        %v1638 = vadd.f32 %v1312, %v1637
        %v1639 = vpop.f32.mrf.mxu0
        %v1640 = vadd.f32 %v1316, %v1639
        %1641 = vmatprep.mubr.bf16.mxu0 %v1268
        %1642 = vmatmul.mubr.bf16.gmra.mxu0 %v1267
        %v1643 = vpop.f32.mrf.mxu0
        %v1644 = vadd.f32 %v1312, %v1643
        %v1645 = vpop.f32.mrf.mxu0
        %v1646 = vadd.f32 %v1316, %v1645
        %v1647 = vpop.f32.mrf.mxu0
        %v1648 = vadd.f32 %v1312, %v1647
        %v1649 = vpop.f32.mrf.mxu0
        %v1650 = vadd.f32 %v1316, %v1649
        %1651 = vmatprep.mubr.bf16.mxu0 %v1270
        %1652 = vmatmul.mubr.bf16.gmra.mxu0 %v1269
        %v1653 = vpop.f32.mrf.mxu0
        %v1654 = vadd.f32 %v1312, %v1653
        %v1655 = vpop.f32.mrf.mxu0
        %v1656 = vadd.f32 %v1316, %v1655
        %v1657 = vpop.f32.mrf.mxu0
        %v1658 = vadd.f32 %v1312, %v1657
        %v1659 = vpop.f32.mrf.mxu0
        %v1660 = vadd.f32 %v1316, %v1659
        %1661 = vmatprep.mubr.bf16.mxu0 %v1272
        %1662 = vmatmul.mubr.bf16.gmra.mxu0 %v1271
        %v1663 = vpop.f32.mrf.mxu0
        %v1664 = vadd.f32 %v1312, %v1663
        %v1665 = vpop.f32.mrf.mxu0
        %v1666 = vadd.f32 %v1316, %v1665
        %v1667 = vpop.f32.mrf.mxu0
        %v1668 = vadd.f32 %v1312, %v1667
        %v1669 = vpop.f32.mrf.mxu0
        %v1670 = vadd.f32 %v1316, %v1669
        %1671 = vdwg.mxu0
        %v1672 = vmax.f32 %v1514, 0.0
        %v1673 = vmax.f32 %v1516, 0.0
        %v1674 = vmax.f32 %v1518, 0.0
        %v1675 = vmax.f32 %v1520, 0.0
        %v1676 = vmax.f32 %v1524, 0.0
        %v1677 = vmax.f32 %v1526, 0.0
        %v1678 = vmax.f32 %v1528, 0.0
        %v1679 = vmax.f32 %v1530, 0.0
        %v1680 = vmax.f32 %v1534, 0.0
        %v1681 = vmax.f32 %v1536, 0.0
        %v1682 = vmax.f32 %v1538, 0.0
        %v1683 = vmax.f32 %v1540, 0.0
        %v1684 = vmax.f32 %v1544, 0.0
        %v1685 = vmax.f32 %v1546, 0.0
        %v1686 = vmax.f32 %v1548, 0.0
        %v1687 = vmax.f32 %v1550, 0.0
        %v1688 = vmax.f32 %v1554, 0.0
        %v1689 = vmax.f32 %v1556, 0.0
        %v1690 = vmax.f32 %v1558, 0.0
        %v1691 = vmax.f32 %v1560, 0.0
        %v1692 = vmax.f32 %v1564, 0.0
        %v1693 = vmax.f32 %v1566, 0.0
        %v1694 = vmax.f32 %v1568, 0.0
        %v1695 = vmax.f32 %v1570, 0.0
        %v1696 = vmax.f32 %v1574, 0.0
        %v1697 = vmax.f32 %v1576, 0.0
        %v1698 = vmax.f32 %v1578, 0.0
        %v1699 = vmax.f32 %v1580, 0.0
        %v1700 = vmax.f32 %v1584, 0.0
        %v1701 = vmax.f32 %v1586, 0.0
        %v1702 = vmax.f32 %v1588, 0.0
        %v1703 = vmax.f32 %v1590, 0.0
        %v1704 = vmax.f32 %v1594, 0.0
        %v1705 = vmax.f32 %v1596, 0.0
        %v1706 = vmax.f32 %v1598, 0.0
        %v1707 = vmax.f32 %v1600, 0.0
        %v1708 = vmax.f32 %v1604, 0.0
        %v1709 = vmax.f32 %v1606, 0.0
        %v1710 = vmax.f32 %v1608, 0.0
        %v1711 = vmax.f32 %v1610, 0.0
        %v1712 = vmax.f32 %v1614, 0.0
        %v1713 = vmax.f32 %v1616, 0.0
        %v1714 = vmax.f32 %v1618, 0.0
        %v1715 = vmax.f32 %v1620, 0.0
        %v1716 = vmax.f32 %v1624, 0.0
        %v1717 = vmax.f32 %v1626, 0.0
        %v1718 = vmax.f32 %v1628, 0.0
        %v1719 = vmax.f32 %v1630, 0.0
        %v1720 = vmax.f32 %v1634, 0.0
        %v1721 = vmax.f32 %v1636, 0.0
        %v1722 = vmax.f32 %v1638, 0.0
        %v1723 = vmax.f32 %v1640, 0.0
        %v1724 = vmax.f32 %v1644, 0.0
        %v1725 = vmax.f32 %v1646, 0.0
        %v1726 = vmax.f32 %v1648, 0.0
        %v1727 = vmax.f32 %v1650, 0.0
        %v1728 = vmax.f32 %v1654, 0.0
        %v1729 = vmax.f32 %v1656, 0.0
        %v1730 = vmax.f32 %v1658, 0.0
        %v1731 = vmax.f32 %v1660, 0.0
        %v1732 = vmax.f32 %v1664, 0.0
        %v1733 = vmax.f32 %v1666, 0.0
        %v1734 = vmax.f32 %v1668, 0.0
        %v1735 = vmax.f32 %v1670, 0.0
        %v1736 = vpack.c.bf16 %v1674, %v1672
        %v1737 = vpack.c.bf16 %v1675, %v1673
        %v1738 = vpack.c.bf16 %v1678, %v1676
        %v1739 = vpack.c.bf16 %v1679, %v1677
        %v1740 = vpack.c.bf16 %v1682, %v1680
        %v1741 = vpack.c.bf16 %v1683, %v1681
        %v1742 = vpack.c.bf16 %v1686, %v1684
        %v1743 = vpack.c.bf16 %v1687, %v1685
        %v1744 = vpack.c.bf16 %v1690, %v1688
        %v1745 = vpack.c.bf16 %v1691, %v1689
        %v1746 = vpack.c.bf16 %v1694, %v1692
        %v1747 = vpack.c.bf16 %v1695, %v1693
        %v1748 = vpack.c.bf16 %v1698, %v1696
        %v1749 = vpack.c.bf16 %v1699, %v1697
        %v1750 = vpack.c.bf16 %v1702, %v1700
        %v1751 = vpack.c.bf16 %v1703, %v1701
        %v1752 = vpack.c.bf16 %v1706, %v1704
        %v1753 = vpack.c.bf16 %v1707, %v1705
        %v1754 = vpack.c.bf16 %v1710, %v1708
        %v1755 = vpack.c.bf16 %v1711, %v1709
        %v1756 = vpack.c.bf16 %v1714, %v1712
        %v1757 = vpack.c.bf16 %v1715, %v1713
        %v1758 = vpack.c.bf16 %v1718, %v1716
        %v1759 = vpack.c.bf16 %v1719, %v1717
        %v1760 = vpack.c.bf16 %v1722, %v1720
        %v1761 = vpack.c.bf16 %v1723, %v1721
        %v1762 = vpack.c.bf16 %v1726, %v1724
        %v1763 = vpack.c.bf16 %v1727, %v1725
        %v1764 = vpack.c.bf16 %v1730, %v1728
        %v1765 = vpack.c.bf16 %v1731, %v1729
        %v1766 = vpack.c.bf16 %v1734, %v1732
        %v1767 = vpack.c.bf16 %v1735, %v1733
        %s1768 = scalar_lea.vmem [#allocation2], 512
        %v1769 = vld [vmem:[%s1768] sm:$0xff]
        %v1770 = vld [vmem:[%s1768 + $0x8] sm:$0xff]
        %v1771 = vld [vmem:[%s1768 + $0x10] sm:$0xff]
        %v1772 = vld [vmem:[%s1768 + $0x18] sm:$0xff]
        %v1773 = vld [vmem:[%s1768 + $0x20] sm:$0xff]
        %v1774 = vld [vmem:[%s1768 + $0x28] sm:$0xff]
        %v1775 = vld [vmem:[%s1768 + $0x30] sm:$0xff]
        %v1776 = vld [vmem:[%s1768 + $0x38] sm:$0xff]
        %v1777 = vld [vmem:[%s1768 + $0x40] sm:$0xff]
        %v1778 = vld [vmem:[%s1768 + $0x48] sm:$0xff]
        %v1779 = vld [vmem:[%s1768 + $0x50] sm:$0xff]
        %v1780 = vld [vmem:[%s1768 + $0x58] sm:$0xff]
        %v1781 = vld [vmem:[%s1768 + $0x60] sm:$0xff]
        %v1782 = vld [vmem:[%s1768 + $0x68] sm:$0xff]
        %v1783 = vld [vmem:[%s1768 + $0x70] sm:$0xff]
        %v1784 = vld [vmem:[%s1768 + $0x78] sm:$0xff]
        %v1785 = vld [vmem:[%s1768 + $0x80] sm:$0xff]
        %v1786 = vld [vmem:[%s1768 + $0x88] sm:$0xff]
        %v1787 = vld [vmem:[%s1768 + $0x90] sm:$0xff]
        %v1788 = vld [vmem:[%s1768 + $0x98] sm:$0xff]
        %v1789 = vld [vmem:[%s1768 + $0xa0] sm:$0xff]
        %v1790 = vld [vmem:[%s1768 + $0xa8] sm:$0xff]
        %v1791 = vld [vmem:[%s1768 + $0xb0] sm:$0xff]
        %v1792 = vld [vmem:[%s1768 + $0xb8] sm:$0xff]
        %v1793 = vld [vmem:[%s1768 + $0xc0] sm:$0xff]
        %v1794 = vld [vmem:[%s1768 + $0xc8] sm:$0xff]
        %v1795 = vld [vmem:[%s1768 + $0xd0] sm:$0xff]
        %v1796 = vld [vmem:[%s1768 + $0xd8] sm:$0xff]
        %v1797 = vld [vmem:[%s1768 + $0xe0] sm:$0xff]
        %v1798 = vld [vmem:[%s1768 + $0xe8] sm:$0xff]
        %v1799 = vld [vmem:[%s1768 + $0xf0] sm:$0xff]
        %v1800 = vld [vmem:[%s1768 + $0xf8] sm:$0xff]
        %s1801 = scalar_lea.vmem %s4, 4
        %v1802 = vld [vmem:[%s1801] sm:$0x3]
        %v1804 = vlaneseq
        %v1805 = vshrl.u32 %v1804, 7
        %v1806 = vsub.s32 0, %v1805
        %v1807 = vrot.slane %v1802, %v1806
        %v1808 = vlaneseq
        %v1809 = vshrl.u32 %v1808, 7
        %v1810 = vsub.s32 1, %v1809
        %v1811 = vrot.slane %v1802, %v1810
        %v1846 = vunpack.c.l.b16 %v1769
        %v1847 = vunpack.c.h.b16 %v1769
        %v1848 = vunpack.c.l.b16 %v1770
        %v1849 = vunpack.c.h.b16 %v1770
        %v1850 = vunpack.c.l.b16 %v1771
        %v1851 = vunpack.c.h.b16 %v1771
        %v1852 = vunpack.c.l.b16 %v1772
        %v1853 = vunpack.c.h.b16 %v1772
        %v1854 = vunpack.c.l.b16 %v1773
        %v1855 = vunpack.c.h.b16 %v1773
        %v1856 = vunpack.c.l.b16 %v1774
        %v1857 = vunpack.c.h.b16 %v1774
        %v1858 = vunpack.c.l.b16 %v1775
        %v1859 = vunpack.c.h.b16 %v1775
        %v1860 = vunpack.c.l.b16 %v1776
        %v1861 = vunpack.c.h.b16 %v1776
        %v1862 = vunpack.c.l.b16 %v1777
        %v1863 = vunpack.c.h.b16 %v1777
        %v1864 = vunpack.c.l.b16 %v1778
        %v1865 = vunpack.c.h.b16 %v1778
        %v1866 = vunpack.c.l.b16 %v1779
        %v1867 = vunpack.c.h.b16 %v1779
        %v1868 = vunpack.c.l.b16 %v1780
        %v1869 = vunpack.c.h.b16 %v1780
        %v1870 = vunpack.c.l.b16 %v1781
        %v1871 = vunpack.c.h.b16 %v1781
        %v1872 = vunpack.c.l.b16 %v1782
        %v1873 = vunpack.c.h.b16 %v1782
        %v1874 = vunpack.c.l.b16 %v1783
        %v1875 = vunpack.c.h.b16 %v1783
        %v1876 = vunpack.c.l.b16 %v1784
        %v1877 = vunpack.c.h.b16 %v1784
        %v1878 = vunpack.c.l.b16 %v1785
        %v1879 = vunpack.c.h.b16 %v1785
        %v1880 = vunpack.c.l.b16 %v1786
        %v1881 = vunpack.c.h.b16 %v1786
        %v1882 = vunpack.c.l.b16 %v1787
        %v1883 = vunpack.c.h.b16 %v1787
        %v1884 = vunpack.c.l.b16 %v1788
        %v1885 = vunpack.c.h.b16 %v1788
        %v1886 = vunpack.c.l.b16 %v1789
        %v1887 = vunpack.c.h.b16 %v1789
        %v1888 = vunpack.c.l.b16 %v1790
        %v1889 = vunpack.c.h.b16 %v1790
        %v1890 = vunpack.c.l.b16 %v1791
        %v1891 = vunpack.c.h.b16 %v1791
        %v1892 = vunpack.c.l.b16 %v1792
        %v1893 = vunpack.c.h.b16 %v1792
        %v1894 = vunpack.c.l.b16 %v1793
        %v1895 = vunpack.c.h.b16 %v1793
        %v1896 = vunpack.c.l.b16 %v1794
        %v1897 = vunpack.c.h.b16 %v1794
        %v1898 = vunpack.c.l.b16 %v1795
        %v1899 = vunpack.c.h.b16 %v1795
        %v1900 = vunpack.c.l.b16 %v1796
        %v1901 = vunpack.c.h.b16 %v1796
        %v1902 = vunpack.c.l.b16 %v1797
        %v1903 = vunpack.c.h.b16 %v1797
        %v1904 = vunpack.c.l.b16 %v1798
        %v1905 = vunpack.c.h.b16 %v1798
        %v1906 = vunpack.c.l.b16 %v1799
        %v1907 = vunpack.c.h.b16 %v1799
        %v1908 = vunpack.c.l.b16 %v1800
        %v1909 = vunpack.c.h.b16 %v1800
        %v1910 = vpack.c.b16 %v1848, %v1846
        %v1911 = vpack.c.b16 %v1849, %v1847
        %v1912 = vpack.c.b16 %v1852, %v1850
        %v1913 = vpack.c.b16 %v1853, %v1851
        %v1914 = vpack.c.b16 %v1856, %v1854
        %v1915 = vpack.c.b16 %v1857, %v1855
        %v1916 = vpack.c.b16 %v1860, %v1858
        %v1917 = vpack.c.b16 %v1861, %v1859
        %v1918 = vpack.c.b16 %v1864, %v1862
        %v1919 = vpack.c.b16 %v1865, %v1863
        %v1920 = vpack.c.b16 %v1868, %v1866
        %v1921 = vpack.c.b16 %v1869, %v1867
        %v1922 = vpack.c.b16 %v1872, %v1870
        %v1923 = vpack.c.b16 %v1873, %v1871
        %v1924 = vpack.c.b16 %v1876, %v1874
        %v1925 = vpack.c.b16 %v1877, %v1875
        %v1926 = vpack.c.b16 %v1880, %v1878
        %v1927 = vpack.c.b16 %v1881, %v1879
        %v1928 = vpack.c.b16 %v1884, %v1882
        %v1929 = vpack.c.b16 %v1885, %v1883
        %v1930 = vpack.c.b16 %v1888, %v1886
        %v1931 = vpack.c.b16 %v1889, %v1887
        %v1932 = vpack.c.b16 %v1892, %v1890
        %v1933 = vpack.c.b16 %v1893, %v1891
        %v1934 = vpack.c.b16 %v1896, %v1894
        %v1935 = vpack.c.b16 %v1897, %v1895
        %v1936 = vpack.c.b16 %v1900, %v1898
        %v1937 = vpack.c.b16 %v1901, %v1899
        %v1938 = vpack.c.b16 %v1904, %v1902
        %v1939 = vpack.c.b16 %v1905, %v1903
        %v1940 = vpack.c.b16 %v1908, %v1906
        %v1941 = vpack.c.b16 %v1909, %v1907
        %1974 = vmatprep.subr.bf16.mxu0 %v1925
        %1975 = vmatpush1.bf16.msra.mxu0 %v1924
        %1976 = vmatprep.subr.bf16.mxu0 %v1923
        %1977 = vmatpush1.bf16.msra.mxu0 %v1922
        %1978 = vmatprep.subr.bf16.mxu0 %v1921
        %1979 = vmatpush1.bf16.msra.mxu0 %v1920
        %1980 = vmatprep.subr.bf16.mxu0 %v1919
        %1981 = vmatpush1.bf16.msra.mxu0 %v1918
        %1982 = vmatprep.subr.bf16.mxu0 %v1917
        %1983 = vmatpush1.bf16.msra.mxu0 %v1916
        %1984 = vmatprep.subr.bf16.mxu0 %v1915
        %1985 = vmatpush1.bf16.msra.mxu0 %v1914
        %1986 = vmatprep.subr.bf16.mxu0 %v1913
        %1987 = vmatpush1.bf16.msra.mxu0 %v1912
        %1988 = vmatprep.subr.bf16.mxu0 %v1911
        %1989 = vmatpush1.bf16.msra.mxu0 %v1910
        %1990 = vmatprep.subr.bf16.mxu0 %v1941
        %1991 = vmatpush2.bf16.msra.mxu0 %v1940
        %1992 = vmatprep.subr.bf16.mxu0 %v1939
        %1993 = vmatpush2.bf16.msra.mxu0 %v1938
        %1994 = vmatprep.subr.bf16.mxu0 %v1937
        %1995 = vmatpush2.bf16.msra.mxu0 %v1936
        %1996 = vmatprep.subr.bf16.mxu0 %v1935
        %1997 = vmatpush2.bf16.msra.mxu0 %v1934
        %1998 = vmatprep.subr.bf16.mxu0 %v1933
        %1999 = vmatpush2.bf16.msra.mxu0 %v1932
        %2000 = vmatprep.subr.bf16.mxu0 %v1931
        %2001 = vmatpush2.bf16.msra.mxu0 %v1930
        %2002 = vmatprep.subr.bf16.mxu0 %v1929
        %2003 = vmatpush2.bf16.msra.mxu0 %v1928
        %2004 = vmatprep.subr.bf16.mxu0 %v1927
        %2005 = vmatpush2.bf16.msra.mxu0 %v1926
        %2006 = vmatprep.mubr.bf16.mxu0 %v1737
        %2007 = vmatmul.mubr.bf16.gmra.mxu0 %v1736
        %v2008 = vpop.f32.mrf.mxu0
        %v2009 = vadd.f32 %v1807, %v2008
        %v2010 = vpop.f32.mrf.mxu0
        %v2011 = vadd.f32 %v1811, %v2010
        %v2012 = vpop.f32.mrf.mxu0
        %v2013 = vadd.f32 %v1807, %v2012
        %v2014 = vpop.f32.mrf.mxu0
        %v2015 = vadd.f32 %v1811, %v2014
        %2016 = vmatprep.mubr.bf16.mxu0 %v1739
        %2017 = vmatmul.mubr.bf16.gmra.mxu0 %v1738
        %v2018 = vpop.f32.mrf.mxu0
        %v2019 = vadd.f32 %v1807, %v2018
        %v2020 = vpop.f32.mrf.mxu0
        %v2021 = vadd.f32 %v1811, %v2020
        %v2022 = vpop.f32.mrf.mxu0
        %v2023 = vadd.f32 %v1807, %v2022
        %v2024 = vpop.f32.mrf.mxu0
        %v2025 = vadd.f32 %v1811, %v2024
        %2026 = vmatprep.mubr.bf16.mxu0 %v1741
        %2027 = vmatmul.mubr.bf16.gmra.mxu0 %v1740
        %v2028 = vpop.f32.mrf.mxu0
        %v2029 = vadd.f32 %v1807, %v2028
        %v2030 = vpop.f32.mrf.mxu0
        %v2031 = vadd.f32 %v1811, %v2030
        %v2032 = vpop.f32.mrf.mxu0
        %v2033 = vadd.f32 %v1807, %v2032
        %v2034 = vpop.f32.mrf.mxu0
        %v2035 = vadd.f32 %v1811, %v2034
        %2036 = vmatprep.mubr.bf16.mxu0 %v1743
        %2037 = vmatmul.mubr.bf16.gmra.mxu0 %v1742
        %v2038 = vpop.f32.mrf.mxu0
        %v2039 = vadd.f32 %v1807, %v2038
        %v2040 = vpop.f32.mrf.mxu0
        %v2041 = vadd.f32 %v1811, %v2040
        %v2042 = vpop.f32.mrf.mxu0
        %v2043 = vadd.f32 %v1807, %v2042
        %v2044 = vpop.f32.mrf.mxu0
        %v2045 = vadd.f32 %v1811, %v2044
        %2046 = vmatprep.mubr.bf16.mxu0 %v1745
        %2047 = vmatmul.mubr.bf16.gmra.mxu0 %v1744
        %v2048 = vpop.f32.mrf.mxu0
        %v2049 = vadd.f32 %v1807, %v2048
        %v2050 = vpop.f32.mrf.mxu0
        %v2051 = vadd.f32 %v1811, %v2050
        %v2052 = vpop.f32.mrf.mxu0
        %v2053 = vadd.f32 %v1807, %v2052
        %v2054 = vpop.f32.mrf.mxu0
        %v2055 = vadd.f32 %v1811, %v2054
        %2056 = vmatprep.mubr.bf16.mxu0 %v1747
        %2057 = vmatmul.mubr.bf16.gmra.mxu0 %v1746
        %v2058 = vpop.f32.mrf.mxu0
        %v2059 = vadd.f32 %v1807, %v2058
        %v2060 = vpop.f32.mrf.mxu0
        %v2061 = vadd.f32 %v1811, %v2060
        %v2062 = vpop.f32.mrf.mxu0
        %v2063 = vadd.f32 %v1807, %v2062
        %v2064 = vpop.f32.mrf.mxu0
        %v2065 = vadd.f32 %v1811, %v2064
        %2066 = vmatprep.mubr.bf16.mxu0 %v1749
        %2067 = vmatmul.mubr.bf16.gmra.mxu0 %v1748
        %v2068 = vpop.f32.mrf.mxu0
        %v2069 = vadd.f32 %v1807, %v2068
        %v2070 = vpop.f32.mrf.mxu0
        %v2071 = vadd.f32 %v1811, %v2070
        %v2072 = vpop.f32.mrf.mxu0
        %v2073 = vadd.f32 %v1807, %v2072
        %v2074 = vpop.f32.mrf.mxu0
        %v2075 = vadd.f32 %v1811, %v2074
        %2076 = vmatprep.mubr.bf16.mxu0 %v1751
        %2077 = vmatmul.mubr.bf16.gmra.mxu0 %v1750
        %v2078 = vpop.f32.mrf.mxu0
        %v2079 = vadd.f32 %v1807, %v2078
        %v2080 = vpop.f32.mrf.mxu0
        %v2081 = vadd.f32 %v1811, %v2080
        %v2082 = vpop.f32.mrf.mxu0
        %v2083 = vadd.f32 %v1807, %v2082
        %v2084 = vpop.f32.mrf.mxu0
        %v2085 = vadd.f32 %v1811, %v2084
        %2086 = vmatprep.mubr.bf16.mxu0 %v1753
        %2087 = vmatmul.mubr.bf16.gmra.mxu0 %v1752
        %v2088 = vpop.f32.mrf.mxu0
        %v2089 = vadd.f32 %v1807, %v2088
        %v2090 = vpop.f32.mrf.mxu0
        %v2091 = vadd.f32 %v1811, %v2090
        %v2092 = vpop.f32.mrf.mxu0
        %v2093 = vadd.f32 %v1807, %v2092
        %v2094 = vpop.f32.mrf.mxu0
        %v2095 = vadd.f32 %v1811, %v2094
        %2096 = vmatprep.mubr.bf16.mxu0 %v1755
        %2097 = vmatmul.mubr.bf16.gmra.mxu0 %v1754
        %v2098 = vpop.f32.mrf.mxu0
        %v2099 = vadd.f32 %v1807, %v2098
        %v2100 = vpop.f32.mrf.mxu0
        %v2101 = vadd.f32 %v1811, %v2100
        %v2102 = vpop.f32.mrf.mxu0
        %v2103 = vadd.f32 %v1807, %v2102
        %v2104 = vpop.f32.mrf.mxu0
        %v2105 = vadd.f32 %v1811, %v2104
        %2106 = vmatprep.mubr.bf16.mxu0 %v1757
        %2107 = vmatmul.mubr.bf16.gmra.mxu0 %v1756
        %v2108 = vpop.f32.mrf.mxu0
        %v2109 = vadd.f32 %v1807, %v2108
        %v2110 = vpop.f32.mrf.mxu0
        %v2111 = vadd.f32 %v1811, %v2110
        %v2112 = vpop.f32.mrf.mxu0
        %v2113 = vadd.f32 %v1807, %v2112
        %v2114 = vpop.f32.mrf.mxu0
        %v2115 = vadd.f32 %v1811, %v2114
        %2116 = vmatprep.mubr.bf16.mxu0 %v1759
        %2117 = vmatmul.mubr.bf16.gmra.mxu0 %v1758
        %v2118 = vpop.f32.mrf.mxu0
        %v2119 = vadd.f32 %v1807, %v2118
        %v2120 = vpop.f32.mrf.mxu0
        %v2121 = vadd.f32 %v1811, %v2120
        %v2122 = vpop.f32.mrf.mxu0
        %v2123 = vadd.f32 %v1807, %v2122
        %v2124 = vpop.f32.mrf.mxu0
        %v2125 = vadd.f32 %v1811, %v2124
        %2126 = vmatprep.mubr.bf16.mxu0 %v1761
        %2127 = vmatmul.mubr.bf16.gmra.mxu0 %v1760
        %v2128 = vpop.f32.mrf.mxu0
        %v2129 = vadd.f32 %v1807, %v2128
        %v2130 = vpop.f32.mrf.mxu0
        %v2131 = vadd.f32 %v1811, %v2130
        %v2132 = vpop.f32.mrf.mxu0
        %v2133 = vadd.f32 %v1807, %v2132
        %v2134 = vpop.f32.mrf.mxu0
        %v2135 = vadd.f32 %v1811, %v2134
        %2136 = vmatprep.mubr.bf16.mxu0 %v1763
        %2137 = vmatmul.mubr.bf16.gmra.mxu0 %v1762
        %v2138 = vpop.f32.mrf.mxu0
        %v2139 = vadd.f32 %v1807, %v2138
        %v2140 = vpop.f32.mrf.mxu0
        %v2141 = vadd.f32 %v1811, %v2140
        %v2142 = vpop.f32.mrf.mxu0
        %v2143 = vadd.f32 %v1807, %v2142
        %v2144 = vpop.f32.mrf.mxu0
        %v2145 = vadd.f32 %v1811, %v2144
        %2146 = vmatprep.mubr.bf16.mxu0 %v1765
        %2147 = vmatmul.mubr.bf16.gmra.mxu0 %v1764
        %v2148 = vpop.f32.mrf.mxu0
        %v2149 = vadd.f32 %v1807, %v2148
        %v2150 = vpop.f32.mrf.mxu0
        %v2151 = vadd.f32 %v1811, %v2150
        %v2152 = vpop.f32.mrf.mxu0
        %v2153 = vadd.f32 %v1807, %v2152
        %v2154 = vpop.f32.mrf.mxu0
        %v2155 = vadd.f32 %v1811, %v2154
        %2156 = vmatprep.mubr.bf16.mxu0 %v1767
        %2157 = vmatmul.mubr.bf16.gmra.mxu0 %v1766
        %v2158 = vpop.f32.mrf.mxu0
        %v2159 = vadd.f32 %v1807, %v2158
        %v2160 = vpop.f32.mrf.mxu0
        %v2161 = vadd.f32 %v1811, %v2160
        %v2162 = vpop.f32.mrf.mxu0
        %v2163 = vadd.f32 %v1807, %v2162
        %v2164 = vpop.f32.mrf.mxu0
        %v2165 = vadd.f32 %v1811, %v2164
        %2166 = vdwg.mxu0
        %v2167 = vmax.f32 %v2009, 0.0
        %v2168 = vmax.f32 %v2011, 0.0
        %v2169 = vmax.f32 %v2013, 0.0
        %v2170 = vmax.f32 %v2015, 0.0
        %v2171 = vmax.f32 %v2019, 0.0
        %v2172 = vmax.f32 %v2021, 0.0
        %v2173 = vmax.f32 %v2023, 0.0
        %v2174 = vmax.f32 %v2025, 0.0
        %v2175 = vmax.f32 %v2029, 0.0
        %v2176 = vmax.f32 %v2031, 0.0
        %v2177 = vmax.f32 %v2033, 0.0
        %v2178 = vmax.f32 %v2035, 0.0
        %v2179 = vmax.f32 %v2039, 0.0
        %v2180 = vmax.f32 %v2041, 0.0
        %v2181 = vmax.f32 %v2043, 0.0
        %v2182 = vmax.f32 %v2045, 0.0
        %v2183 = vmax.f32 %v2049, 0.0
        %v2184 = vmax.f32 %v2051, 0.0
        %v2185 = vmax.f32 %v2053, 0.0
        %v2186 = vmax.f32 %v2055, 0.0
        %v2187 = vmax.f32 %v2059, 0.0
        %v2188 = vmax.f32 %v2061, 0.0
        %v2189 = vmax.f32 %v2063, 0.0
        %v2190 = vmax.f32 %v2065, 0.0
        %v2191 = vmax.f32 %v2069, 0.0
        %v2192 = vmax.f32 %v2071, 0.0
        %v2193 = vmax.f32 %v2073, 0.0
        %v2194 = vmax.f32 %v2075, 0.0
        %v2195 = vmax.f32 %v2079, 0.0
        %v2196 = vmax.f32 %v2081, 0.0
        %v2197 = vmax.f32 %v2083, 0.0
        %v2198 = vmax.f32 %v2085, 0.0
        %v2199 = vmax.f32 %v2089, 0.0
        %v2200 = vmax.f32 %v2091, 0.0
        %v2201 = vmax.f32 %v2093, 0.0
        %v2202 = vmax.f32 %v2095, 0.0
        %v2203 = vmax.f32 %v2099, 0.0
        %v2204 = vmax.f32 %v2101, 0.0
        %v2205 = vmax.f32 %v2103, 0.0
        %v2206 = vmax.f32 %v2105, 0.0
        %v2207 = vmax.f32 %v2109, 0.0
        %v2208 = vmax.f32 %v2111, 0.0
        %v2209 = vmax.f32 %v2113, 0.0
        %v2210 = vmax.f32 %v2115, 0.0
        %v2211 = vmax.f32 %v2119, 0.0
        %v2212 = vmax.f32 %v2121, 0.0
        %v2213 = vmax.f32 %v2123, 0.0
        %v2214 = vmax.f32 %v2125, 0.0
        %v2215 = vmax.f32 %v2129, 0.0
        %v2216 = vmax.f32 %v2131, 0.0
        %v2217 = vmax.f32 %v2133, 0.0
        %v2218 = vmax.f32 %v2135, 0.0
        %v2219 = vmax.f32 %v2139, 0.0
        %v2220 = vmax.f32 %v2141, 0.0
        %v2221 = vmax.f32 %v2143, 0.0
        %v2222 = vmax.f32 %v2145, 0.0
        %v2223 = vmax.f32 %v2149, 0.0
        %v2224 = vmax.f32 %v2151, 0.0
        %v2225 = vmax.f32 %v2153, 0.0
        %v2226 = vmax.f32 %v2155, 0.0
        %v2227 = vmax.f32 %v2159, 0.0
        %v2228 = vmax.f32 %v2161, 0.0
        %v2229 = vmax.f32 %v2163, 0.0
        %v2230 = vmax.f32 %v2165, 0.0
        %v2231 = vpack.c.bf16 %v2169, %v2167
        %v2232 = vpack.c.bf16 %v2170, %v2168
        %v2233 = vpack.c.bf16 %v2173, %v2171
        %v2234 = vpack.c.bf16 %v2174, %v2172
        %v2235 = vpack.c.bf16 %v2177, %v2175
        %v2236 = vpack.c.bf16 %v2178, %v2176
        %v2237 = vpack.c.bf16 %v2181, %v2179
        %v2238 = vpack.c.bf16 %v2182, %v2180
        %v2239 = vpack.c.bf16 %v2185, %v2183
        %v2240 = vpack.c.bf16 %v2186, %v2184
        %v2241 = vpack.c.bf16 %v2189, %v2187
        %v2242 = vpack.c.bf16 %v2190, %v2188
        %v2243 = vpack.c.bf16 %v2193, %v2191
        %v2244 = vpack.c.bf16 %v2194, %v2192
        %v2245 = vpack.c.bf16 %v2197, %v2195
        %v2246 = vpack.c.bf16 %v2198, %v2196
        %v2247 = vpack.c.bf16 %v2201, %v2199
        %v2248 = vpack.c.bf16 %v2202, %v2200
        %v2249 = vpack.c.bf16 %v2205, %v2203
        %v2250 = vpack.c.bf16 %v2206, %v2204
        %v2251 = vpack.c.bf16 %v2209, %v2207
        %v2252 = vpack.c.bf16 %v2210, %v2208
        %v2253 = vpack.c.bf16 %v2213, %v2211
        %v2254 = vpack.c.bf16 %v2214, %v2212
        %v2255 = vpack.c.bf16 %v2217, %v2215
        %v2256 = vpack.c.bf16 %v2218, %v2216
        %v2257 = vpack.c.bf16 %v2221, %v2219
        %v2258 = vpack.c.bf16 %v2222, %v2220
        %v2259 = vpack.c.bf16 %v2225, %v2223
        %v2260 = vpack.c.bf16 %v2226, %v2224
        %v2261 = vpack.c.bf16 %v2229, %v2227
        %v2262 = vpack.c.bf16 %v2230, %v2228
        %s2263 = scalar_lea.vmem [#allocation2], 768
        %v2264 = vld [vmem:[%s2263] sm:$0xff]
        %v2265 = vld [vmem:[%s2263 + $0x8] sm:$0xff]
        %v2266 = vld [vmem:[%s2263 + $0x10] sm:$0xff]
        %v2267 = vld [vmem:[%s2263 + $0x18] sm:$0xff]
        %v2268 = vld [vmem:[%s2263 + $0x20] sm:$0xff]
        %v2269 = vld [vmem:[%s2263 + $0x28] sm:$0xff]
        %v2270 = vld [vmem:[%s2263 + $0x30] sm:$0xff]
        %v2271 = vld [vmem:[%s2263 + $0x38] sm:$0xff]
        %v2272 = vld [vmem:[%s2263 + $0x40] sm:$0xff]
        %v2273 = vld [vmem:[%s2263 + $0x48] sm:$0xff]
        %v2274 = vld [vmem:[%s2263 + $0x50] sm:$0xff]
        %v2275 = vld [vmem:[%s2263 + $0x58] sm:$0xff]
        %v2276 = vld [vmem:[%s2263 + $0x60] sm:$0xff]
        %v2277 = vld [vmem:[%s2263 + $0x68] sm:$0xff]
        %v2278 = vld [vmem:[%s2263 + $0x70] sm:$0xff]
        %v2279 = vld [vmem:[%s2263 + $0x78] sm:$0xff]
        %v2280 = vld [vmem:[%s2263 + $0x80] sm:$0xff]
        %v2281 = vld [vmem:[%s2263 + $0x88] sm:$0xff]
        %v2282 = vld [vmem:[%s2263 + $0x90] sm:$0xff]
        %v2283 = vld [vmem:[%s2263 + $0x98] sm:$0xff]
        %v2284 = vld [vmem:[%s2263 + $0xa0] sm:$0xff]
        %v2285 = vld [vmem:[%s2263 + $0xa8] sm:$0xff]
        %v2286 = vld [vmem:[%s2263 + $0xb0] sm:$0xff]
        %v2287 = vld [vmem:[%s2263 + $0xb8] sm:$0xff]
        %v2288 = vld [vmem:[%s2263 + $0xc0] sm:$0xff]
        %v2289 = vld [vmem:[%s2263 + $0xc8] sm:$0xff]
        %v2290 = vld [vmem:[%s2263 + $0xd0] sm:$0xff]
        %v2291 = vld [vmem:[%s2263 + $0xd8] sm:$0xff]
        %v2292 = vld [vmem:[%s2263 + $0xe0] sm:$0xff]
        %v2293 = vld [vmem:[%s2263 + $0xe8] sm:$0xff]
        %v2294 = vld [vmem:[%s2263 + $0xf0] sm:$0xff]
        %v2295 = vld [vmem:[%s2263 + $0xf8] sm:$0xff]
        %s2296 = scalar_lea.vmem %s4, 6
        %v2297 = vld [vmem:[%s2296] sm:$0x3]
        %v2299 = vlaneseq
        %v2300 = vshrl.u32 %v2299, 7
        %v2301 = vsub.s32 0, %v2300
        %v2302 = vrot.slane %v2297, %v2301
        %v2303 = vlaneseq
        %v2304 = vshrl.u32 %v2303, 7
        %v2305 = vsub.s32 1, %v2304
        %v2306 = vrot.slane %v2297, %v2305
        %v2341 = vunpack.c.l.b16 %v2264
        %v2342 = vunpack.c.h.b16 %v2264
        %v2343 = vunpack.c.l.b16 %v2265
        %v2344 = vunpack.c.h.b16 %v2265
        %v2345 = vunpack.c.l.b16 %v2266
        %v2346 = vunpack.c.h.b16 %v2266
        %v2347 = vunpack.c.l.b16 %v2267
        %v2348 = vunpack.c.h.b16 %v2267
        %v2349 = vunpack.c.l.b16 %v2268
        %v2350 = vunpack.c.h.b16 %v2268
        %v2351 = vunpack.c.l.b16 %v2269
        %v2352 = vunpack.c.h.b16 %v2269
        %v2353 = vunpack.c.l.b16 %v2270
        %v2354 = vunpack.c.h.b16 %v2270
        %v2355 = vunpack.c.l.b16 %v2271
        %v2356 = vunpack.c.h.b16 %v2271
        %v2357 = vunpack.c.l.b16 %v2272
        %v2358 = vunpack.c.h.b16 %v2272
        %v2359 = vunpack.c.l.b16 %v2273
        %v2360 = vunpack.c.h.b16 %v2273
        %v2361 = vunpack.c.l.b16 %v2274
        %v2362 = vunpack.c.h.b16 %v2274
        %v2363 = vunpack.c.l.b16 %v2275
        %v2364 = vunpack.c.h.b16 %v2275
        %v2365 = vunpack.c.l.b16 %v2276
        %v2366 = vunpack.c.h.b16 %v2276
        %v2367 = vunpack.c.l.b16 %v2277
        %v2368 = vunpack.c.h.b16 %v2277
        %v2369 = vunpack.c.l.b16 %v2278
        %v2370 = vunpack.c.h.b16 %v2278
        %v2371 = vunpack.c.l.b16 %v2279
        %v2372 = vunpack.c.h.b16 %v2279
        %v2373 = vunpack.c.l.b16 %v2280
        %v2374 = vunpack.c.h.b16 %v2280
        %v2375 = vunpack.c.l.b16 %v2281
        %v2376 = vunpack.c.h.b16 %v2281
        %v2377 = vunpack.c.l.b16 %v2282
        %v2378 = vunpack.c.h.b16 %v2282
        %v2379 = vunpack.c.l.b16 %v2283
        %v2380 = vunpack.c.h.b16 %v2283
        %v2381 = vunpack.c.l.b16 %v2284
        %v2382 = vunpack.c.h.b16 %v2284
        %v2383 = vunpack.c.l.b16 %v2285
        %v2384 = vunpack.c.h.b16 %v2285
        %v2385 = vunpack.c.l.b16 %v2286
        %v2386 = vunpack.c.h.b16 %v2286
        %v2387 = vunpack.c.l.b16 %v2287
        %v2388 = vunpack.c.h.b16 %v2287
        %v2389 = vunpack.c.l.b16 %v2288
        %v2390 = vunpack.c.h.b16 %v2288
        %v2391 = vunpack.c.l.b16 %v2289
        %v2392 = vunpack.c.h.b16 %v2289
        %v2393 = vunpack.c.l.b16 %v2290
        %v2394 = vunpack.c.h.b16 %v2290
        %v2395 = vunpack.c.l.b16 %v2291
        %v2396 = vunpack.c.h.b16 %v2291
        %v2397 = vunpack.c.l.b16 %v2292
        %v2398 = vunpack.c.h.b16 %v2292
        %v2399 = vunpack.c.l.b16 %v2293
        %v2400 = vunpack.c.h.b16 %v2293
        %v2401 = vunpack.c.l.b16 %v2294
        %v2402 = vunpack.c.h.b16 %v2294
        %v2403 = vunpack.c.l.b16 %v2295
        %v2404 = vunpack.c.h.b16 %v2295
        %v2405 = vpack.c.b16 %v2343, %v2341
        %v2406 = vpack.c.b16 %v2344, %v2342
        %v2407 = vpack.c.b16 %v2347, %v2345
        %v2408 = vpack.c.b16 %v2348, %v2346
        %v2409 = vpack.c.b16 %v2351, %v2349
        %v2410 = vpack.c.b16 %v2352, %v2350
        %v2411 = vpack.c.b16 %v2355, %v2353
        %v2412 = vpack.c.b16 %v2356, %v2354
        %v2413 = vpack.c.b16 %v2359, %v2357
        %v2414 = vpack.c.b16 %v2360, %v2358
        %v2415 = vpack.c.b16 %v2363, %v2361
        %v2416 = vpack.c.b16 %v2364, %v2362
        %v2417 = vpack.c.b16 %v2367, %v2365
        %v2418 = vpack.c.b16 %v2368, %v2366
        %v2419 = vpack.c.b16 %v2371, %v2369
        %v2420 = vpack.c.b16 %v2372, %v2370
        %v2421 = vpack.c.b16 %v2375, %v2373
        %v2422 = vpack.c.b16 %v2376, %v2374
        %v2423 = vpack.c.b16 %v2379, %v2377
        %v2424 = vpack.c.b16 %v2380, %v2378
        %v2425 = vpack.c.b16 %v2383, %v2381
        %v2426 = vpack.c.b16 %v2384, %v2382
        %v2427 = vpack.c.b16 %v2387, %v2385
        %v2428 = vpack.c.b16 %v2388, %v2386
        %v2429 = vpack.c.b16 %v2391, %v2389
        %v2430 = vpack.c.b16 %v2392, %v2390
        %v2431 = vpack.c.b16 %v2395, %v2393
        %v2432 = vpack.c.b16 %v2396, %v2394
        %v2433 = vpack.c.b16 %v2399, %v2397
        %v2434 = vpack.c.b16 %v2400, %v2398
        %v2435 = vpack.c.b16 %v2403, %v2401
        %v2436 = vpack.c.b16 %v2404, %v2402
        %2469 = vmatprep.subr.bf16.mxu0 %v2420
        %2470 = vmatpush1.bf16.msra.mxu0 %v2419
        %2471 = vmatprep.subr.bf16.mxu0 %v2418
        %2472 = vmatpush1.bf16.msra.mxu0 %v2417
        %2473 = vmatprep.subr.bf16.mxu0 %v2416
        %2474 = vmatpush1.bf16.msra.mxu0 %v2415
        %2475 = vmatprep.subr.bf16.mxu0 %v2414
        %2476 = vmatpush1.bf16.msra.mxu0 %v2413
        %2477 = vmatprep.subr.bf16.mxu0 %v2412
        %2478 = vmatpush1.bf16.msra.mxu0 %v2411
        %2479 = vmatprep.subr.bf16.mxu0 %v2410
        %2480 = vmatpush1.bf16.msra.mxu0 %v2409
        %2481 = vmatprep.subr.bf16.mxu0 %v2408
        %2482 = vmatpush1.bf16.msra.mxu0 %v2407
        %2483 = vmatprep.subr.bf16.mxu0 %v2406
        %2484 = vmatpush1.bf16.msra.mxu0 %v2405
        %2485 = vmatprep.subr.bf16.mxu0 %v2436
        %2486 = vmatpush2.bf16.msra.mxu0 %v2435
        %2487 = vmatprep.subr.bf16.mxu0 %v2434
        %2488 = vmatpush2.bf16.msra.mxu0 %v2433
        %2489 = vmatprep.subr.bf16.mxu0 %v2432
        %2490 = vmatpush2.bf16.msra.mxu0 %v2431
        %2491 = vmatprep.subr.bf16.mxu0 %v2430
        %2492 = vmatpush2.bf16.msra.mxu0 %v2429
        %2493 = vmatprep.subr.bf16.mxu0 %v2428
        %2494 = vmatpush2.bf16.msra.mxu0 %v2427
        %2495 = vmatprep.subr.bf16.mxu0 %v2426
        %2496 = vmatpush2.bf16.msra.mxu0 %v2425
        %2497 = vmatprep.subr.bf16.mxu0 %v2424
        %2498 = vmatpush2.bf16.msra.mxu0 %v2423
        %2499 = vmatprep.subr.bf16.mxu0 %v2422
        %2500 = vmatpush2.bf16.msra.mxu0 %v2421
        %2501 = vmatprep.mubr.bf16.mxu0 %v2232
        %2502 = vmatmul.mubr.bf16.gmra.mxu0 %v2231
        %v2503 = vpop.f32.mrf.mxu0
        %v2504 = vadd.f32 %v2302, %v2503
        %v2505 = vpop.f32.mrf.mxu0
        %v2506 = vadd.f32 %v2306, %v2505
        %v2507 = vpop.f32.mrf.mxu0
        %v2508 = vadd.f32 %v2302, %v2507
        %v2509 = vpop.f32.mrf.mxu0
        %v2510 = vadd.f32 %v2306, %v2509
        %2511 = vmatprep.mubr.bf16.mxu0 %v2234
        %2512 = vmatmul.mubr.bf16.gmra.mxu0 %v2233
        %v2513 = vpop.f32.mrf.mxu0
        %v2514 = vadd.f32 %v2302, %v2513
        %v2515 = vpop.f32.mrf.mxu0
        %v2516 = vadd.f32 %v2306, %v2515
        %v2517 = vpop.f32.mrf.mxu0
        %v2518 = vadd.f32 %v2302, %v2517
        %v2519 = vpop.f32.mrf.mxu0
        %v2520 = vadd.f32 %v2306, %v2519
        %2521 = vmatprep.mubr.bf16.mxu0 %v2236
        %2522 = vmatmul.mubr.bf16.gmra.mxu0 %v2235
        %v2523 = vpop.f32.mrf.mxu0
        %v2524 = vadd.f32 %v2302, %v2523
        %v2525 = vpop.f32.mrf.mxu0
        %v2526 = vadd.f32 %v2306, %v2525
        %v2527 = vpop.f32.mrf.mxu0
        %v2528 = vadd.f32 %v2302, %v2527
        %v2529 = vpop.f32.mrf.mxu0
        %v2530 = vadd.f32 %v2306, %v2529
        %2531 = vmatprep.mubr.bf16.mxu0 %v2238
        %2532 = vmatmul.mubr.bf16.gmra.mxu0 %v2237
        %v2533 = vpop.f32.mrf.mxu0
        %v2534 = vadd.f32 %v2302, %v2533
        %v2535 = vpop.f32.mrf.mxu0
        %v2536 = vadd.f32 %v2306, %v2535
        %v2537 = vpop.f32.mrf.mxu0
        %v2538 = vadd.f32 %v2302, %v2537
        %v2539 = vpop.f32.mrf.mxu0
        %v2540 = vadd.f32 %v2306, %v2539
        %2541 = vmatprep.mubr.bf16.mxu0 %v2240
        %2542 = vmatmul.mubr.bf16.gmra.mxu0 %v2239
        %v2543 = vpop.f32.mrf.mxu0
        %v2544 = vadd.f32 %v2302, %v2543
        %v2545 = vpop.f32.mrf.mxu0
        %v2546 = vadd.f32 %v2306, %v2545
        %v2547 = vpop.f32.mrf.mxu0
        %v2548 = vadd.f32 %v2302, %v2547
        %v2549 = vpop.f32.mrf.mxu0
        %v2550 = vadd.f32 %v2306, %v2549
        %2551 = vmatprep.mubr.bf16.mxu0 %v2242
        %2552 = vmatmul.mubr.bf16.gmra.mxu0 %v2241
        %v2553 = vpop.f32.mrf.mxu0
        %v2554 = vadd.f32 %v2302, %v2553
        %v2555 = vpop.f32.mrf.mxu0
        %v2556 = vadd.f32 %v2306, %v2555
        %v2557 = vpop.f32.mrf.mxu0
        %v2558 = vadd.f32 %v2302, %v2557
        %v2559 = vpop.f32.mrf.mxu0
        %v2560 = vadd.f32 %v2306, %v2559
        %2561 = vmatprep.mubr.bf16.mxu0 %v2244
        %2562 = vmatmul.mubr.bf16.gmra.mxu0 %v2243
        %v2563 = vpop.f32.mrf.mxu0
        %v2564 = vadd.f32 %v2302, %v2563
        %v2565 = vpop.f32.mrf.mxu0
        %v2566 = vadd.f32 %v2306, %v2565
        %v2567 = vpop.f32.mrf.mxu0
        %v2568 = vadd.f32 %v2302, %v2567
        %v2569 = vpop.f32.mrf.mxu0
        %v2570 = vadd.f32 %v2306, %v2569
        %2571 = vmatprep.mubr.bf16.mxu0 %v2246
        %2572 = vmatmul.mubr.bf16.gmra.mxu0 %v2245
        %v2573 = vpop.f32.mrf.mxu0
        %v2574 = vadd.f32 %v2302, %v2573
        %v2575 = vpop.f32.mrf.mxu0
        %v2576 = vadd.f32 %v2306, %v2575
        %v2577 = vpop.f32.mrf.mxu0
        %v2578 = vadd.f32 %v2302, %v2577
        %v2579 = vpop.f32.mrf.mxu0
        %v2580 = vadd.f32 %v2306, %v2579
        %2581 = vmatprep.mubr.bf16.mxu0 %v2248
        %2582 = vmatmul.mubr.bf16.gmra.mxu0 %v2247
        %v2583 = vpop.f32.mrf.mxu0
        %v2584 = vadd.f32 %v2302, %v2583
        %v2585 = vpop.f32.mrf.mxu0
        %v2586 = vadd.f32 %v2306, %v2585
        %v2587 = vpop.f32.mrf.mxu0
        %v2588 = vadd.f32 %v2302, %v2587
        %v2589 = vpop.f32.mrf.mxu0
        %v2590 = vadd.f32 %v2306, %v2589
        %2591 = vmatprep.mubr.bf16.mxu0 %v2250
        %2592 = vmatmul.mubr.bf16.gmra.mxu0 %v2249
        %v2593 = vpop.f32.mrf.mxu0
        %v2594 = vadd.f32 %v2302, %v2593
        %v2595 = vpop.f32.mrf.mxu0
        %v2596 = vadd.f32 %v2306, %v2595
        %v2597 = vpop.f32.mrf.mxu0
        %v2598 = vadd.f32 %v2302, %v2597
        %v2599 = vpop.f32.mrf.mxu0
        %v2600 = vadd.f32 %v2306, %v2599
        %2601 = vmatprep.mubr.bf16.mxu0 %v2252
        %2602 = vmatmul.mubr.bf16.gmra.mxu0 %v2251
        %v2603 = vpop.f32.mrf.mxu0
        %v2604 = vadd.f32 %v2302, %v2603
        %v2605 = vpop.f32.mrf.mxu0
        %v2606 = vadd.f32 %v2306, %v2605
        %v2607 = vpop.f32.mrf.mxu0
        %v2608 = vadd.f32 %v2302, %v2607
        %v2609 = vpop.f32.mrf.mxu0
        %v2610 = vadd.f32 %v2306, %v2609
        %2611 = vmatprep.mubr.bf16.mxu0 %v2254
        %2612 = vmatmul.mubr.bf16.gmra.mxu0 %v2253
        %v2613 = vpop.f32.mrf.mxu0
        %v2614 = vadd.f32 %v2302, %v2613
        %v2615 = vpop.f32.mrf.mxu0
        %v2616 = vadd.f32 %v2306, %v2615
        %v2617 = vpop.f32.mrf.mxu0
        %v2618 = vadd.f32 %v2302, %v2617
        %v2619 = vpop.f32.mrf.mxu0
        %v2620 = vadd.f32 %v2306, %v2619
        %2621 = vmatprep.mubr.bf16.mxu0 %v2256
        %2622 = vmatmul.mubr.bf16.gmra.mxu0 %v2255
        %v2623 = vpop.f32.mrf.mxu0
        %v2624 = vadd.f32 %v2302, %v2623
        %v2625 = vpop.f32.mrf.mxu0
        %v2626 = vadd.f32 %v2306, %v2625
        %v2627 = vpop.f32.mrf.mxu0
        %v2628 = vadd.f32 %v2302, %v2627
        %v2629 = vpop.f32.mrf.mxu0
        %v2630 = vadd.f32 %v2306, %v2629
        %2631 = vmatprep.mubr.bf16.mxu0 %v2258
        %2632 = vmatmul.mubr.bf16.gmra.mxu0 %v2257
        %v2633 = vpop.f32.mrf.mxu0
        %v2634 = vadd.f32 %v2302, %v2633
        %v2635 = vpop.f32.mrf.mxu0
        %v2636 = vadd.f32 %v2306, %v2635
        %v2637 = vpop.f32.mrf.mxu0
        %v2638 = vadd.f32 %v2302, %v2637
        %v2639 = vpop.f32.mrf.mxu0
        %v2640 = vadd.f32 %v2306, %v2639
        %2641 = vmatprep.mubr.bf16.mxu0 %v2260
        %2642 = vmatmul.mubr.bf16.gmra.mxu0 %v2259
        %v2643 = vpop.f32.mrf.mxu0
        %v2644 = vadd.f32 %v2302, %v2643
        %v2645 = vpop.f32.mrf.mxu0
        %v2646 = vadd.f32 %v2306, %v2645
        %v2647 = vpop.f32.mrf.mxu0
        %v2648 = vadd.f32 %v2302, %v2647
        %v2649 = vpop.f32.mrf.mxu0
        %v2650 = vadd.f32 %v2306, %v2649
        %2651 = vmatprep.mubr.bf16.mxu0 %v2262
        %2652 = vmatmul.mubr.bf16.gmra.mxu0 %v2261
        %v2653 = vpop.f32.mrf.mxu0
        %v2654 = vadd.f32 %v2302, %v2653
        %v2655 = vpop.f32.mrf.mxu0
        %v2656 = vadd.f32 %v2306, %v2655
        %v2657 = vpop.f32.mrf.mxu0
        %v2658 = vadd.f32 %v2302, %v2657
        %v2659 = vpop.f32.mrf.mxu0
        %v2660 = vadd.f32 %v2306, %v2659
        %2661 = vdwg.mxu0
        %v2662 = vxor.u32 %v2504, 2147483648
        %v2663 = vxor.u32 %v2506, 2147483648
        %v2664 = vxor.u32 %v2508, 2147483648
        %v2665 = vxor.u32 %v2510, 2147483648
        %v2666 = vxor.u32 %v2514, 2147483648
        %v2667 = vxor.u32 %v2516, 2147483648
        %v2668 = vxor.u32 %v2518, 2147483648
        %v2669 = vxor.u32 %v2520, 2147483648
        %v2670 = vxor.u32 %v2524, 2147483648
        %v2671 = vxor.u32 %v2526, 2147483648
        %v2672 = vxor.u32 %v2528, 2147483648
        %v2673 = vxor.u32 %v2530, 2147483648
        %v2674 = vxor.u32 %v2534, 2147483648
        %v2675 = vxor.u32 %v2536, 2147483648
        %v2676 = vxor.u32 %v2538, 2147483648
        %v2677 = vxor.u32 %v2540, 2147483648
        %v2678 = vxor.u32 %v2544, 2147483648
        %v2679 = vxor.u32 %v2546, 2147483648
        %v2680 = vxor.u32 %v2548, 2147483648
        %v2681 = vxor.u32 %v2550, 2147483648
        %v2682 = vxor.u32 %v2554, 2147483648
        %v2683 = vxor.u32 %v2556, 2147483648
        %v2684 = vxor.u32 %v2558, 2147483648
        %v2685 = vxor.u32 %v2560, 2147483648
        %v2686 = vxor.u32 %v2564, 2147483648
        %v2687 = vxor.u32 %v2566, 2147483648
        %v2688 = vxor.u32 %v2568, 2147483648
        %v2689 = vxor.u32 %v2570, 2147483648
        %v2690 = vxor.u32 %v2574, 2147483648
        %v2691 = vxor.u32 %v2576, 2147483648
        %v2692 = vxor.u32 %v2578, 2147483648
        %v2693 = vxor.u32 %v2580, 2147483648
        %v2694 = vxor.u32 %v2584, 2147483648
        %v2695 = vxor.u32 %v2586, 2147483648
        %v2696 = vxor.u32 %v2588, 2147483648
        %v2697 = vxor.u32 %v2590, 2147483648
        %v2698 = vxor.u32 %v2594, 2147483648
        %v2699 = vxor.u32 %v2596, 2147483648
        %v2700 = vxor.u32 %v2598, 2147483648
        %v2701 = vxor.u32 %v2600, 2147483648
        %v2702 = vxor.u32 %v2604, 2147483648
        %v2703 = vxor.u32 %v2606, 2147483648
        %v2704 = vxor.u32 %v2608, 2147483648
        %v2705 = vxor.u32 %v2610, 2147483648
        %v2706 = vxor.u32 %v2614, 2147483648
        %v2707 = vxor.u32 %v2616, 2147483648
        %v2708 = vxor.u32 %v2618, 2147483648
        %v2709 = vxor.u32 %v2620, 2147483648
        %v2710 = vxor.u32 %v2624, 2147483648
        %v2711 = vxor.u32 %v2626, 2147483648
        %v2712 = vxor.u32 %v2628, 2147483648
        %v2713 = vxor.u32 %v2630, 2147483648
        %v2714 = vxor.u32 %v2634, 2147483648
        %v2715 = vxor.u32 %v2636, 2147483648
        %v2716 = vxor.u32 %v2638, 2147483648
        %v2717 = vxor.u32 %v2640, 2147483648
        %v2718 = vxor.u32 %v2644, 2147483648
        %v2719 = vxor.u32 %v2646, 2147483648
        %v2720 = vxor.u32 %v2648, 2147483648
        %v2721 = vxor.u32 %v2650, 2147483648
        %v2722 = vxor.u32 %v2654, 2147483648
        %v2723 = vxor.u32 %v2656, 2147483648
        %v2724 = vxor.u32 %v2658, 2147483648
        %v2725 = vxor.u32 %v2660, 2147483648
        %v2726 = vmul.f32 %v2662, 1.442695
        %v2727 = vpow.pop %v2726
        %v2728 = vmul.f32 %v2663, 1.442695
        %v2729 = vpow.pop %v2728
        %v2730 = vmul.f32 %v2664, 1.442695
        %v2731 = vpow.pop %v2730
        %v2732 = vmul.f32 %v2665, 1.442695
        %v2733 = vpow.pop %v2732
        %v2734 = vmul.f32 %v2666, 1.442695
        %v2735 = vpow.pop %v2734
        %v2736 = vmul.f32 %v2667, 1.442695
        %v2737 = vpow.pop %v2736
        %v2738 = vmul.f32 %v2668, 1.442695
        %v2739 = vpow.pop %v2738
        %v2740 = vmul.f32 %v2669, 1.442695
        %v2741 = vpow.pop %v2740
        %v2742 = vmul.f32 %v2670, 1.442695
        %v2743 = vpow.pop %v2742
        %v2744 = vmul.f32 %v2671, 1.442695
        %v2745 = vpow.pop %v2744
        %v2746 = vmul.f32 %v2672, 1.442695
        %v2747 = vpow.pop %v2746
        %v2748 = vmul.f32 %v2673, 1.442695
        %v2749 = vpow.pop %v2748
        %v2750 = vmul.f32 %v2674, 1.442695
        %v2751 = vpow.pop %v2750
        %v2752 = vmul.f32 %v2675, 1.442695
        %v2753 = vpow.pop %v2752
        %v2754 = vmul.f32 %v2676, 1.442695
        %v2755 = vpow.pop %v2754
        %v2756 = vmul.f32 %v2677, 1.442695
        %v2757 = vpow.pop %v2756
        %v2758 = vmul.f32 %v2678, 1.442695
        %v2759 = vpow.pop %v2758
        %v2760 = vmul.f32 %v2679, 1.442695
        %v2761 = vpow.pop %v2760
        %v2762 = vmul.f32 %v2680, 1.442695
        %v2763 = vpow.pop %v2762
        %v2764 = vmul.f32 %v2681, 1.442695
        %v2765 = vpow.pop %v2764
        %v2766 = vmul.f32 %v2682, 1.442695
        %v2767 = vpow.pop %v2766
        %v2768 = vmul.f32 %v2683, 1.442695
        %v2769 = vpow.pop %v2768
        %v2770 = vmul.f32 %v2684, 1.442695
        %v2771 = vpow.pop %v2770
        %v2772 = vmul.f32 %v2685, 1.442695
        %v2773 = vpow.pop %v2772
        %v2774 = vmul.f32 %v2686, 1.442695
        %v2775 = vpow.pop %v2774
        %v2776 = vmul.f32 %v2687, 1.442695
        %v2777 = vpow.pop %v2776
        %v2778 = vmul.f32 %v2688, 1.442695
        %v2779 = vpow.pop %v2778
        %v2780 = vmul.f32 %v2689, 1.442695
        %v2781 = vpow.pop %v2780
        %v2782 = vmul.f32 %v2690, 1.442695
        %v2783 = vpow.pop %v2782
        %v2784 = vmul.f32 %v2691, 1.442695
        %v2785 = vpow.pop %v2784
        %v2786 = vmul.f32 %v2692, 1.442695
        %v2787 = vpow.pop %v2786
        %v2788 = vmul.f32 %v2693, 1.442695
        %v2789 = vpow.pop %v2788
        %v2790 = vmul.f32 %v2694, 1.442695
        %v2791 = vpow.pop %v2790
        %v2792 = vmul.f32 %v2695, 1.442695
        %v2793 = vpow.pop %v2792
        %v2794 = vmul.f32 %v2696, 1.442695
        %v2795 = vpow.pop %v2794
        %v2796 = vmul.f32 %v2697, 1.442695
        %v2797 = vpow.pop %v2796
        %v2798 = vmul.f32 %v2698, 1.442695
        %v2799 = vpow.pop %v2798
        %v2800 = vmul.f32 %v2699, 1.442695
        %v2801 = vpow.pop %v2800
        %v2802 = vmul.f32 %v2700, 1.442695
        %v2803 = vpow.pop %v2802
        %v2804 = vmul.f32 %v2701, 1.442695
        %v2805 = vpow.pop %v2804
        %v2806 = vmul.f32 %v2702, 1.442695
        %v2807 = vpow.pop %v2806
        %v2808 = vmul.f32 %v2703, 1.442695
        %v2809 = vpow.pop %v2808
        %v2810 = vmul.f32 %v2704, 1.442695
        %v2811 = vpow.pop %v2810
        %v2812 = vmul.f32 %v2705, 1.442695
        %v2813 = vpow.pop %v2812
        %v2814 = vmul.f32 %v2706, 1.442695
        %v2815 = vpow.pop %v2814
        %v2816 = vmul.f32 %v2707, 1.442695
        %v2817 = vpow.pop %v2816
        %v2818 = vmul.f32 %v2708, 1.442695
        %v2819 = vpow.pop %v2818
        %v2820 = vmul.f32 %v2709, 1.442695
        %v2821 = vpow.pop %v2820
        %v2822 = vmul.f32 %v2710, 1.442695
        %v2823 = vpow.pop %v2822
        %v2824 = vmul.f32 %v2711, 1.442695
        %v2825 = vpow.pop %v2824
        %v2826 = vmul.f32 %v2712, 1.442695
        %v2827 = vpow.pop %v2826
        %v2828 = vmul.f32 %v2713, 1.442695
        %v2829 = vpow.pop %v2828
        %v2830 = vmul.f32 %v2714, 1.442695
        %v2831 = vpow.pop %v2830
        %v2832 = vmul.f32 %v2715, 1.442695
        %v2833 = vpow.pop %v2832
        %v2834 = vmul.f32 %v2716, 1.442695
        %v2835 = vpow.pop %v2834
        %v2836 = vmul.f32 %v2717, 1.442695
        %v2837 = vpow.pop %v2836
        %v2838 = vmul.f32 %v2718, 1.442695
        %v2839 = vpow.pop %v2838
        %v2840 = vmul.f32 %v2719, 1.442695
        %v2841 = vpow.pop %v2840
        %v2842 = vmul.f32 %v2720, 1.442695
        %v2843 = vpow.pop %v2842
        %v2844 = vmul.f32 %v2721, 1.442695
        %v2845 = vpow.pop %v2844
        %v2846 = vmul.f32 %v2722, 1.442695
        %v2847 = vpow.pop %v2846
        %v2848 = vmul.f32 %v2723, 1.442695
        %v2849 = vpow.pop %v2848
        %v2850 = vmul.f32 %v2724, 1.442695
        %v2851 = vpow.pop %v2850
        %v2852 = vmul.f32 %v2725, 1.442695
        %v2853 = vpow.pop %v2852
        %v2854 = vadd.f32 %v2727, 1.0
        %v2855 = vadd.f32 %v2729, 1.0
        %v2856 = vadd.f32 %v2731, 1.0
        %v2857 = vadd.f32 %v2733, 1.0
        %v2858 = vadd.f32 %v2735, 1.0
        %v2859 = vadd.f32 %v2737, 1.0
        %v2860 = vadd.f32 %v2739, 1.0
        %v2861 = vadd.f32 %v2741, 1.0
        %v2862 = vadd.f32 %v2743, 1.0
        %v2863 = vadd.f32 %v2745, 1.0
        %v2864 = vadd.f32 %v2747, 1.0
        %v2865 = vadd.f32 %v2749, 1.0
        %v2866 = vadd.f32 %v2751, 1.0
        %v2867 = vadd.f32 %v2753, 1.0
        %v2868 = vadd.f32 %v2755, 1.0
        %v2869 = vadd.f32 %v2757, 1.0
        %v2870 = vadd.f32 %v2759, 1.0
        %v2871 = vadd.f32 %v2761, 1.0
        %v2872 = vadd.f32 %v2763, 1.0
        %v2873 = vadd.f32 %v2765, 1.0
        %v2874 = vadd.f32 %v2767, 1.0
        %v2875 = vadd.f32 %v2769, 1.0
        %v2876 = vadd.f32 %v2771, 1.0
        %v2877 = vadd.f32 %v2773, 1.0
        %v2878 = vadd.f32 %v2775, 1.0
        %v2879 = vadd.f32 %v2777, 1.0
        %v2880 = vadd.f32 %v2779, 1.0
        %v2881 = vadd.f32 %v2781, 1.0
        %v2882 = vadd.f32 %v2783, 1.0
        %v2883 = vadd.f32 %v2785, 1.0
        %v2884 = vadd.f32 %v2787, 1.0
        %v2885 = vadd.f32 %v2789, 1.0
        %v2886 = vadd.f32 %v2791, 1.0
        %v2887 = vadd.f32 %v2793, 1.0
        %v2888 = vadd.f32 %v2795, 1.0
        %v2889 = vadd.f32 %v2797, 1.0
        %v2890 = vadd.f32 %v2799, 1.0
        %v2891 = vadd.f32 %v2801, 1.0
        %v2892 = vadd.f32 %v2803, 1.0
        %v2893 = vadd.f32 %v2805, 1.0
        %v2894 = vadd.f32 %v2807, 1.0
        %v2895 = vadd.f32 %v2809, 1.0
        %v2896 = vadd.f32 %v2811, 1.0
        %v2897 = vadd.f32 %v2813, 1.0
        %v2898 = vadd.f32 %v2815, 1.0
        %v2899 = vadd.f32 %v2817, 1.0
        %v2900 = vadd.f32 %v2819, 1.0
        %v2901 = vadd.f32 %v2821, 1.0
        %v2902 = vadd.f32 %v2823, 1.0
        %v2903 = vadd.f32 %v2825, 1.0
        %v2904 = vadd.f32 %v2827, 1.0
        %v2905 = vadd.f32 %v2829, 1.0
        %v2906 = vadd.f32 %v2831, 1.0
        %v2907 = vadd.f32 %v2833, 1.0
        %v2908 = vadd.f32 %v2835, 1.0
        %v2909 = vadd.f32 %v2837, 1.0
        %v2910 = vadd.f32 %v2839, 1.0
        %v2911 = vadd.f32 %v2841, 1.0
        %v2912 = vadd.f32 %v2843, 1.0
        %v2913 = vadd.f32 %v2845, 1.0
        %v2914 = vadd.f32 %v2847, 1.0
        %v2915 = vadd.f32 %v2849, 1.0
        %v2916 = vadd.f32 %v2851, 1.0
        %v2917 = vadd.f32 %v2853, 1.0
        %v2918 = vrcp.pop %v2854
        %v2919 = vmul.f32 1.0, %v2918
        %v2920 = vrcp.pop %v2855
        %v2921 = vmul.f32 1.0, %v2920
        %v2922 = vrcp.pop %v2856
        %v2923 = vmul.f32 1.0, %v2922
        %v2924 = vrcp.pop %v2857
        %v2925 = vmul.f32 1.0, %v2924
        %v2926 = vrcp.pop %v2858
        %v2927 = vmul.f32 1.0, %v2926
        %v2928 = vrcp.pop %v2859
        %v2929 = vmul.f32 1.0, %v2928
        %v2930 = vrcp.pop %v2860
        %v2931 = vmul.f32 1.0, %v2930
        %v2932 = vrcp.pop %v2861
        %v2933 = vmul.f32 1.0, %v2932
        %v2934 = vrcp.pop %v2862
        %v2935 = vmul.f32 1.0, %v2934
        %v2936 = vrcp.pop %v2863
        %v2937 = vmul.f32 1.0, %v2936
        %v2938 = vrcp.pop %v2864
        %v2939 = vmul.f32 1.0, %v2938
        %v2940 = vrcp.pop %v2865
        %v2941 = vmul.f32 1.0, %v2940
        %v2942 = vrcp.pop %v2866
        %v2943 = vmul.f32 1.0, %v2942
        %v2944 = vrcp.pop %v2867
        %v2945 = vmul.f32 1.0, %v2944
        %v2946 = vrcp.pop %v2868
        %v2947 = vmul.f32 1.0, %v2946
        %v2948 = vrcp.pop %v2869
        %v2949 = vmul.f32 1.0, %v2948
        %v2950 = vrcp.pop %v2870
        %v2951 = vmul.f32 1.0, %v2950
        %v2952 = vrcp.pop %v2871
        %v2953 = vmul.f32 1.0, %v2952
        %v2954 = vrcp.pop %v2872
        %v2955 = vmul.f32 1.0, %v2954
        %v2956 = vrcp.pop %v2873
        %v2957 = vmul.f32 1.0, %v2956
        %v2958 = vrcp.pop %v2874
        %v2959 = vmul.f32 1.0, %v2958
        %v2960 = vrcp.pop %v2875
        %v2961 = vmul.f32 1.0, %v2960
        %v2962 = vrcp.pop %v2876
        %v2963 = vmul.f32 1.0, %v2962
        %v2964 = vrcp.pop %v2877
        %v2965 = vmul.f32 1.0, %v2964
        %v2966 = vrcp.pop %v2878
        %v2967 = vmul.f32 1.0, %v2966
        %v2968 = vrcp.pop %v2879
        %v2969 = vmul.f32 1.0, %v2968
        %v2970 = vrcp.pop %v2880
        %v2971 = vmul.f32 1.0, %v2970
        %v2972 = vrcp.pop %v2881
        %v2973 = vmul.f32 1.0, %v2972
        %v2974 = vrcp.pop %v2882
        %v2975 = vmul.f32 1.0, %v2974
        %v2976 = vrcp.pop %v2883
        %v2977 = vmul.f32 1.0, %v2976
        %v2978 = vrcp.pop %v2884
        %v2979 = vmul.f32 1.0, %v2978
        %v2980 = vrcp.pop %v2885
        %v2981 = vmul.f32 1.0, %v2980
        %v2982 = vrcp.pop %v2886
        %v2983 = vmul.f32 1.0, %v2982
        %v2984 = vrcp.pop %v2887
        %v2985 = vmul.f32 1.0, %v2984
        %v2986 = vrcp.pop %v2888
        %v2987 = vmul.f32 1.0, %v2986
        %v2988 = vrcp.pop %v2889
        %v2989 = vmul.f32 1.0, %v2988
        %v2990 = vrcp.pop %v2890
        %v2991 = vmul.f32 1.0, %v2990
        %v2992 = vrcp.pop %v2891
        %v2993 = vmul.f32 1.0, %v2992
        %v2994 = vrcp.pop %v2892
        %v2995 = vmul.f32 1.0, %v2994
        %v2996 = vrcp.pop %v2893
        %v2997 = vmul.f32 1.0, %v2996
        %v2998 = vrcp.pop %v2894
        %v2999 = vmul.f32 1.0, %v2998
        %v3000 = vrcp.pop %v2895
        %v3001 = vmul.f32 1.0, %v3000
        %v3002 = vrcp.pop %v2896
        %v3003 = vmul.f32 1.0, %v3002
        %v3004 = vrcp.pop %v2897
        %v3005 = vmul.f32 1.0, %v3004
        %v3006 = vrcp.pop %v2898
        %v3007 = vmul.f32 1.0, %v3006
        %v3008 = vrcp.pop %v2899
        %v3009 = vmul.f32 1.0, %v3008
        %v3010 = vrcp.pop %v2900
        %v3011 = vmul.f32 1.0, %v3010
        %v3012 = vrcp.pop %v2901
        %v3013 = vmul.f32 1.0, %v3012
        %v3014 = vrcp.pop %v2902
        %v3015 = vmul.f32 1.0, %v3014
        %v3016 = vrcp.pop %v2903
        %v3017 = vmul.f32 1.0, %v3016
        %v3018 = vrcp.pop %v2904
        %v3019 = vmul.f32 1.0, %v3018
        %v3020 = vrcp.pop %v2905
        %v3021 = vmul.f32 1.0, %v3020
        %v3022 = vrcp.pop %v2906
        %v3023 = vmul.f32 1.0, %v3022
        %v3024 = vrcp.pop %v2907
        %v3025 = vmul.f32 1.0, %v3024
        %v3026 = vrcp.pop %v2908
        %v3027 = vmul.f32 1.0, %v3026
        %v3028 = vrcp.pop %v2909
        %v3029 = vmul.f32 1.0, %v3028
        %v3030 = vrcp.pop %v2910
        %v3031 = vmul.f32 1.0, %v3030
        %v3032 = vrcp.pop %v2911
        %v3033 = vmul.f32 1.0, %v3032
        %v3034 = vrcp.pop %v2912
        %v3035 = vmul.f32 1.0, %v3034
        %v3036 = vrcp.pop %v2913
        %v3037 = vmul.f32 1.0, %v3036
        %v3038 = vrcp.pop %v2914
        %v3039 = vmul.f32 1.0, %v3038
        %v3040 = vrcp.pop %v2915
        %v3041 = vmul.f32 1.0, %v3040
        %v3042 = vrcp.pop %v2916
        %v3043 = vmul.f32 1.0, %v3042
        %v3044 = vrcp.pop %v2917
        %v3045 = vmul.f32 1.0, %v3044
        %v3046 = vpack.c.bf16 %v2923, %v2919
        %v3047 = vpack.c.bf16 %v2925, %v2921
        %v3048 = vpack.c.bf16 %v2931, %v2927
        %v3049 = vpack.c.bf16 %v2933, %v2929
        %v3050 = vpack.c.bf16 %v2939, %v2935
        %v3051 = vpack.c.bf16 %v2941, %v2937
        %v3052 = vpack.c.bf16 %v2947, %v2943
        %v3053 = vpack.c.bf16 %v2949, %v2945
        %v3054 = vpack.c.bf16 %v2955, %v2951
        %v3055 = vpack.c.bf16 %v2957, %v2953
        %v3056 = vpack.c.bf16 %v2963, %v2959
        %v3057 = vpack.c.bf16 %v2965, %v2961
        %v3058 = vpack.c.bf16 %v2971, %v2967
        %v3059 = vpack.c.bf16 %v2973, %v2969
        %v3060 = vpack.c.bf16 %v2979, %v2975
        %v3061 = vpack.c.bf16 %v2981, %v2977
        %v3062 = vpack.c.bf16 %v2987, %v2983
        %v3063 = vpack.c.bf16 %v2989, %v2985
        %v3064 = vpack.c.bf16 %v2995, %v2991
        %v3065 = vpack.c.bf16 %v2997, %v2993
        %v3066 = vpack.c.bf16 %v3003, %v2999
        %v3067 = vpack.c.bf16 %v3005, %v3001
        %v3068 = vpack.c.bf16 %v3011, %v3007
        %v3069 = vpack.c.bf16 %v3013, %v3009
        %v3070 = vpack.c.bf16 %v3019, %v3015
        %v3071 = vpack.c.bf16 %v3021, %v3017
        %v3072 = vpack.c.bf16 %v3027, %v3023
        %v3073 = vpack.c.bf16 %v3029, %v3025
        %v3074 = vpack.c.bf16 %v3035, %v3031
        %v3075 = vpack.c.bf16 %v3037, %v3033
        %v3076 = vpack.c.bf16 %v3043, %v3039
        %v3077 = vpack.c.bf16 %v3045, %v3041
        %v3078 = vld [vmem:[%s5] sm:$0xf]
        %v3079 = vld [vmem:[%s5 + $0x4] sm:$0xf]
        %v3080 = vld [vmem:[%s5 + $0x8] sm:$0xf]
        %v3081 = vld [vmem:[%s5 + $0xc] sm:$0xf]
        %v3082 = vld [vmem:[%s5 + $0x10] sm:$0xf]
        %v3083 = vld [vmem:[%s5 + $0x14] sm:$0xf]
        %v3084 = vld [vmem:[%s5 + $0x18] sm:$0xf]
        %v3085 = vld [vmem:[%s5 + $0x1c] sm:$0xf]
        %v3086 = vld [vmem:[%s5 + $0x20] sm:$0xf]
        %v3087 = vld [vmem:[%s5 + $0x24] sm:$0xf]
        %v3088 = vld [vmem:[%s5 + $0x28] sm:$0xf]
        %v3089 = vld [vmem:[%s5 + $0x2c] sm:$0xf]
        %v3090 = vld [vmem:[%s5 + $0x30] sm:$0xf]
        %v3091 = vld [vmem:[%s5 + $0x34] sm:$0xf]
        %v3092 = vld [vmem:[%s5 + $0x38] sm:$0xf]
        %v3093 = vld [vmem:[%s5 + $0x3c] sm:$0xf]
        %v3094 = vld [vmem:[%s5 + $0x40] sm:$0xf]
        %v3095 = vld [vmem:[%s5 + $0x44] sm:$0xf]
        %v3096 = vld [vmem:[%s5 + $0x48] sm:$0xf]
        %v3097 = vld [vmem:[%s5 + $0x4c] sm:$0xf]
        %v3098 = vld [vmem:[%s5 + $0x50] sm:$0xf]
        %v3099 = vld [vmem:[%s5 + $0x54] sm:$0xf]
        %v3100 = vld [vmem:[%s5 + $0x58] sm:$0xf]
        %v3101 = vld [vmem:[%s5 + $0x5c] sm:$0xf]
        %v3102 = vld [vmem:[%s5 + $0x60] sm:$0xf]
        %v3103 = vld [vmem:[%s5 + $0x64] sm:$0xf]
        %v3104 = vld [vmem:[%s5 + $0x68] sm:$0xf]
        %v3105 = vld [vmem:[%s5 + $0x6c] sm:$0xf]
        %v3106 = vld [vmem:[%s5 + $0x70] sm:$0xf]
        %v3107 = vld [vmem:[%s5 + $0x74] sm:$0xf]
        %v3108 = vld [vmem:[%s5 + $0x78] sm:$0xf]
        %v3109 = vld [vmem:[%s5 + $0x7c] sm:$0xf]
        %v3110 = vld [vmem:[%s6] sm:$0x1]
        %v3112 = vlaneseq
        %v3113 = vshrl.u32 %v3112, 7
        %v3114 = vsub.s32 0, %v3113
        %v3115 = vrot.slane %v3110, %v3114
        %v3149 = vunpack.c.l.b16 %v3078
        %v3150 = vunpack.c.l.b16 %v3079
        %v3151 = vunpack.c.l.b16 %v3080
        %v3152 = vunpack.c.l.b16 %v3081
        %v3153 = vunpack.c.l.b16 %v3082
        %v3154 = vunpack.c.l.b16 %v3083
        %v3155 = vunpack.c.l.b16 %v3084
        %v3156 = vunpack.c.l.b16 %v3085
        %v3157 = vunpack.c.l.b16 %v3086
        %v3158 = vunpack.c.l.b16 %v3087
        %v3159 = vunpack.c.l.b16 %v3088
        %v3160 = vunpack.c.l.b16 %v3089
        %v3161 = vunpack.c.l.b16 %v3090
        %v3162 = vunpack.c.l.b16 %v3091
        %v3163 = vunpack.c.l.b16 %v3092
        %v3164 = vunpack.c.l.b16 %v3093
        %v3165 = vunpack.c.l.b16 %v3094
        %v3166 = vunpack.c.l.b16 %v3095
        %v3167 = vunpack.c.l.b16 %v3096
        %v3168 = vunpack.c.l.b16 %v3097
        %v3169 = vunpack.c.l.b16 %v3098
        %v3170 = vunpack.c.l.b16 %v3099
        %v3171 = vunpack.c.l.b16 %v3100
        %v3172 = vunpack.c.l.b16 %v3101
        %v3173 = vunpack.c.l.b16 %v3102
        %v3174 = vunpack.c.l.b16 %v3103
        %v3175 = vunpack.c.l.b16 %v3104
        %v3176 = vunpack.c.l.b16 %v3105
        %v3177 = vunpack.c.l.b16 %v3106
        %v3178 = vunpack.c.l.b16 %v3107
        %v3179 = vunpack.c.l.b16 %v3108
        %v3180 = vunpack.c.l.b16 %v3109
        %v3181 = vpack.c.b16 %v3150, %v3149
        %v3182 = vpack.c.b16 %v3152, %v3151
        %v3183 = vpack.c.b16 %v3154, %v3153
        %v3184 = vpack.c.b16 %v3156, %v3155
        %v3185 = vpack.c.b16 %v3158, %v3157
        %v3186 = vpack.c.b16 %v3160, %v3159
        %v3187 = vpack.c.b16 %v3162, %v3161
        %v3188 = vpack.c.b16 %v3164, %v3163
        %v3189 = vpack.c.b16 %v3166, %v3165
        %v3190 = vpack.c.b16 %v3168, %v3167
        %v3191 = vpack.c.b16 %v3170, %v3169
        %v3192 = vpack.c.b16 %v3172, %v3171
        %v3193 = vpack.c.b16 %v3174, %v3173
        %v3194 = vpack.c.b16 %v3176, %v3175
        %v3195 = vpack.c.b16 %v3178, %v3177
        %v3196 = vpack.c.b16 %v3180, %v3179
        %3213 = vmatprep.subr.bf16.mxu0 0
        %3214 = vmatpush1.bf16.msra.mxu0 %v3188
        %3215 = vmatprep.subr.bf16.mxu0 0
        %3216 = vmatpush1.bf16.msra.mxu0 %v3187
        %3217 = vmatprep.subr.bf16.mxu0 0
        %3218 = vmatpush1.bf16.msra.mxu0 %v3186
        %3219 = vmatprep.subr.bf16.mxu0 0
        %3220 = vmatpush1.bf16.msra.mxu0 %v3185
        %3221 = vmatprep.subr.bf16.mxu0 0
        %3222 = vmatpush1.bf16.msra.mxu0 %v3184
        %3223 = vmatprep.subr.bf16.mxu0 0
        %3224 = vmatpush1.bf16.msra.mxu0 %v3183
        %3225 = vmatprep.subr.bf16.mxu0 0
        %3226 = vmatpush1.bf16.msra.mxu0 %v3182
        %3227 = vmatprep.subr.bf16.mxu0 0
        %3228 = vmatpush1.bf16.msra.mxu0 %v3181
        %3229 = vmatprep.subr.bf16.mxu0 0
        %3230 = vmatpush2.bf16.msra.mxu0 %v3196
        %3231 = vmatprep.subr.bf16.mxu0 0
        %3232 = vmatpush2.bf16.msra.mxu0 %v3195
        %3233 = vmatprep.subr.bf16.mxu0 0
        %3234 = vmatpush2.bf16.msra.mxu0 %v3194
        %3235 = vmatprep.subr.bf16.mxu0 0
        %3236 = vmatpush2.bf16.msra.mxu0 %v3193
        %3237 = vmatprep.subr.bf16.mxu0 0
        %3238 = vmatpush2.bf16.msra.mxu0 %v3192
        %3239 = vmatprep.subr.bf16.mxu0 0
        %3240 = vmatpush2.bf16.msra.mxu0 %v3191
        %3241 = vmatprep.subr.bf16.mxu0 0
        %3242 = vmatpush2.bf16.msra.mxu0 %v3190
        %3243 = vmatprep.subr.bf16.mxu0 0
        %3244 = vmatpush2.bf16.msra.mxu0 %v3189
        %3245 = vmatprep.mubr.bf16.mxu0 %v3047
        %3246 = vmatmul.mubr.bf16.gmra.mxu0 %v3046
        %v3247 = vpop.f32.mrf.mxu0
        %v3248 = vadd.f32 %v3115, %v3247
        %v3249 = vpop.f32.mrf.mxu0
        %v3250 = vpop.f32.mrf.mxu0
        %v3251 = vadd.f32 %v3115, %v3250
        %v3252 = vpop.f32.mrf.mxu0
        %3253 = vmatprep.mubr.bf16.mxu0 %v3049
        %3254 = vmatmul.mubr.bf16.gmra.mxu0 %v3048
        %v3255 = vpop.f32.mrf.mxu0
        %v3256 = vadd.f32 %v3115, %v3255
        %v3257 = vpop.f32.mrf.mxu0
        %v3258 = vpop.f32.mrf.mxu0
        %v3259 = vadd.f32 %v3115, %v3258
        %v3260 = vpop.f32.mrf.mxu0
        %3261 = vmatprep.mubr.bf16.mxu0 %v3051
        %3262 = vmatmul.mubr.bf16.gmra.mxu0 %v3050
        %v3263 = vpop.f32.mrf.mxu0
        %v3264 = vadd.f32 %v3115, %v3263
        %v3265 = vpop.f32.mrf.mxu0
        %v3266 = vpop.f32.mrf.mxu0
        %v3267 = vadd.f32 %v3115, %v3266
        %v3268 = vpop.f32.mrf.mxu0
        %3269 = vmatprep.mubr.bf16.mxu0 %v3053
        %3270 = vmatmul.mubr.bf16.gmra.mxu0 %v3052
        %v3271 = vpop.f32.mrf.mxu0
        %v3272 = vadd.f32 %v3115, %v3271
        %v3273 = vpop.f32.mrf.mxu0
        %v3274 = vpop.f32.mrf.mxu0
        %v3275 = vadd.f32 %v3115, %v3274
        %v3276 = vpop.f32.mrf.mxu0
        %3277 = vmatprep.mubr.bf16.mxu0 %v3055
        %3278 = vmatmul.mubr.bf16.gmra.mxu0 %v3054
        %v3279 = vpop.f32.mrf.mxu0
        %v3280 = vadd.f32 %v3115, %v3279
        %v3281 = vpop.f32.mrf.mxu0
        %v3282 = vpop.f32.mrf.mxu0
        %v3283 = vadd.f32 %v3115, %v3282
        %v3284 = vpop.f32.mrf.mxu0
        %3285 = vmatprep.mubr.bf16.mxu0 %v3057
        %3286 = vmatmul.mubr.bf16.gmra.mxu0 %v3056
        %v3287 = vpop.f32.mrf.mxu0
        %v3288 = vadd.f32 %v3115, %v3287
        %v3289 = vpop.f32.mrf.mxu0
        %v3290 = vpop.f32.mrf.mxu0
        %v3291 = vadd.f32 %v3115, %v3290
        %v3292 = vpop.f32.mrf.mxu0
        %3293 = vmatprep.mubr.bf16.mxu0 %v3059
        %3294 = vmatmul.mubr.bf16.gmra.mxu0 %v3058
        %v3295 = vpop.f32.mrf.mxu0
        %v3296 = vadd.f32 %v3115, %v3295
        %v3297 = vpop.f32.mrf.mxu0
        %v3298 = vpop.f32.mrf.mxu0
        %v3299 = vadd.f32 %v3115, %v3298
        %v3300 = vpop.f32.mrf.mxu0
        %3301 = vmatprep.mubr.bf16.mxu0 %v3061
        %3302 = vmatmul.mubr.bf16.gmra.mxu0 %v3060
        %v3303 = vpop.f32.mrf.mxu0
        %v3304 = vadd.f32 %v3115, %v3303
        %v3305 = vpop.f32.mrf.mxu0
        %v3306 = vpop.f32.mrf.mxu0
        %v3307 = vadd.f32 %v3115, %v3306
        %v3308 = vpop.f32.mrf.mxu0
        %3309 = vmatprep.mubr.bf16.mxu0 %v3063
        %3310 = vmatmul.mubr.bf16.gmra.mxu0 %v3062
        %v3311 = vpop.f32.mrf.mxu0
        %v3312 = vadd.f32 %v3115, %v3311
        %v3313 = vpop.f32.mrf.mxu0
        %v3314 = vpop.f32.mrf.mxu0
        %v3315 = vadd.f32 %v3115, %v3314
        %v3316 = vpop.f32.mrf.mxu0
        %3317 = vmatprep.mubr.bf16.mxu0 %v3065
        %3318 = vmatmul.mubr.bf16.gmra.mxu0 %v3064
        %v3319 = vpop.f32.mrf.mxu0
        %v3320 = vadd.f32 %v3115, %v3319
        %v3321 = vpop.f32.mrf.mxu0
        %v3322 = vpop.f32.mrf.mxu0
        %v3323 = vadd.f32 %v3115, %v3322
        %v3324 = vpop.f32.mrf.mxu0
        %3325 = vmatprep.mubr.bf16.mxu0 %v3067
        %3326 = vmatmul.mubr.bf16.gmra.mxu0 %v3066
        %v3327 = vpop.f32.mrf.mxu0
        %v3328 = vadd.f32 %v3115, %v3327
        %v3329 = vpop.f32.mrf.mxu0
        %v3330 = vpop.f32.mrf.mxu0
        %v3331 = vadd.f32 %v3115, %v3330
        %v3332 = vpop.f32.mrf.mxu0
        %3333 = vmatprep.mubr.bf16.mxu0 %v3069
        %3334 = vmatmul.mubr.bf16.gmra.mxu0 %v3068
        %v3335 = vpop.f32.mrf.mxu0
        %v3336 = vadd.f32 %v3115, %v3335
        %v3337 = vpop.f32.mrf.mxu0
        %v3338 = vpop.f32.mrf.mxu0
        %v3339 = vadd.f32 %v3115, %v3338
        %v3340 = vpop.f32.mrf.mxu0
        %3341 = vmatprep.mubr.bf16.mxu0 %v3071
        %3342 = vmatmul.mubr.bf16.gmra.mxu0 %v3070
        %v3343 = vpop.f32.mrf.mxu0
        %v3344 = vadd.f32 %v3115, %v3343
        %v3345 = vpop.f32.mrf.mxu0
        %v3346 = vpop.f32.mrf.mxu0
        %v3347 = vadd.f32 %v3115, %v3346
        %v3348 = vpop.f32.mrf.mxu0
        %3349 = vmatprep.mubr.bf16.mxu0 %v3073
        %3350 = vmatmul.mubr.bf16.gmra.mxu0 %v3072
        %v3351 = vpop.f32.mrf.mxu0
        %v3352 = vadd.f32 %v3115, %v3351
        %v3353 = vpop.f32.mrf.mxu0
        %v3354 = vpop.f32.mrf.mxu0
        %v3355 = vadd.f32 %v3115, %v3354
        %v3356 = vpop.f32.mrf.mxu0
        %3357 = vmatprep.mubr.bf16.mxu0 %v3075
        %3358 = vmatmul.mubr.bf16.gmra.mxu0 %v3074
        %v3359 = vpop.f32.mrf.mxu0
        %v3360 = vadd.f32 %v3115, %v3359
        %v3361 = vpop.f32.mrf.mxu0
        %v3362 = vpop.f32.mrf.mxu0
        %v3363 = vadd.f32 %v3115, %v3362
        %v3364 = vpop.f32.mrf.mxu0
        %3365 = vmatprep.mubr.bf16.mxu0 %v3077
        %3366 = vmatmul.mubr.bf16.gmra.mxu0 %v3076
        %v3367 = vpop.f32.mrf.mxu0
        %v3368 = vadd.f32 %v3115, %v3367
        %v3369 = vpop.f32.mrf.mxu0
        %v3370 = vpop.f32.mrf.mxu0
        %v3371 = vadd.f32 %v3115, %v3370
        %v3372 = vpop.f32.mrf.mxu0
        %3373 = vdwg.mxu0
        %3374 = vst [vmem:[%s295] sm:$0xff] %v3248
        %3375 = vst [vmem:[%s295 + $0x8] sm:$0xff] %v3251
        %3376 = vst [vmem:[%s295 + $0x10] sm:$0xff] %v3256
        %3377 = vst [vmem:[%s295 + $0x18] sm:$0xff] %v3259
        %3378 = vst [vmem:[%s295 + $0x20] sm:$0xff] %v3264
        %3379 = vst [vmem:[%s295 + $0x28] sm:$0xff] %v3267
        %3380 = vst [vmem:[%s295 + $0x30] sm:$0xff] %v3272
        %3381 = vst [vmem:[%s295 + $0x38] sm:$0xff] %v3275
        %3382 = vst [vmem:[%s295 + $0x40] sm:$0xff] %v3280
        %3383 = vst [vmem:[%s295 + $0x48] sm:$0xff] %v3283
        %3384 = vst [vmem:[%s295 + $0x50] sm:$0xff] %v3288
        %3385 = vst [vmem:[%s295 + $0x58] sm:$0xff] %v3291
        %3386 = vst [vmem:[%s295 + $0x60] sm:$0xff] %v3296
        %3387 = vst [vmem:[%s295 + $0x68] sm:$0xff] %v3299
        %3388 = vst [vmem:[%s295 + $0x70] sm:$0xff] %v3304
        %3389 = vst [vmem:[%s295 + $0x78] sm:$0xff] %v3307
        %3390 = vst [vmem:[%s295 + $0x80] sm:$0xff] %v3312
        %3391 = vst [vmem:[%s295 + $0x88] sm:$0xff] %v3315
        %3392 = vst [vmem:[%s295 + $0x90] sm:$0xff] %v3320
        %3393 = vst [vmem:[%s295 + $0x98] sm:$0xff] %v3323
        %3394 = vst [vmem:[%s295 + $0xa0] sm:$0xff] %v3328
        %3395 = vst [vmem:[%s295 + $0xa8] sm:$0xff] %v3331
        %3396 = vst [vmem:[%s295 + $0xb0] sm:$0xff] %v3336
        %3397 = vst [vmem:[%s295 + $0xb8] sm:$0xff] %v3339
        %3398 = vst [vmem:[%s295 + $0xc0] sm:$0xff] %v3344
        %3399 = vst [vmem:[%s295 + $0xc8] sm:$0xff] %v3347
        %3400 = vst [vmem:[%s295 + $0xd0] sm:$0xff] %v3352
        %3401 = vst [vmem:[%s295 + $0xd8] sm:$0xff] %v3355
        %3402 = vst [vmem:[%s295 + $0xe0] sm:$0xff] %v3360
        %3403 = vst [vmem:[%s295 + $0xe8] sm:$0xff] %v3363
        %3404 = vst [vmem:[%s295 + $0xf0] sm:$0xff] %v3368
        %3405 = vst [vmem:[%s295 + $0xf8] sm:$0xff] %v3371
        %s3406 = smul.u32 32, %s19
        %p3407 = scmp.lt.s32.totalorder %s3406, 63
        %s3408 = scalar_select %p3407, %s3406, 63
        %s3409 = smul.addr %s3408, 8
        %s3410 = scalar_lea.vmem %s7, %s3409
        // Predicated region
        $region53: #{bball_forward.1} parent=47 // pred_check
          %p3411 = pneg %p189
        $region54: #{bball_forward.1} parent=47 // pred_check_branch
          %3413 = sbr.rel (%p3411) target = $region56
        $region55: #{bball_forward.1} parent=47 // pred_region
          %s3414 = smul.u32 32, %s19
        $region56: #{bball_forward.1} parent=47 // pred_fallthru
          _
      $region48: #{bball_forward.1} parent=5 // pred_fallthru
        _
      %p3415 = scmp.le.s32.totalorder 2, %s14
      // Predicated region
      $region57: #{bball_forward.1} parent=5 // pred_check
        %p3416 = pneg %p3415
      $region58: #{bball_forward.1} parent=5 // pred_check_branch
        %3418 = sbr.rel (%p3416) target = $region60
      $region59: #{bball_forward.1} parent=5 // pred_region
        %s3419 = ssub.s32 %s14, 2
        // Predicated region
        $region61: #{bball_forward.1} parent=59 // pred_check
          %p3420 = pneg %p195
        $region62: #{bball_forward.1} parent=59 // pred_check_branch
          %3422 = sbr.rel (%p3420) target = $region64
        $region63: #{bball_forward.1} parent=59 // pred_region
          %s3423 = smul.u32 32, %s20
          %p3424 = scmp.lt.s32.totalorder %s3423, 63
          %s3425 = scalar_select %p3424, %s3423, 63
          %s3426 = smul.addr %s3425, 8
          %s3427 = scalar_lea.vmem %s7, %s3426
        $region64: #{bball_forward.1} parent=59 // pred_fallthru
          _
      $region60: #{bball_forward.1} parent=5 // pred_fallthru
        _
    $region6: #{bball_forward.1} parent=1 // loop_footer
      %s18 = sadd.s32 1, %s14
    $region7: #{bball_forward.1} parent=1 // loop_footer_branch
      %13 = sbr.rel target = $region3
    $region8: #{bball_forward.1} parent=1 // loop_exit
      _
    %3428 = vsyncpa [#allocation3], 1
    %s3429 = scalar_lea.sflag [#allocation3], 1
    %3430 = vsyncpa %s3429, 1

</llo_original>
